<compile_context>
chip_gen: v7x
topology: tpu7x:2x2x1
jax: 0.10.0
libtpu: 0.0.40
codegen_flags: <defaults>
</compile_context>

<pallas_src>
import functools

import numpy as np
import jax
import jax.numpy as jnp
from jax.experimental import pallas as pl
from jax.experimental.pallas import tpu as pltpu


# ---------------------------------------------------------------------------
# Kernel
# ---------------------------------------------------------------------------
def mha_kernel(xq_ref, xk_ref, xv_ref, ra_ref,
               mqk_ref, wov_ref, g_ref, b_ref,
               out_ref, scores_ref,
               *, n_heads, tb, seq_len, eps):
    f32 = jnp.float32
    bf16 = jnp.bfloat16
    L = seq_len
    dm = out_ref.shape[-1]

    xq32 = xq_ref[...]                       # [TB*L, dm] f32 (residual path)
    xq = xq32.astype(bf16)                   # bf16 only for the MXU
    xk3 = xk_ref[...].reshape(tb, L, dm)     # [TB, L, dm] bf16 (major-dim split only)
    xv = xv_ref[...]                         # [TB*L, dm] bf16

    o = jnp.zeros((tb, L, dm), f32)          # per-head-summed, already fc-projected

    for h in range(n_heads):                 # static unroll, H is small
        # Folded Q/K path: contraction is dm-wide, no d_k=8 narrow matmuls,
        # and the 1/sqrt(d_k) scale is folded into Mqk on the host.
        qm = jnp.dot(xq, mqk_ref[h], preferred_element_type=f32)
        qm3 = qm.astype(bf16).reshape(tb, L, dm)
        s = jnp.einsum('tqe,tme->tqm', qm3, xk3,
                       preferred_element_type=f32) + ra_ref[:, h, :, :]
        scores_ref[:, h, :, :] = s           # res_attn output (pre-softmax)

        # NOTE: reproduces F.softmax(scores, dim=3) on the 5-D scores tensor,
        # i.e. softmax over the *query* axis, exactly as DSTAGNN does.
        m = jnp.max(s, axis=1, keepdims=True)
        e = jnp.exp(s - m)
        denom = jnp.sum(e, axis=1, keepdims=True)
        # approx reciprocal -> EUP slot; ~2^-12 rel error on the normalization.
        a = (e * pl.reciprocal(denom, approx=True)).astype(bf16)

        # Folded V / output projection: o_h = A_h @ (xv @ (Wv_h @ Wfc_h)),
        # minor dim dm instead of d_v=8, and no per-head fc matmul.
        vproj = jnp.dot(xv, wov_ref[h], preferred_element_type=f32)
        vproj3 = vproj.astype(bf16).reshape(tb, L, dm)
        o = o + jnp.einsum('tqm,tme->tqe', a, vproj3, preferred_element_type=f32)

    # Residual + LayerNorm(d_model), eps=1e-5, biased variance; all f32.
    # Residual uses the un-quantized f32 input (correctness fix).
    y = o.reshape(tb * L, dm) + xq32
    mean = jnp.mean(y, axis=-1, keepdims=True)
    var = jnp.mean(jnp.square(y - mean), axis=-1, keepdims=True)
    yn = (y - mean) * jax.lax.rsqrt(var + eps)
    out_ref[...] = yn * g_ref[...] + b_ref[...]


# ---------------------------------------------------------------------------
# Tile selection (VMEM-budget driven, chip-aware)
# ---------------------------------------------------------------------------
def _round_up(x, m):
    return -(-x // m) * m


def _vmem_tile_bytes(shape, itemsize):
    """Approximate VMEM footprint of a block, including (sublane, lane) padding."""
    s = list(shape)
    sub = {4: 8, 2: 16, 1: 32}.get(itemsize, 8)
    if len(s) >= 1:
        s[-1] = _round_up(s[-1], 128)
    if len(s) >= 2:
        s[-2] = _round_up(s[-2], sub)
    n = 1
    for d in s:
        n *= d
    return n * itemsize


def _step_vmem_bytes(tb, *, L, dm, H):
    """Per-grid-step working set: double-buffered blocks + weights + kernel temps."""
    blocks = (_vmem_tile_bytes((tb * L, dm), 4)         # xq (f32)
              + 2 * _vmem_tile_bytes((tb * L, dm), 2)   # xk, xv (bf16)
              + _vmem_tile_bytes((tb, H, L, L), 4)      # res_att in
              + _vmem_tile_bytes((tb, H, L, L), 4)      # scores out
              + _vmem_tile_bytes((tb * L, dm), 4))      # out
    weights = (2 * _vmem_tile_bytes((H, dm, dm), 2)     # Mqk + Wov (bf16)
               + 2 * _vmem_tile_bytes((1, dm), 4))      # gamma, beta
    temps = (4 * _vmem_tile_bytes((tb * L, dm), 4)      # o, y, qm, vproj
             + 3 * _vmem_tile_bytes((tb, L, L), 4))     # s, e, a
    return 2 * (blocks + weights) + temps


def _pick_tb(bd, *, L, dm, H, budget_bytes, prefer_two_steps):
    """Largest divisor of bd whose working set fits the VMEM budget.

    The ">=2 grid steps" preference only applies on dual-TensorCore chips
    (v7x); on single-TC chips the largest fitting tile wins (grid=1 is fine).
    """
    divisors = [t for t in range(1, bd + 1) if bd % t == 0]
    fitting = [t for t in divisors
               if _step_vmem_bytes(t, L=L, dm=dm, H=H) <= budget_bytes]
    if not fitting:
        fitting = [1]
    tb = fitting[-1]
    if prefer_two_steps and bd // tb < 2:
        two = [t for t in fitting if bd // t >= 2]
        if two:
            tb = two[-1]
    return tb, _step_vmem_bytes(tb, L=L, dm=dm, H=H)


def _vmem_capacity_bytes():
    try:
        info = pltpu.get_tpu_info()
        for attr in ("vmem_capacity_bytes", "vmem_bytes", "vmem_size_bytes"):
            v = getattr(info, attr, None)
            if v:
                return int(v)
    except Exception:
        pass
    return 64 * 1024 * 1024      # conservative default (v7x per-TensorCore VMEM)


def _is_dual_tensorcore_chip():
    try:
        kind = jax.devices()[0].device_kind.lower()
    except Exception:
        return False
    return "v7" in kind          # v7x: 2 TensorCores per chip


# ---------------------------------------------------------------------------
# Wrapper
# ---------------------------------------------------------------------------
def multi_head_attention(input_Q, input_K, input_V, attn_mask, res_att,
                         wq, wk, wv, fcw, gamma, beta,
                         *, n_heads, d_k, d_v):
    if attn_mask is not None:
        # TODO(synk): attn_mask masked_fill path not implemented (DSTAGNN passes None here).
        raise NotImplementedError("attn_mask path not implemented")

    B, D, L, dm = input_Q.shape
    H = n_heads
    BD = B * D

    f32 = jnp.float32
    bf16 = jnp.bfloat16

    # Q stays f32 (residual / LayerNorm fidelity); K/V are MXU-only -> bf16.
    xq = input_Q.reshape(BD * L, dm).astype(f32)
    xk = input_K.reshape(BD * L, dm).astype(bf16)
    xv = input_V.reshape(BD * L, dm).astype(bf16)
    ra = res_att.reshape(BD, H, L, L).astype(f32)

    # Host-side algebraic weight folding (f32 fold, bf16 storage):
    #   Mqk_h = Wq_h @ Wk_h^T / sqrt(d_k)   [H, dm, dm]
    #   Wov_h = Wv_h @ Wfc_h                [H, dm, dm]
    wq3 = wq.reshape(dm, H, d_k).transpose(1, 0, 2).astype(f32)
    wk3 = wk.reshape(dm, H, d_k).transpose(1, 0, 2).astype(f32)
    mqk = (jnp.einsum('hik,hjk->hij', wq3, wk3) / np.sqrt(d_k)).astype(bf16)
    wv3 = wv.reshape(dm, H, d_v).transpose(1, 0, 2).astype(f32)
    fc3 = fcw.reshape(H, d_v, dm).astype(f32)
    wov = jnp.einsum('hdv,hvm->hdm', wv3, fc3).astype(bf16)
    g2 = gamma.reshape(1, dm).astype(f32)
    b2 = beta.reshape(1, dm).astype(f32)

    # Chip-aware VMEM budget -> tile size and vmem limit.
    vmem_cap = _vmem_capacity_bytes()
    budget = max(8 << 20, int(0.40 * vmem_cap))
    TB, step_bytes = _pick_tb(BD, L=L, dm=dm, H=H, budget_bytes=budget,
                              prefer_two_steps=_is_dual_tensorcore_chip())
    grid = (BD // TB,)
    vmem_limit = int(min(int(0.9 * vmem_cap),
                         max(32 << 20, 2 * step_bytes + (4 << 20))))

    kernel = functools.partial(mha_kernel, n_heads=H, tb=TB, seq_len=L, eps=1e-5)

    flops = BD * H * 4 * L * dm * (dm + L)          # qm + s + vproj + attn@vproj
    bytes_accessed = (BD * L * dm * 4               # xq (f32)
                      + 2 * BD * L * dm * 2         # xk, xv (bf16)
                      + 2 * BD * H * L * L * 4      # res_att in + scores out
                      + BD * L * dm * 4             # out
                      + 2 * H * dm * dm * 2         # folded weights
                      + 2 * dm * 4)

    out, scores = pl.pallas_call(
        kernel,
        out_shape=(jax.ShapeDtypeStruct((BD * L, dm), f32),
                   jax.ShapeDtypeStruct((BD, H, L, L), f32)),
        grid_spec=pltpu.PrefetchScalarGridSpec(
            num_scalar_prefetch=0,
            grid=grid,
            in_specs=[
                pl.BlockSpec((TB * L, dm), lambda i: (i, 0)),
                pl.BlockSpec((TB * L, dm), lambda i: (i, 0)),
                pl.BlockSpec((TB * L, dm), lambda i: (i, 0)),
                pl.BlockSpec((TB, H, L, L), lambda i: (i, 0, 0, 0)),
                pl.BlockSpec((H, dm, dm), lambda i: (0, 0, 0)),
                pl.BlockSpec((H, dm, dm), lambda i: (0, 0, 0)),
                pl.BlockSpec((1, dm), lambda i: (0, 0)),
                pl.BlockSpec((1, dm), lambda i: (0, 0)),
            ],
            out_specs=[
                pl.BlockSpec((TB * L, dm), lambda i: (i, 0)),
                pl.BlockSpec((TB, H, L, L), lambda i: (i, 0, 0, 0)),
            ],
        ),
        compiler_params=pltpu.CompilerParams(
            dimension_semantics=("parallel",),
            vmem_limit_bytes=vmem_limit),
        cost_estimate=pl.CostEstimate(flops=flops,
                                      transcendentals=BD * H * L * L,
                                      bytes_accessed=bytes_accessed),
    )(xq, xk, xv, ra, mqk, wov, g2, b2)

    return out.reshape(B, D, L, dm), scores.reshape(B, D, H, L, L)


# ---------------------------------------------------------------------------
# Pure-JAX reference (mirrors the PyTorch forward exactly, f32 HIGHEST)
# ---------------------------------------------------------------------------
def reference(input_Q, input_K, input_V, res_att, wq, wk, wv, fcw, gamma, beta,
              *, n_heads, d_k, d_v):
    B, D, L, dm = input_Q.shape
    hp = jax.lax.Precision.HIGHEST

    def proj(x, w, d):
        y = jnp.einsum('bdle,ef->bdlf', x, w, precision=hp)
        return y.reshape(B, D, L, n_heads, d).transpose(0, 1, 3, 2, 4)

    Q = proj(input_Q, wq, d_k)
    K = proj(input_K, wk, d_k)
    V = proj(input_V, wv, d_v)
    scores = jnp.einsum('bdhqe,bdhke->bdhqk', Q, K, precision=hp) / np.sqrt(d_k) + res_att
    attn = jax.nn.softmax(scores, axis=3)        # dim=3 of 5-D tensor == query axis
    ctx = jnp.einsum('bdhqk,bdhkv->bdhqv', attn, V, precision=hp)
    ctx = ctx.transpose(0, 1, 3, 2, 4).reshape(B, D, L, n_heads * d_v)
    out = jnp.einsum('bdlv,vm->bdlm', ctx, fcw, precision=hp) + input_Q
    mean = out.mean(-1, keepdims=True)
    var = ((out - mean) ** 2).mean(-1, keepdims=True)
    normed = (out - mean) / jnp.sqrt(var + 1e-5) * gamma + beta
    return normed, scores


if __name__ == "__main__":
    # Small shapes consistent with the module.
    B, num_of_d, L = 2, 2, 16
    d_model, d_k, d_v, n_heads = 32, 8, 8, 4

    key = jax.random.PRNGKey(0)
    ks = jax.random.split(key, 8)

    input_Q = jax.random.normal(ks[0], (B, num_of_d, L, d_model), jnp.float32)
    input_K = jax.random.normal(ks[1], (B, num_of_d, L, d_model), jnp.float32)
    input_V = jax.random.normal(ks[2], (B, num_of_d, L, d_model), jnp.float32)
    res_att = 0.1 * jax.random.normal(ks[3], (B, num_of_d, n_heads, L, L), jnp.float32)

    # Deterministic parameter init (torch Linear-style uniform), stored as [in, out].
    lim = 1.0 / np.sqrt(d_model)
    wq = jax.random.uniform(ks[4], (d_model, n_heads * d_k), jnp.float32, -lim, lim)
    wk = jax.random.uniform(ks[5], (d_model, n_heads * d_k), jnp.float32, -lim, lim)
    wv = jax.random.uniform(ks[6], (d_model, n_heads * d_v), jnp.float32, -lim, lim)
    lim_fc = 1.0 / np.sqrt(n_heads * d_v)
    fcw = jax.random.uniform(ks[7], (n_heads * d_v, d_model), jnp.float32, -lim_fc, lim_fc)
    gamma = jnp.ones((d_model,), jnp.float32)
    beta = jnp.zeros((d_model,), jnp.float32)

    out, res_attn = multi_head_attention(
        input_Q, input_K, input_V, None, res_att,
        wq, wk, wv, fcw, gamma, beta,
        n_heads=n_heads, d_k=d_k, d_v=d_v)
    jax.block_until_ready((out, res_attn))

    ref_out, ref_scores = reference(
        input_Q, input_K, input_V, res_att,
        wq, wk, wv, fcw, gamma, beta,
        n_heads=n_heads, d_k=d_k, d_v=d_v)

    # bf16-on-MXU with folded weights (f32 accumulation) => relaxed tolerance.
    np.testing.assert_allclose(np.asarray(out), np.asarray(ref_out), rtol=2e-2, atol=2e-2)
    np.testing.assert_allclose(np.asarray(res_attn), np.asarray(ref_scores), rtol=2e-2, atol=2e-2)

    print("KERNEL_OK")
</pallas_src>

<mosaic_0001>
module attributes {stable_mosaic.version = 11 : i64} {
  func.func @mha_kernel(%arg0: i32, %arg1: memref<64x32xf32, #tpu.memory_space<vmem>>, %arg2: memref<64x32xbf16, #tpu.memory_space<vmem>>, %arg3: memref<64x32xbf16, #tpu.memory_space<vmem>>, %arg4: memref<4x4x16x16xf32, #tpu.memory_space<vmem>>, %arg5: memref<4x32x32xbf16, #tpu.memory_space<vmem>>, %arg6: memref<4x32x32xbf16, #tpu.memory_space<vmem>>, %arg7: memref<1x32xf32, #tpu.memory_space<vmem>>, %arg8: memref<1x32xf32, #tpu.memory_space<vmem>>, %arg9: memref<64x32xf32, #tpu.memory_space<vmem>>, %arg10: memref<4x4x16x16xf32, #tpu.memory_space<vmem>>) attributes {dimension_semantics = [#tpu.dimension_semantics<parallel>], iteration_bounds = array<i64: 1>, scalar_prefetch = 0 : i64, scratch_operands = 0 : i64, tpu.core_type = #tpu.core_type<tc>, window_params = [{transform_indices = @transform_0, window_bounds = array<i64: 64, 32>}, {transform_indices = @transform_1, window_bounds = array<i64: 64, 32>}, {transform_indices = @transform_2, window_bounds = array<i64: 64, 32>}, {transform_indices = @transform_3, window_bounds = array<i64: 4, 4, 16, 16>}, {pipeline_mode = #tpu.pipeline_mode<synchronous>, transform_indices = @transform_4, window_bounds = array<i64: 4, 32, 32>}, {pipeline_mode = #tpu.pipeline_mode<synchronous>, transform_indices = @transform_5, window_bounds = array<i64: 4, 32, 32>}, {pipeline_mode = #tpu.pipeline_mode<synchronous>, transform_indices = @transform_6, window_bounds = array<i64: 1, 32>}, {pipeline_mode = #tpu.pipeline_mode<synchronous>, transform_indices = @transform_7, window_bounds = array<i64: 1, 32>}, {transform_indices = @transform_8, window_bounds = array<i64: 64, 32>}, {transform_indices = @transform_9, window_bounds = array<i64: 4, 4, 16, 16>}]} {
    %c0 = arith.constant 0 : index
    %c0_0 = arith.constant 0 : index
    %0 = vector.load %arg1[%c0, %c0_0] : memref<64x32xf32, #tpu.memory_space<vmem>>, vector<64x32xf32>
    %1 = arith.truncf %0 : vector<64x32xf32> to vector<64x32xbf16>
    %c0_1 = arith.constant 0 : index
    %c0_2 = arith.constant 0 : index
    %2 = vector.load %arg2[%c0_1, %c0_2] : memref<64x32xbf16, #tpu.memory_space<vmem>>, vector<64x32xbf16>
    %3 = vector.shape_cast %2 : vector<64x32xbf16> to vector<4x16x32xbf16>
    %c0_3 = arith.constant 0 : index
    %c0_4 = arith.constant 0 : index
    %4 = vector.load %arg3[%c0_3, %c0_4] : memref<64x32xbf16, #tpu.memory_space<vmem>>, vector<64x32xbf16>
    %cst = arith.constant 0.000000e+00 : f32
    %5 = vector.broadcast %cst : f32 to vector<4x16x32xf32>
    %c0_5 = arith.constant 0 : index
    %c0_6 = arith.constant 0 : index
    %c0_7 = arith.constant 0 : index
    %6 = vector.load %arg5[%c0_5, %c0_6, %c0_7] : memref<4x32x32xbf16, #tpu.memory_space<vmem>>, vector<1x32x32xbf16>
    %7 = vector.shape_cast %6 : vector<1x32x32xbf16> to vector<32x32xbf16>
    %cst_8 = arith.constant dense<0.000000e+00> : vector<64x32xf32>
    %8 = tpu.matmul %1, %7, %cst_8 {dimension_numbers = #tpu.dot_dimension_numbers<[1], [0], [0], [1], [0, 0, 1, 1], [], []>} : vector<64x32xbf16>, vector<32x32xbf16>, vector<64x32xf32> -> vector<64x32xf32>
    %9 = arith.truncf %8 : vector<64x32xf32> to vector<64x32xbf16>
    %10 = vector.shape_cast %9 : vector<64x32xbf16> to vector<4x16x32xbf16>
    "tpu.trace_start"() <{level = 10 : i32, message = "tqe,tme->tqm"}> : () -> ()
    %cst_9 = arith.constant dense<0.000000e+00> : vector<4x16x16xf32>
    %11 = tpu.matmul %10, %3, %cst_9 {dimension_numbers = #tpu.dot_dimension_numbers<[2], [2], [1], [1], [0, 0, 0, 1, 1, 1], [0], [0]>} : vector<4x16x32xbf16>, vector<4x16x32xbf16>, vector<4x16x16xf32> -> vector<4x16x16xf32>
    "tpu.trace_stop"() : () -> ()
    %c0_10 = arith.constant 0 : index
    %c0_11 = arith.constant 0 : index
    %c0_12 = arith.constant 0 : index
    %c0_13 = arith.constant 0 : index
    %12 = vector.load %arg4[%c0_10, %c0_11, %c0_12, %c0_13] : memref<4x4x16x16xf32, #tpu.memory_space<vmem>>, vector<4x1x16x16xf32>
    %13 = vector.shape_cast %12 : vector<4x1x16x16xf32> to vector<4x16x16xf32>
    %14 = arith.addf %11, %13 : vector<4x16x16xf32>
    %c0_14 = arith.constant 0 : index
    %c0_15 = arith.constant 0 : index
    %c0_16 = arith.constant 0 : index
    %c0_17 = arith.constant 0 : index
    %15 = vector.load %arg10[%c0_14, %c0_15, %c0_16, %c0_17] : memref<4x4x16x16xf32, #tpu.memory_space<vmem>>, vector<4x1x16x16xf32>
    %16 = vector.shape_cast %15 : vector<4x1x16x16xf32> to vector<4x16x16xf32>
    %17 = vector.shape_cast %14 : vector<4x16x16xf32> to vector<4x1x16x16xf32>
    tpu.vector_store %arg10[%c0_14, %c0_15, %c0_16, %c0_17], %17 {strides = array<i32>} : memref<4x4x16x16xf32, #tpu.memory_space<vmem>>, vector<4x1x16x16xf32>,
    %cst_18 = arith.constant dense<0xFF800000> : vector<4x16xf32>
    %18 = vector.multi_reduction <maximumf>, %14, %cst_18 [1] : vector<4x16x16xf32> to vector<4x16xf32>
    %19 = vector.shape_cast %18 : vector<4x16xf32> to vector<4x1x16xf32>
    %20 = vector.broadcast %19 : vector<4x1x16xf32> to vector<4x16x16xf32>
    %21 = arith.subf %14, %20 : vector<4x16x16xf32>
    %22 = math.exp %21 : vector<4x16x16xf32>
    %cst_19 = arith.constant dense<0.000000e+00> : vector<4x16xf32>
    %23 = vector.multi_reduction <add>, %22, %cst_19 [1] : vector<4x16x16xf32> to vector<4x16xf32>
    %24 = vector.shape_cast %23 : vector<4x16xf32> to vector<4x1x16xf32>
    %25 = tpu.reciprocal %24 {approx = true} : vector<4x1x16xf32> -> vector<4x1x16xf32>
    %26 = vector.broadcast %25 : vector<4x1x16xf32> to vector<4x16x16xf32>
    %27 = arith.mulf %22, %26 : vector<4x16x16xf32>
    %28 = arith.truncf %27 : vector<4x16x16xf32> to vector<4x16x16xbf16>
    %c0_20 = arith.constant 0 : index
    %c0_21 = arith.constant 0 : index
    %c0_22 = arith.constant 0 : index
    %29 = vector.load %arg6[%c0_20, %c0_21, %c0_22] : memref<4x32x32xbf16, #tpu.memory_space<vmem>>, vector<1x32x32xbf16>
    %30 = vector.shape_cast %29 : vector<1x32x32xbf16> to vector<32x32xbf16>
    %cst_23 = arith.constant dense<0.000000e+00> : vector<64x32xf32>
    %31 = tpu.matmul %4, %30, %cst_23 {dimension_numbers = #tpu.dot_dimension_numbers<[1], [0], [0], [1], [0, 0, 1, 1], [], []>} : vector<64x32xbf16>, vector<32x32xbf16>, vector<64x32xf32> -> vector<64x32xf32>
    %32 = arith.truncf %31 : vector<64x32xf32> to vector<64x32xbf16>
    %33 = vector.shape_cast %32 : vector<64x32xbf16> to vector<4x16x32xbf16>
    "tpu.trace_start"() <{level = 10 : i32, message = "tqm,tme->tqe"}> : () -> ()
    %cst_24 = arith.constant dense<0.000000e+00> : vector<4x16x32xf32>
    %34 = tpu.matmul %28, %33, %cst_24 {dimension_numbers = #tpu.dot_dimension_numbers<[2], [1], [1], [2], [0, 0, 0, 1, 1, 2], [0], [0]>} : vector<4x16x16xbf16>, vector<4x16x32xbf16>, vector<4x16x32xf32> -> vector<4x16x32xf32>
    "tpu.trace_stop"() : () -> ()
    %35 = arith.addf %5, %34 : vector<4x16x32xf32>
    %c1 = arith.constant 1 : index
    %c0_25 = arith.constant 0 : index
    %c0_26 = arith.constant 0 : index
    %36 = vector.load %arg5[%c1, %c0_25, %c0_26] : memref<4x32x32xbf16, #tpu.memory_space<vmem>>, vector<1x32x32xbf16>
    %37 = vector.shape_cast %36 : vector<1x32x32xbf16> to vector<32x32xbf16>
    %cst_27 = arith.constant dense<0.000000e+00> : vector<64x32xf32>
    %38 = tpu.matmul %1, %37, %cst_27 {dimension_numbers = #tpu.dot_dimension_numbers<[1], [0], [0], [1], [0, 0, 1, 1], [], []>} : vector<64x32xbf16>, vector<32x32xbf16>, vector<64x32xf32> -> vector<64x32xf32>
    %39 = arith.truncf %38 : vector<64x32xf32> to vector<64x32xbf16>
    %40 = vector.shape_cast %39 : vector<64x32xbf16> to vector<4x16x32xbf16>
    "tpu.trace_start"() <{level = 10 : i32, message = "tqe,tme->tqm"}> : () -> ()
    %cst_28 = arith.constant dense<0.000000e+00> : vector<4x16x16xf32>
    %41 = tpu.matmul %40, %3, %cst_28 {dimension_numbers = #tpu.dot_dimension_numbers<[2], [2], [1], [1], [0, 0, 0, 1, 1, 1], [0], [0]>} : vector<4x16x32xbf16>, vector<4x16x32xbf16>, vector<4x16x16xf32> -> vector<4x16x16xf32>
    "tpu.trace_stop"() : () -> ()
    %c0_29 = arith.constant 0 : index
    %c1_30 = arith.constant 1 : index
    %c0_31 = arith.constant 0 : index
    %c0_32 = arith.constant 0 : index
    %42 = vector.load %arg4[%c0_29, %c1_30, %c0_31, %c0_32] : memref<4x4x16x16xf32, #tpu.memory_space<vmem>>, vector<4x1x16x16xf32>
    %43 = vector.shape_cast %42 : vector<4x1x16x16xf32> to vector<4x16x16xf32>
    %44 = arith.addf %41, %43 : vector<4x16x16xf32>
    %c0_33 = arith.constant 0 : index
    %c1_34 = arith.constant 1 : index
    %c0_35 = arith.constant 0 : index
    %c0_36 = arith.constant 0 : index
    %45 = vector.load %arg10[%c0_33, %c1_34, %c0_35, %c0_36] : memref<4x4x16x16xf32, #tpu.memory_space<vmem>>, vector<4x1x16x16xf32>
    %46 = vector.shape_cast %45 : vector<4x1x16x16xf32> to vector<4x16x16xf32>
    %47 = vector.shape_cast %44 : vector<4x16x16xf32> to vector<4x1x16x16xf32>
    tpu.vector_store %arg10[%c0_33, %c1_34, %c0_35, %c0_36], %47 {strides = array<i32>} : memref<4x4x16x16xf32, #tpu.memory_space<vmem>>, vector<4x1x16x16xf32>,
    %cst_37 = arith.constant dense<0xFF800000> : vector<4x16xf32>
    %48 = vector.multi_reduction <maximumf>, %44, %cst_37 [1] : vector<4x16x16xf32> to vector<4x16xf32>
    %49 = vector.shape_cast %48 : vector<4x16xf32> to vector<4x1x16xf32>
    %50 = vector.broadcast %49 : vector<4x1x16xf32> to vector<4x16x16xf32>
    %51 = arith.subf %44, %50 : vector<4x16x16xf32>
    %52 = math.exp %51 : vector<4x16x16xf32>
    %cst_38 = arith.constant dense<0.000000e+00> : vector<4x16xf32>
    %53 = vector.multi_reduction <add>, %52, %cst_38 [1] : vector<4x16x16xf32> to vector<4x16xf32>
    %54 = vector.shape_cast %53 : vector<4x16xf32> to vector<4x1x16xf32>
    %55 = tpu.reciprocal %54 {approx = true} : vector<4x1x16xf32> -> vector<4x1x16xf32>
    %56 = vector.broadcast %55 : vector<4x1x16xf32> to vector<4x16x16xf32>
    %57 = arith.mulf %52, %56 : vector<4x16x16xf32>
    %58 = arith.truncf %57 : vector<4x16x16xf32> to vector<4x16x16xbf16>
    %c1_39 = arith.constant 1 : index
    %c0_40 = arith.constant 0 : index
    %c0_41 = arith.constant 0 : index
    %59 = vector.load %arg6[%c1_39, %c0_40, %c0_41] : memref<4x32x32xbf16, #tpu.memory_space<vmem>>, vector<1x32x32xbf16>
    %60 = vector.shape_cast %59 : vector<1x32x32xbf16> to vector<32x32xbf16>
    %cst_42 = arith.constant dense<0.000000e+00> : vector<64x32xf32>
    %61 = tpu.matmul %4, %60, %cst_42 {dimension_numbers = #tpu.dot_dimension_numbers<[1], [0], [0], [1], [0, 0, 1, 1], [], []>} : vector<64x32xbf16>, vector<32x32xbf16>, vector<64x32xf32> -> vector<64x32xf32>
    %62 = arith.truncf %61 : vector<64x32xf32> to vector<64x32xbf16>
    %63 = vector.shape_cast %62 : vector<64x32xbf16> to vector<4x16x32xbf16>
    "tpu.trace_start"() <{level = 10 : i32, message = "tqm,tme->tqe"}> : () -> ()
    %cst_43 = arith.constant dense<0.000000e+00> : vector<4x16x32xf32>
    %64 = tpu.matmul %58, %63, %cst_43 {dimension_numbers = #tpu.dot_dimension_numbers<[2], [1], [1], [2], [0, 0, 0, 1, 1, 2], [0], [0]>} : vector<4x16x16xbf16>, vector<4x16x32xbf16>, vector<4x16x32xf32> -> vector<4x16x32xf32>
    "tpu.trace_stop"() : () -> ()
    %65 = arith.addf %35, %64 : vector<4x16x32xf32>
    %c2 = arith.constant 2 : index
    %c0_44 = arith.constant 0 : index
    %c0_45 = arith.constant 0 : index
    %66 = vector.load %arg5[%c2, %c0_44, %c0_45] : memref<4x32x32xbf16, #tpu.memory_space<vmem>>, vector<1x32x32xbf16>
    %67 = vector.shape_cast %66 : vector<1x32x32xbf16> to vector<32x32xbf16>
    %cst_46 = arith.constant dense<0.000000e+00> : vector<64x32xf32>
    %68 = tpu.matmul %1, %67, %cst_46 {dimension_numbers = #tpu.dot_dimension_numbers<[1], [0], [0], [1], [0, 0, 1, 1], [], []>} : vector<64x32xbf16>, vector<32x32xbf16>, vector<64x32xf32> -> vector<64x32xf32>
    %69 = arith.truncf %68 : vector<64x32xf32> to vector<64x32xbf16>
    %70 = vector.shape_cast %69 : vector<64x32xbf16> to vector<4x16x32xbf16>
    "tpu.trace_start"() <{level = 10 : i32, message = "tqe,tme->tqm"}> : () -> ()
    %cst_47 = arith.constant dense<0.000000e+00> : vector<4x16x16xf32>
    %71 = tpu.matmul %70, %3, %cst_47 {dimension_numbers = #tpu.dot_dimension_numbers<[2], [2], [1], [1], [0, 0, 0, 1, 1, 1], [0], [0]>} : vector<4x16x32xbf16>, vector<4x16x32xbf16>, vector<4x16x16xf32> -> vector<4x16x16xf32>
    "tpu.trace_stop"() : () -> ()
    %c0_48 = arith.constant 0 : index
    %c2_49 = arith.constant 2 : index
    %c0_50 = arith.constant 0 : index
    %c0_51 = arith.constant 0 : index
    %72 = vector.load %arg4[%c0_48, %c2_49, %c0_50, %c0_51] : memref<4x4x16x16xf32, #tpu.memory_space<vmem>>, vector<4x1x16x16xf32>
    %73 = vector.shape_cast %72 : vector<4x1x16x16xf32> to vector<4x16x16xf32>
    %74 = arith.addf %71, %73 : vector<4x16x16xf32>
    %c0_52 = arith.constant 0 : index
    %c2_53 = arith.constant 2 : index
    %c0_54 = arith.constant 0 : index
    %c0_55 = arith.constant 0 : index
    %75 = vector.load %arg10[%c0_52, %c2_53, %c0_54, %c0_55] : memref<4x4x16x16xf32, #tpu.memory_space<vmem>>, vector<4x1x16x16xf32>
    %76 = vector.shape_cast %75 : vector<4x1x16x16xf32> to vector<4x16x16xf32>
    %77 = vector.shape_cast %74 : vector<4x16x16xf32> to vector<4x1x16x16xf32>
    tpu.vector_store %arg10[%c0_52, %c2_53, %c0_54, %c0_55], %77 {strides = array<i32>} : memref<4x4x16x16xf32, #tpu.memory_space<vmem>>, vector<4x1x16x16xf32>,
    %cst_56 = arith.constant dense<0xFF800000> : vector<4x16xf32>
    %78 = vector.multi_reduction <maximumf>, %74, %cst_56 [1] : vector<4x16x16xf32> to vector<4x16xf32>
    %79 = vector.shape_cast %78 : vector<4x16xf32> to vector<4x1x16xf32>
    %80 = vector.broadcast %79 : vector<4x1x16xf32> to vector<4x16x16xf32>
    %81 = arith.subf %74, %80 : vector<4x16x16xf32>
    %82 = math.exp %81 : vector<4x16x16xf32>
    %cst_57 = arith.constant dense<0.000000e+00> : vector<4x16xf32>
    %83 = vector.multi_reduction <add>, %82, %cst_57 [1] : vector<4x16x16xf32> to vector<4x16xf32>
    %84 = vector.shape_cast %83 : vector<4x16xf32> to vector<4x1x16xf32>
    %85 = tpu.reciprocal %84 {approx = true} : vector<4x1x16xf32> -> vector<4x1x16xf32>
    %86 = vector.broadcast %85 : vector<4x1x16xf32> to vector<4x16x16xf32>
    %87 = arith.mulf %82, %86 : vector<4x16x16xf32>
    %88 = arith.truncf %87 : vector<4x16x16xf32> to vector<4x16x16xbf16>
    %c2_58 = arith.constant 2 : index
    %c0_59 = arith.constant 0 : index
    %c0_60 = arith.constant 0 : index
    %89 = vector.load %arg6[%c2_58, %c0_59, %c0_60] : memref<4x32x32xbf16, #tpu.memory_space<vmem>>, vector<1x32x32xbf16>
    %90 = vector.shape_cast %89 : vector<1x32x32xbf16> to vector<32x32xbf16>
    %cst_61 = arith.constant dense<0.000000e+00> : vector<64x32xf32>
    %91 = tpu.matmul %4, %90, %cst_61 {dimension_numbers = #tpu.dot_dimension_numbers<[1], [0], [0], [1], [0, 0, 1, 1], [], []>} : vector<64x32xbf16>, vector<32x32xbf16>, vector<64x32xf32> -> vector<64x32xf32>
    %92 = arith.truncf %91 : vector<64x32xf32> to vector<64x32xbf16>
    %93 = vector.shape_cast %92 : vector<64x32xbf16> to vector<4x16x32xbf16>
    "tpu.trace_start"() <{level = 10 : i32, message = "tqm,tme->tqe"}> : () -> ()
    %cst_62 = arith.constant dense<0.000000e+00> : vector<4x16x32xf32>
    %94 = tpu.matmul %88, %93, %cst_62 {dimension_numbers = #tpu.dot_dimension_numbers<[2], [1], [1], [2], [0, 0, 0, 1, 1, 2], [0], [0]>} : vector<4x16x16xbf16>, vector<4x16x32xbf16>, vector<4x16x32xf32> -> vector<4x16x32xf32>
    "tpu.trace_stop"() : () -> ()
    %95 = arith.addf %65, %94 : vector<4x16x32xf32>
    %c3 = arith.constant 3 : index
    %c0_63 = arith.constant 0 : index
    %c0_64 = arith.constant 0 : index
    %96 = vector.load %arg5[%c3, %c0_63, %c0_64] : memref<4x32x32xbf16, #tpu.memory_space<vmem>>, vector<1x32x32xbf16>
    %97 = vector.shape_cast %96 : vector<1x32x32xbf16> to vector<32x32xbf16>
    %cst_65 = arith.constant dense<0.000000e+00> : vector<64x32xf32>
    %98 = tpu.matmul %1, %97, %cst_65 {dimension_numbers = #tpu.dot_dimension_numbers<[1], [0], [0], [1], [0, 0, 1, 1], [], []>} : vector<64x32xbf16>, vector<32x32xbf16>, vector<64x32xf32> -> vector<64x32xf32>
    %99 = arith.truncf %98 : vector<64x32xf32> to vector<64x32xbf16>
    %100 = vector.shape_cast %99 : vector<64x32xbf16> to vector<4x16x32xbf16>
    "tpu.trace_start"() <{level = 10 : i32, message = "tqe,tme->tqm"}> : () -> ()
    %cst_66 = arith.constant dense<0.000000e+00> : vector<4x16x16xf32>
    %101 = tpu.matmul %100, %3, %cst_66 {dimension_numbers = #tpu.dot_dimension_numbers<[2], [2], [1], [1], [0, 0, 0, 1, 1, 1], [0], [0]>} : vector<4x16x32xbf16>, vector<4x16x32xbf16>, vector<4x16x16xf32> -> vector<4x16x16xf32>
    "tpu.trace_stop"() : () -> ()
    %c0_67 = arith.constant 0 : index
    %c3_68 = arith.constant 3 : index
    %c0_69 = arith.constant 0 : index
    %c0_70 = arith.constant 0 : index
    %102 = vector.load %arg4[%c0_67, %c3_68, %c0_69, %c0_70] : memref<4x4x16x16xf32, #tpu.memory_space<vmem>>, vector<4x1x16x16xf32>
    %103 = vector.shape_cast %102 : vector<4x1x16x16xf32> to vector<4x16x16xf32>
    %104 = arith.addf %101, %103 : vector<4x16x16xf32>
    %c0_71 = arith.constant 0 : index
    %c3_72 = arith.constant 3 : index
    %c0_73 = arith.constant 0 : index
    %c0_74 = arith.constant 0 : index
    %105 = vector.load %arg10[%c0_71, %c3_72, %c0_73, %c0_74] : memref<4x4x16x16xf32, #tpu.memory_space<vmem>>, vector<4x1x16x16xf32>
    %106 = vector.shape_cast %105 : vector<4x1x16x16xf32> to vector<4x16x16xf32>
    %107 = vector.shape_cast %104 : vector<4x16x16xf32> to vector<4x1x16x16xf32>
    tpu.vector_store %arg10[%c0_71, %c3_72, %c0_73, %c0_74], %107 {strides = array<i32>} : memref<4x4x16x16xf32, #tpu.memory_space<vmem>>, vector<4x1x16x16xf32>,
    %cst_75 = arith.constant dense<0xFF800000> : vector<4x16xf32>
    %108 = vector.multi_reduction <maximumf>, %104, %cst_75 [1] : vector<4x16x16xf32> to vector<4x16xf32>
    %109 = vector.shape_cast %108 : vector<4x16xf32> to vector<4x1x16xf32>
    %110 = vector.broadcast %109 : vector<4x1x16xf32> to vector<4x16x16xf32>
    %111 = arith.subf %104, %110 : vector<4x16x16xf32>
    %112 = math.exp %111 : vector<4x16x16xf32>
    %cst_76 = arith.constant dense<0.000000e+00> : vector<4x16xf32>
    %113 = vector.multi_reduction <add>, %112, %cst_76 [1] : vector<4x16x16xf32> to vector<4x16xf32>
    %114 = vector.shape_cast %113 : vector<4x16xf32> to vector<4x1x16xf32>
    %115 = tpu.reciprocal %114 {approx = true} : vector<4x1x16xf32> -> vector<4x1x16xf32>
    %116 = vector.broadcast %115 : vector<4x1x16xf32> to vector<4x16x16xf32>
    %117 = arith.mulf %112, %116 : vector<4x16x16xf32>
    %118 = arith.truncf %117 : vector<4x16x16xf32> to vector<4x16x16xbf16>
    %c3_77 = arith.constant 3 : index
    %c0_78 = arith.constant 0 : index
    %c0_79 = arith.constant 0 : index
    %119 = vector.load %arg6[%c3_77, %c0_78, %c0_79] : memref<4x32x32xbf16, #tpu.memory_space<vmem>>, vector<1x32x32xbf16>
    %120 = vector.shape_cast %119 : vector<1x32x32xbf16> to vector<32x32xbf16>
    %cst_80 = arith.constant dense<0.000000e+00> : vector<64x32xf32>
    %121 = tpu.matmul %4, %120, %cst_80 {dimension_numbers = #tpu.dot_dimension_numbers<[1], [0], [0], [1], [0, 0, 1, 1], [], []>} : vector<64x32xbf16>, vector<32x32xbf16>, vector<64x32xf32> -> vector<64x32xf32>
    %122 = arith.truncf %121 : vector<64x32xf32> to vector<64x32xbf16>
    %123 = vector.shape_cast %122 : vector<64x32xbf16> to vector<4x16x32xbf16>
    "tpu.trace_start"() <{level = 10 : i32, message = "tqm,tme->tqe"}> : () -> ()
    %cst_81 = arith.constant dense<0.000000e+00> : vector<4x16x32xf32>
    %124 = tpu.matmul %118, %123, %cst_81 {dimension_numbers = #tpu.dot_dimension_numbers<[2], [1], [1], [2], [0, 0, 0, 1, 1, 2], [0], [0]>} : vector<4x16x16xbf16>, vector<4x16x32xbf16>, vector<4x16x32xf32> -> vector<4x16x32xf32>
    "tpu.trace_stop"() : () -> ()
    %125 = arith.addf %95, %124 : vector<4x16x32xf32>
    %126 = vector.shape_cast %125 : vector<4x16x32xf32> to vector<64x32xf32>
    %127 = arith.addf %126, %0 : vector<64x32xf32>
    %cst_82 = arith.constant dense<0.000000e+00> : vector<64xf32>
    %128 = vector.multi_reduction <add>, %127, %cst_82 [1] : vector<64x32xf32> to vector<64xf32>
    %129 = vector.shape_cast %128 : vector<64xf32> to vector<64x1xf32>
    %cst_83 = arith.constant 3.200000e+01 : f32
    %130 = vector.broadcast %cst_83 : f32 to vector<64x1xf32>
    %131 = arith.divf %129, %130 : vector<64x1xf32>
    %132 = vector.broadcast %131 : vector<64x1xf32> to vector<64x32xf32>
    %133 = arith.subf %127, %132 : vector<64x32xf32>
    %134 = arith.mulf %133, %133 : vector<64x32xf32>
    %cst_84 = arith.constant dense<0.000000e+00> : vector<64xf32>
    %135 = vector.multi_reduction <add>, %134, %cst_84 [1] : vector<64x32xf32> to vector<64xf32>
    %136 = vector.shape_cast %135 : vector<64xf32> to vector<64x1xf32>
    %cst_85 = arith.constant 3.200000e+01 : f32
    %137 = vector.broadcast %cst_85 : f32 to vector<64x1xf32>
    %138 = arith.divf %136, %137 : vector<64x1xf32>
    %139 = vector.broadcast %131 : vector<64x1xf32> to vector<64x32xf32>
    %140 = arith.subf %127, %139 : vector<64x32xf32>
    %cst_86 = arith.constant 9.99999974E-6 : f32
    %141 = vector.broadcast %cst_86 : f32 to vector<64x1xf32>
    %142 = arith.addf %138, %141 : vector<64x1xf32>
    %143 = math.rsqrt %142 : vector<64x1xf32>
    %144 = vector.broadcast %143 : vector<64x1xf32> to vector<64x32xf32>
    %145 = arith.mulf %140, %144 : vector<64x32xf32>
    %c0_87 = arith.constant 0 : index
    %c0_88 = arith.constant 0 : index
    %146 = vector.load %arg7[%c0_87, %c0_88] : memref<1x32xf32, #tpu.memory_space<vmem>>, vector<1x32xf32>
    %147 = vector.broadcast %146 : vector<1x32xf32> to vector<64x32xf32>
    %148 = arith.mulf %145, %147 : vector<64x32xf32>
    %c0_89 = arith.constant 0 : index
    %c0_90 = arith.constant 0 : index
    %149 = vector.load %arg8[%c0_89, %c0_90] : memref<1x32xf32, #tpu.memory_space<vmem>>, vector<1x32xf32>
    %150 = vector.broadcast %149 : vector<1x32xf32> to vector<64x32xf32>
    %151 = arith.addf %148, %150 : vector<64x32xf32>
    %c0_91 = arith.constant 0 : index
    %c0_92 = arith.constant 0 : index
    %152 = vector.load %arg9[%c0_91, %c0_92] : memref<64x32xf32, #tpu.memory_space<vmem>>, vector<64x32xf32>
    tpu.vector_store %arg9[%c0_91, %c0_92], %151 {strides = array<i32>} : memref<64x32xf32, #tpu.memory_space<vmem>>, vector<64x32xf32>,
    return
  }
  func.func @transform_0(%arg0: i32) -> (i32, i32) {
    %c0_i32 = arith.constant 0 : i32
    %c0_i32_0 = arith.constant 0 : i32
    return %arg0, %c0_i32 : i32, i32
  }
  func.func @transform_1(%arg0: i32) -> (i32, i32) {
    %c0_i32 = arith.constant 0 : i32
    %c0_i32_0 = arith.constant 0 : i32
    return %arg0, %c0_i32 : i32, i32
  }
  func.func @transform_2(%arg0: i32) -> (i32, i32) {
    %c0_i32 = arith.constant 0 : i32
    %c0_i32_0 = arith.constant 0 : i32
    return %arg0, %c0_i32 : i32, i32
  }
  func.func @transform_3(%arg0: i32) -> (i32, i32, i32, i32) {
    %c0_i32 = arith.constant 0 : i32
    %c0_i32_0 = arith.constant 0 : i32
    %c0_i32_1 = arith.constant 0 : i32
    %c0_i32_2 = arith.constant 0 : i32
    return %arg0, %c0_i32, %c0_i32_0, %c0_i32_1 : i32, i32, i32, i32
  }
  func.func @transform_4(%arg0: i32) -> (i32, i32, i32) {
    %c0_i32 = arith.constant 0 : i32
    %c0_i32_0 = arith.constant 0 : i32
    %c0_i32_1 = arith.constant 0 : i32
    %c0_i32_2 = arith.constant 0 : i32
    return %c0_i32, %c0_i32_0, %c0_i32_1 : i32, i32, i32
  }
  func.func @transform_5(%arg0: i32) -> (i32, i32, i32) {
    %c0_i32 = arith.constant 0 : i32
    %c0_i32_0 = arith.constant 0 : i32
    %c0_i32_1 = arith.constant 0 : i32
    %c0_i32_2 = arith.constant 0 : i32
    return %c0_i32, %c0_i32_0, %c0_i32_1 : i32, i32, i32
  }
  func.func @transform_6(%arg0: i32) -> (i32, i32) {
    %c0_i32 = arith.constant 0 : i32
    %c0_i32_0 = arith.constant 0 : i32
    %c0_i32_1 = arith.constant 0 : i32
    return %c0_i32, %c0_i32_0 : i32, i32
  }
  func.func @transform_7(%arg0: i32) -> (i32, i32) {
    %c0_i32 = arith.constant 0 : i32
    %c0_i32_0 = arith.constant 0 : i32
    %c0_i32_1 = arith.constant 0 : i32
    return %c0_i32, %c0_i32_0 : i32, i32
  }
  func.func @transform_8(%arg0: i32) -> (i32, i32) {
    %c0_i32 = arith.constant 0 : i32
    %c0_i32_0 = arith.constant 0 : i32
    return %arg0, %c0_i32 : i32, i32
  }
  func.func @transform_9(%arg0: i32) -> (i32, i32, i32, i32) {
    %c0_i32 = arith.constant 0 : i32
    %c0_i32_0 = arith.constant 0 : i32
    %c0_i32_1 = arith.constant 0 : i32
    %c0_i32_2 = arith.constant 0 : i32
    return %arg0, %c0_i32, %c0_i32_0, %c0_i32_1 : i32, i32, i32, i32
  }
}

</mosaic_0001>

<llo_original>
// kernel: tpu_custom_call.1
$region0: #{tpu_custom_call.1}
  #allocation0 [shape = 'u32[]', space=smem, size = 0x4, offset = 0x4, fixed_abs, tag = 'smem constant byte address 0x4 - core index']
  #allocation1 [shape = 'u32[144,128]{1,0:T(1,128)}', space=vmem, size = 0x12000, scoped, tag = 'internal scratch']
  %s0 = inlined_call_operand.vmem [shape: f32[64,32], index: 0, kind: input, shape index: {}]
  %s1 = inlined_call_operand.vmem [shape: bf16[64,32], index: 1, kind: input, shape index: {}]
  %s2 = inlined_call_operand.vmem [shape: bf16[64,32], index: 2, kind: input, shape index: {}]
  %s3 = inlined_call_operand.hbm [shape: f32[4,4,16,16], index: 3, kind: input, shape index: {}]
  %s4 = inlined_call_operand.vmem [shape: bf16[4,32,32], index: 4, kind: input, shape index: {}]
  %s5 = inlined_call_operand.vmem [shape: bf16[4,32,32], index: 5, kind: input, shape index: {}]
  %s6 = inlined_call_operand.vmem [shape: f32[1,32], index: 6, kind: input, shape index: {}]
  %s7 = inlined_call_operand.vmem [shape: f32[1,32], index: 7, kind: input, shape index: {}]
  %s8 = inlined_call_operand.vmem [shape: f32[64,32], index: 8, kind: output, shape index: {0}]
  %s9 = inlined_call_operand.hbm [shape: f32[4,4,16,16], index: 9, kind: output, shape index: {1}]
  %10 = xla_tuple %s8, %s9
  %s11 = sld [smem:[#allocation0]]
  $region54: #{tpu_custom_call.1} parent=0
    _
  %s13 = ssub.s32 1, %s11
  %s14 = scalar_select 0, %s13, %s11
  $region1: #{tpu_custom_call.1} parent=0
    #allocation2 [shape = 'u8[131072]{0}', space=vmem, size = 0x20000, scoped, tag = 'input window, operand 3, single buffered']
    #allocation3 [shape = 's32[1]{0}', space=sflag, size = 0x4, scoped, tag = 'scoped memory for tpu_custom_call.1']
    #allocation4 [shape = 's32[1]{0}', space=sflag, size = 0x4, scoped, tag = 'scoped memory for tpu_custom_call.1']
    #allocation5 [shape = 'u8[131072]{0}', space=vmem, size = 0x20000, scoped, tag = 'output window, operand 1, single buffered']
    %15 = vsyncpa [#allocation3], 0
    %16 = vsyncpa [#allocation4], 0
    // Predicated region
    $region2: #{tpu_custom_call.1} parent=1 // pred_check
      _
    $region3: #{tpu_custom_call.1} parent=1 // pred_check_branch
      %18 = sbr.rel (0) target = $region5
    $region4: #{tpu_custom_call.1} parent=1 // pred_region
      _
    $region5: #{tpu_custom_call.1} parent=1 // pred_fallthru
      _
    // Predicated region
    $region6: #{tpu_custom_call.1} parent=1 // pred_check
      _
    $region7: #{tpu_custom_call.1} parent=1 // pred_check_branch
      %20 = sbr.rel (0) target = $region9
    $region8: #{tpu_custom_call.1} parent=1 // pred_region
      _
    $region9: #{tpu_custom_call.1} parent=1 // pred_fallthru
      _
    // Predicated region
    $region10: #{tpu_custom_call.1} parent=1 // pred_check
      _
    $region11: #{tpu_custom_call.1} parent=1 // pred_check_branch
      %22 = sbr.rel (0) target = $region13
    $region12: #{tpu_custom_call.1} parent=1 // pred_region
      _
    $region13: #{tpu_custom_call.1} parent=1 // pred_fallthru
      _
    // Predicated region
    $region14: #{tpu_custom_call.1} parent=1 // pred_check
      _
    $region15: #{tpu_custom_call.1} parent=1 // pred_check_branch
      %24 = sbr.rel (0) target = $region17
    $region16: #{tpu_custom_call.1} parent=1 // pred_region
      %s26 = ssub.s32 4096, 4096
      %27 = vsyncadd [#allocation3], %s26
      %s28 = sshll.u32 [#allocation2], 4
      %s29 = int_to_ptr.vmem [resolvable:$true] %s28
      %34 = dma.hbm_to_vmem [thread:$0]  %s3, 4096, %s29, [#allocation3], 128, 128, 8
    $region17: #{tpu_custom_call.1} parent=1 // pred_fallthru
      _
    // Predicated region
    $region18: #{tpu_custom_call.1} parent=1 // pred_check
      _
    $region19: #{tpu_custom_call.1} parent=1 // pred_check_branch
      %36 = sbr.rel (0) target = $region21
    $region20: #{tpu_custom_call.1} parent=1 // pred_region
      _
    $region21: #{tpu_custom_call.1} parent=1 // pred_fallthru
      _
    // Predicated region
    $region22: #{tpu_custom_call.1} parent=1 // pred_check
      _
    $region23: #{tpu_custom_call.1} parent=1 // pred_check_branch
      %38 = sbr.rel (0) target = $region25
    $region24: #{tpu_custom_call.1} parent=1 // pred_region
      _
    $region25: #{tpu_custom_call.1} parent=1 // pred_fallthru
      _
    // Predicated region
    $region26: #{tpu_custom_call.1} parent=1 // pred_check
      _
    $region27: #{tpu_custom_call.1} parent=1 // pred_check_branch
      %40 = sbr.rel (0) target = $region29
    $region28: #{tpu_custom_call.1} parent=1 // pred_region
      _
    $region29: #{tpu_custom_call.1} parent=1 // pred_fallthru
      _
    // Predicated region
    $region30: #{tpu_custom_call.1} parent=1 // pred_check
      _
    $region31: #{tpu_custom_call.1} parent=1 // pred_check_branch
      %42 = sbr.rel (0) target = $region33
    $region32: #{tpu_custom_call.1} parent=1 // pred_region
      _
    $region33: #{tpu_custom_call.1} parent=1 // pred_fallthru
      _
    // Predicated region
    $region34: #{tpu_custom_call.1} parent=1 // pred_check
      _
    $region35: #{tpu_custom_call.1} parent=1 // pred_check_branch
      %44 = sbr.rel (0) target = $region37
    $region36: #{tpu_custom_call.1} parent=1 // pred_region
      %45 = dma.done [#allocation3], 4096
    $region37: #{tpu_custom_call.1} parent=1 // pred_fallthru
      _
    %v47 = vld [vmem:[%s0] sm:$0xff]
    %v48 = vld [vmem:[%s0 + $0x8] sm:$0xff]
    %v49 = vld [vmem:[%s0 + $0x10] sm:$0xff]
    %v50 = vld [vmem:[%s0 + $0x18] sm:$0xff]
    %v51 = vld [vmem:[%s0 + $0x20] sm:$0xff]
    %v52 = vld [vmem:[%s0 + $0x28] sm:$0xff]
    %v53 = vld [vmem:[%s0 + $0x30] sm:$0xff]
    %v54 = vld [vmem:[%s0 + $0x38] sm:$0xff]
    %v55 = vpack.c.bf16 %v48, %v47
    %v56 = vpack.c.bf16 %v50, %v49
    %v57 = vpack.c.bf16 %v52, %v51
    %v58 = vpack.c.bf16 %v54, %v53
    %v59 = vld [vmem:[%s1] sm:$0xf]
    %v60 = vld [vmem:[%s1 + $0x4] sm:$0xf]
    %v61 = vld [vmem:[%s1 + $0x8] sm:$0xf]
    %v62 = vld [vmem:[%s1 + $0xc] sm:$0xf]
    %v63 = vld [vmem:[%s1 + $0x10] sm:$0xf]
    %v64 = vld [vmem:[%s1 + $0x14] sm:$0xf]
    %v65 = vld [vmem:[%s1 + $0x18] sm:$0xf]
    %v66 = vld [vmem:[%s1 + $0x1c] sm:$0xf]
    %v67 = vld [vmem:[%s2] sm:$0xf]
    %v68 = vld [vmem:[%s2 + $0x4] sm:$0xf]
    %v69 = vld [vmem:[%s2 + $0x8] sm:$0xf]
    %v70 = vld [vmem:[%s2 + $0xc] sm:$0xf]
    %v71 = vld [vmem:[%s2 + $0x10] sm:$0xf]
    %v72 = vld [vmem:[%s2 + $0x14] sm:$0xf]
    %v73 = vld [vmem:[%s2 + $0x18] sm:$0xf]
    %v74 = vld [vmem:[%s2 + $0x1c] sm:$0xf]
    %v75 = vld [vmem:[%s4] sm:$0xf]
    %v76 = vld [vmem:[%s4 + $0x4] sm:$0xf]
    %v77 = vld [vmem:[%s4 + $0x8] sm:$0xf]
    %v78 = vld [vmem:[%s4 + $0xc] sm:$0xf]
    %v83 = vunpack.c.l.b16 %v75
    %v84 = vunpack.c.l.b16 %v76
    %v85 = vunpack.c.l.b16 %v77
    %v86 = vunpack.c.l.b16 %v78
    %v87 = vpack.c.b16 %v84, %v83
    %v88 = vpack.c.b16 %v86, %v85
    %vm91 = vcmask 261120
    %v93 = vsel %vm91, %v55, 0
    %v96 = vsel %vm91, %v56, 0
    %v99 = vsel %vm91, %v57, 0
    %v102 = vsel %vm91, %v58, 0
    %104 = vmatprep.subr.bf16.mxu0 0
    %105 = vmatpush1.bf16.msra.mxu0 %v87
    %106 = vmatprep.subr.bf16.mxu0 0
    %107 = vmatpush1.bf16.msra.mxu0 %v88
    %108 = vmatprep.subr.bf16.mxu0 0
    %109 = vmatpush1.bf16.msra.mxu0 0
    %110 = vmatprep.subr.bf16.mxu0 0
    %111 = vmatpush1.bf16.msra.mxu0 0
    %112 = vmatprep.subr.bf16.mxu0 0
    %113 = vmatpush1.bf16.msra.mxu0 0
    %114 = vmatprep.subr.bf16.mxu0 0
    %115 = vmatpush1.bf16.msra.mxu0 0
    %116 = vmatprep.subr.bf16.mxu0 0
    %117 = vmatpush1.bf16.msra.mxu0 0
    %118 = vmatprep.subr.bf16.mxu0 0
    %119 = vmatpush1.bf16.msra.mxu0 0
    %120 = vmatprep.subr.bf16.mxu0 0
    %121 = vmatpush1.bf16.msra.mxu0 0
    %122 = vmatprep.subr.bf16.mxu0 0
    %123 = vmatpush1.bf16.msra.mxu0 0
    %124 = vmatprep.subr.bf16.mxu0 0
    %125 = vmatpush1.bf16.msra.mxu0 0
    %126 = vmatprep.subr.bf16.mxu0 0
    %127 = vmatpush1.bf16.msra.mxu0 0
    %128 = vmatprep.subr.bf16.mxu0 0
    %129 = vmatpush1.bf16.msra.mxu0 0
    %130 = vmatprep.subr.bf16.mxu0 0
    %131 = vmatpush1.bf16.msra.mxu0 0
    %132 = vmatprep.subr.bf16.mxu0 0
    %133 = vmatpush1.bf16.msra.mxu0 0
    %134 = vmatprep.subr.bf16.mxu0 0
    %135 = vmatpush1.bf16.msra.mxu0 0
    %136 = vmatprep.mubr.bf16.mxu0 0
    %137 = vmatmul.mubr.bf16.gmra.mrb[0].mxu0 %v93
    %v138 = vpop.f32.mrb[0].mxu0
    %v139 = vadd.f32 0.0, %v138
    %v140 = vpop.f32.mrb[0].mxu0
    %v141 = vpop.f32.mrb[0].mxu0
    %v142 = vadd.f32 0.0, %v141
    %v143 = vpop.f32.mrb[0].mxu0
    %144 = vmatprep.mubr.bf16.mxu0 0
    %145 = vmatmul.mubr.bf16.gmra.mrb[0].mxu0 %v96
    %v146 = vpop.f32.mrb[0].mxu0
    %v147 = vadd.f32 0.0, %v146
    %v148 = vpop.f32.mrb[0].mxu0
    %v149 = vpop.f32.mrb[0].mxu0
    %v150 = vadd.f32 0.0, %v149
    %v151 = vpop.f32.mrb[0].mxu0
    %152 = vmatprep.mubr.bf16.mxu0 0
    %153 = vmatmul.mubr.bf16.gmra.mrb[0].mxu0 %v99
    %v154 = vpop.f32.mrb[0].mxu0
    %v155 = vadd.f32 0.0, %v154
    %v156 = vpop.f32.mrb[0].mxu0
    %v157 = vpop.f32.mrb[0].mxu0
    %v158 = vadd.f32 0.0, %v157
    %v159 = vpop.f32.mrb[0].mxu0
    %160 = vmatprep.mubr.bf16.mxu0 0
    %161 = vmatmul.mubr.bf16.gmra.mrb[0].mxu0 %v102
    %v162 = vpop.f32.mrb[0].mxu0
    %v163 = vadd.f32 0.0, %v162
    %v164 = vpop.f32.mrb[0].mxu0
    %v165 = vpop.f32.mrb[0].mxu0
    %v166 = vadd.f32 0.0, %v165
    %v167 = vpop.f32.mrb[0].mxu0
    %168 = vdwg.mxu0
    %v169 = vpack.c.bf16 %v142, %v139
    %v170 = vpack.c.bf16 %v150, %v147
    %v171 = vpack.c.bf16 %v158, %v155
    %v172 = vpack.c.bf16 %v166, %v163
    %v173 = vld [vmem:[#allocation2] sm:$0xff]
    %v174 = vld [vmem:[#allocation2 + $0x8] sm:$0xff]
    %v175 = vld [vmem:[#allocation2 + $0x40] sm:$0xff]
    %v176 = vld [vmem:[#allocation2 + $0x48] sm:$0xff]
    %v177 = vld [vmem:[#allocation2 + $0x80] sm:$0xff]
    %v178 = vld [vmem:[#allocation2 + $0x88] sm:$0xff]
    %v179 = vld [vmem:[#allocation2 + $0xc0] sm:$0xff]
    %v180 = vld [vmem:[#allocation2 + $0xc8] sm:$0xff]
    %v183 = vunpack.c.l.b16 %v59
    %v184 = vunpack.c.l.b16 %v60
    %v185 = vpack.c.b16 %v184, %v183
    %v187 = vsel %vm91, %v169, 0
    %v190 = vsel %vm91, %v185, 0
    %192 = vmatprep.subr.bf16.mxu0 0
    %193 = vmatpush1.bf16.xpose.msra.mxu0 %v190
    %194 = vmatprep.subr.bf16.mxu0 0
    %195 = vmatpush1.bf16.xpose.msra.mxu0 0
    %196 = vmatprep.subr.bf16.mxu0 0
    %197 = vmatpush1.bf16.xpose.msra.mxu0 0
    %198 = vmatprep.subr.bf16.mxu0 0
    %199 = vmatpush1.bf16.xpose.msra.mxu0 0
    %200 = vmatprep.subr.bf16.mxu0 0
    %201 = vmatpush1.bf16.xpose.msra.mxu0 0
    %202 = vmatprep.subr.bf16.mxu0 0
    %203 = vmatpush1.bf16.xpose.msra.mxu0 0
    %204 = vmatprep.subr.bf16.mxu0 0
    %205 = vmatpush1.bf16.xpose.msra.mxu0 0
    %206 = vmatprep.subr.bf16.mxu0 0
    %207 = vmatpush1.bf16.xpose.msra.mxu0 0
    %208 = vmatprep.subr.bf16.mxu0 0
    %209 = vmatpush1.bf16.xpose.msra.mxu0 0
    %210 = vmatprep.subr.bf16.mxu0 0
    %211 = vmatpush1.bf16.xpose.msra.mxu0 0
    %212 = vmatprep.subr.bf16.mxu0 0
    %213 = vmatpush1.bf16.xpose.msra.mxu0 0
    %214 = vmatprep.subr.bf16.mxu0 0
    %215 = vmatpush1.bf16.xpose.msra.mxu0 0
    %216 = vmatprep.subr.bf16.mxu0 0
    %217 = vmatpush1.bf16.xpose.msra.mxu0 0
    %218 = vmatprep.subr.bf16.mxu0 0
    %219 = vmatpush1.bf16.xpose.msra.mxu0 0
    %220 = vmatprep.subr.bf16.mxu0 0
    %221 = vmatpush1.bf16.xpose.msra.mxu0 0
    %222 = vmatprep.subr.bf16.mxu0 0
    %223 = vmatpush1.bf16.xpose.msra.mxu0 0
    %224 = vmatprep.mubr.bf16.mxu0 0
    %225 = vmatmul.mubr.bf16.gmra.mrb[0].mxu0 %v187
    %v226 = vpop.f32.mrb[0].mxu0
    %v227 = vadd.f32 %v173, %v226
    %v228 = vpop.f32.mrb[0].mxu0
    %v229 = vpop.f32.mrb[0].mxu0
    %v230 = vadd.f32 %v174, %v229
    %v231 = vpop.f32.mrb[0].mxu0
    %232 = vdwg.mxu0
    %v235 = vunpack.c.l.b16 %v61
    %v236 = vunpack.c.l.b16 %v62
    %v237 = vpack.c.b16 %v236, %v235
    %v239 = vsel %vm91, %v170, 0
    %v242 = vsel %vm91, %v237, 0
    %244 = vmatprep.subr.bf16.mxu0 0
    %245 = vmatpush1.bf16.xpose.msra.mxu0 %v242
    %246 = vmatprep.subr.bf16.mxu0 0
    %247 = vmatpush1.bf16.xpose.msra.mxu0 0
    %248 = vmatprep.subr.bf16.mxu0 0
    %249 = vmatpush1.bf16.xpose.msra.mxu0 0
    %250 = vmatprep.subr.bf16.mxu0 0
    %251 = vmatpush1.bf16.xpose.msra.mxu0 0
    %252 = vmatprep.subr.bf16.mxu0 0
    %253 = vmatpush1.bf16.xpose.msra.mxu0 0
    %254 = vmatprep.subr.bf16.mxu0 0
    %255 = vmatpush1.bf16.xpose.msra.mxu0 0
    %256 = vmatprep.subr.bf16.mxu0 0
    %257 = vmatpush1.bf16.xpose.msra.mxu0 0
    %258 = vmatprep.subr.bf16.mxu0 0
    %259 = vmatpush1.bf16.xpose.msra.mxu0 0
    %260 = vmatprep.subr.bf16.mxu0 0
    %261 = vmatpush1.bf16.xpose.msra.mxu0 0
    %262 = vmatprep.subr.bf16.mxu0 0
    %263 = vmatpush1.bf16.xpose.msra.mxu0 0
    %264 = vmatprep.subr.bf16.mxu0 0
    %265 = vmatpush1.bf16.xpose.msra.mxu0 0
    %266 = vmatprep.subr.bf16.mxu0 0
    %267 = vmatpush1.bf16.xpose.msra.mxu0 0
    %268 = vmatprep.subr.bf16.mxu0 0
    %269 = vmatpush1.bf16.xpose.msra.mxu0 0
    %270 = vmatprep.subr.bf16.mxu0 0
    %271 = vmatpush1.bf16.xpose.msra.mxu0 0
    %272 = vmatprep.subr.bf16.mxu0 0
    %273 = vmatpush1.bf16.xpose.msra.mxu0 0
    %274 = vmatprep.subr.bf16.mxu0 0
    %275 = vmatpush1.bf16.xpose.msra.mxu0 0
    %276 = vmatprep.mubr.bf16.mxu0 0
    %277 = vmatmul.mubr.bf16.gmra.mrb[0].mxu0 %v239
    %v278 = vpop.f32.mrb[0].mxu0
    %v279 = vadd.f32 %v175, %v278
    %v280 = vpop.f32.mrb[0].mxu0
    %v281 = vpop.f32.mrb[0].mxu0
    %v282 = vadd.f32 %v176, %v281
    %v283 = vpop.f32.mrb[0].mxu0
    %284 = vdwg.mxu0
    %v287 = vunpack.c.l.b16 %v63
    %v288 = vunpack.c.l.b16 %v64
    %v289 = vpack.c.b16 %v288, %v287
    %v291 = vsel %vm91, %v171, 0
    %v294 = vsel %vm91, %v289, 0
    %296 = vmatprep.subr.bf16.mxu0 0
    %297 = vmatpush1.bf16.xpose.msra.mxu0 %v294
    %298 = vmatprep.subr.bf16.mxu0 0
    %299 = vmatpush1.bf16.xpose.msra.mxu0 0
    %300 = vmatprep.subr.bf16.mxu0 0
    %301 = vmatpush1.bf16.xpose.msra.mxu0 0
    %302 = vmatprep.subr.bf16.mxu0 0
    %303 = vmatpush1.bf16.xpose.msra.mxu0 0
    %304 = vmatprep.subr.bf16.mxu0 0
    %305 = vmatpush1.bf16.xpose.msra.mxu0 0
    %306 = vmatprep.subr.bf16.mxu0 0
    %307 = vmatpush1.bf16.xpose.msra.mxu0 0
    %308 = vmatprep.subr.bf16.mxu0 0
    %309 = vmatpush1.bf16.xpose.msra.mxu0 0
    %310 = vmatprep.subr.bf16.mxu0 0
    %311 = vmatpush1.bf16.xpose.msra.mxu0 0
    %312 = vmatprep.subr.bf16.mxu0 0
    %313 = vmatpush1.bf16.xpose.msra.mxu0 0
    %314 = vmatprep.subr.bf16.mxu0 0
    %315 = vmatpush1.bf16.xpose.msra.mxu0 0
    %316 = vmatprep.subr.bf16.mxu0 0
    %317 = vmatpush1.bf16.xpose.msra.mxu0 0
    %318 = vmatprep.subr.bf16.mxu0 0
    %319 = vmatpush1.bf16.xpose.msra.mxu0 0
    %320 = vmatprep.subr.bf16.mxu0 0
    %321 = vmatpush1.bf16.xpose.msra.mxu0 0
    %322 = vmatprep.subr.bf16.mxu0 0
    %323 = vmatpush1.bf16.xpose.msra.mxu0 0
    %324 = vmatprep.subr.bf16.mxu0 0
    %325 = vmatpush1.bf16.xpose.msra.mxu0 0
    %326 = vmatprep.subr.bf16.mxu0 0
    %327 = vmatpush1.bf16.xpose.msra.mxu0 0
    %328 = vmatprep.mubr.bf16.mxu0 0
    %329 = vmatmul.mubr.bf16.gmra.mrb[0].mxu0 %v291
    %v330 = vpop.f32.mrb[0].mxu0
    %v331 = vadd.f32 %v177, %v330
    %v332 = vpop.f32.mrb[0].mxu0
    %v333 = vpop.f32.mrb[0].mxu0
    %v334 = vadd.f32 %v178, %v333
    %v335 = vpop.f32.mrb[0].mxu0
    %336 = vdwg.mxu0
    %v339 = vunpack.c.l.b16 %v65
    %v340 = vunpack.c.l.b16 %v66
    %v341 = vpack.c.b16 %v340, %v339
    %v343 = vsel %vm91, %v172, 0
    %v346 = vsel %vm91, %v341, 0
    %348 = vmatprep.subr.bf16.mxu0 0
    %349 = vmatpush1.bf16.xpose.msra.mxu0 %v346
    %350 = vmatprep.subr.bf16.mxu0 0
    %351 = vmatpush1.bf16.xpose.msra.mxu0 0
    %352 = vmatprep.subr.bf16.mxu0 0
    %353 = vmatpush1.bf16.xpose.msra.mxu0 0
    %354 = vmatprep.subr.bf16.mxu0 0
    %355 = vmatpush1.bf16.xpose.msra.mxu0 0
    %356 = vmatprep.subr.bf16.mxu0 0
    %357 = vmatpush1.bf16.xpose.msra.mxu0 0
    %358 = vmatprep.subr.bf16.mxu0 0
    %359 = vmatpush1.bf16.xpose.msra.mxu0 0
    %360 = vmatprep.subr.bf16.mxu0 0
    %361 = vmatpush1.bf16.xpose.msra.mxu0 0
    %362 = vmatprep.subr.bf16.mxu0 0
    %363 = vmatpush1.bf16.xpose.msra.mxu0 0
    %364 = vmatprep.subr.bf16.mxu0 0
    %365 = vmatpush1.bf16.xpose.msra.mxu0 0
    %366 = vmatprep.subr.bf16.mxu0 0
    %367 = vmatpush1.bf16.xpose.msra.mxu0 0
    %368 = vmatprep.subr.bf16.mxu0 0
    %369 = vmatpush1.bf16.xpose.msra.mxu0 0
    %370 = vmatprep.subr.bf16.mxu0 0
    %371 = vmatpush1.bf16.xpose.msra.mxu0 0
    %372 = vmatprep.subr.bf16.mxu0 0
    %373 = vmatpush1.bf16.xpose.msra.mxu0 0
    %374 = vmatprep.subr.bf16.mxu0 0
    %375 = vmatpush1.bf16.xpose.msra.mxu0 0
    %376 = vmatprep.subr.bf16.mxu0 0
    %377 = vmatpush1.bf16.xpose.msra.mxu0 0
    %378 = vmatprep.subr.bf16.mxu0 0
    %379 = vmatpush1.bf16.xpose.msra.mxu0 0
    %380 = vmatprep.mubr.bf16.mxu0 0
    %381 = vmatmul.mubr.bf16.gmra.mrb[0].mxu0 %v343
    %v382 = vpop.f32.mrb[0].mxu0
    %v383 = vadd.f32 %v179, %v382
    %v384 = vpop.f32.mrb[0].mxu0
    %v385 = vpop.f32.mrb[0].mxu0
    %v386 = vadd.f32 %v180, %v385
    %v387 = vpop.f32.mrb[0].mxu0
    %388 = vdwg.mxu0
    %vm389 = vcmask 130048
    %390 = vst.msk [vmem:[#allocation5] sm:$0xff] %vm389, %v227
    %391 = vst.msk [vmem:[#allocation5 + $0x8] sm:$0xff] %vm389, %v230
    %392 = vst.msk [vmem:[#allocation5 + $0x40] sm:$0xff] %vm389, %v279
    %393 = vst.msk [vmem:[#allocation5 + $0x48] sm:$0xff] %vm389, %v282
    %394 = vst.msk [vmem:[#allocation5 + $0x80] sm:$0xff] %vm389, %v331
    %395 = vst.msk [vmem:[#allocation5 + $0x88] sm:$0xff] %vm389, %v334
    %396 = vst.msk [vmem:[#allocation5 + $0xc0] sm:$0xff] %vm389, %v383
    %397 = vst.msk [vmem:[#allocation5 + $0xc8] sm:$0xff] %vm389, %v386
    %v398 = vsel %vm389, %v227, -inf
    %v399 = vsel %vm389, %v230, -inf
    %v400 = vmax.f32 %v398, %v399
    %v401 = vrot.slane %v400, 4
    %v402 = vmax.f32 %v400, %v401
    %v403 = vrot.slane %v402, 2
    %v404 = vmax.f32 %v402, %v403
    %v405 = vrot.slane %v404, 1
    %v406 = vmax.f32 %v404, %v405
    %v407 = vsel %vm389, %v279, -inf
    %v408 = vsel %vm389, %v282, -inf
    %v409 = vmax.f32 %v407, %v408
    %v410 = vrot.slane %v409, 4
    %v411 = vmax.f32 %v409, %v410
    %v412 = vrot.slane %v411, 2
    %v413 = vmax.f32 %v411, %v412
    %v414 = vrot.slane %v413, 1
    %v415 = vmax.f32 %v413, %v414
    %v416 = vsel %vm389, %v331, -inf
    %v417 = vsel %vm389, %v334, -inf
    %v418 = vmax.f32 %v416, %v417
    %v419 = vrot.slane %v418, 4
    %v420 = vmax.f32 %v418, %v419
    %v421 = vrot.slane %v420, 2
    %v422 = vmax.f32 %v420, %v421
    %v423 = vrot.slane %v422, 1
    %v424 = vmax.f32 %v422, %v423
    %v425 = vsel %vm389, %v383, -inf
    %v426 = vsel %vm389, %v386, -inf
    %v427 = vmax.f32 %v425, %v426
    %v428 = vrot.slane %v427, 4
    %v429 = vmax.f32 %v427, %v428
    %v430 = vrot.slane %v429, 2
    %v431 = vmax.f32 %v429, %v430
    %v432 = vrot.slane %v431, 1
    %v433 = vmax.f32 %v431, %v432
    %v434 = vsub.f32 %v227, %v406
    %v435 = vsub.f32 %v230, %v406
    %v436 = vsub.f32 %v279, %v415
    %v437 = vsub.f32 %v282, %v415
    %v438 = vsub.f32 %v331, %v424
    %v439 = vsub.f32 %v334, %v424
    %v440 = vsub.f32 %v383, %v433
    %v441 = vsub.f32 %v386, %v433
    %v442 = vmul.f32 %v434, 1.442695
    %v443 = vpow.pop %v442
    %v444 = vmul.f32 %v435, 1.442695
    %v445 = vpow.pop %v444
    %v446 = vmul.f32 %v436, 1.442695
    %v447 = vpow.pop %v446
    %v448 = vmul.f32 %v437, 1.442695
    %v449 = vpow.pop %v448
    %v450 = vmul.f32 %v438, 1.442695
    %v451 = vpow.pop %v450
    %v452 = vmul.f32 %v439, 1.442695
    %v453 = vpow.pop %v452
    %v454 = vmul.f32 %v440, 1.442695
    %v455 = vpow.pop %v454
    %v456 = vmul.f32 %v441, 1.442695
    %v457 = vpow.pop %v456
    %v458 = vsel %vm389, %v443, 0.0
    %v459 = vsel %vm389, %v445, 0.0
    %v460 = vadd.f32 %v458, %v459
    %v461 = vrot.slane %v460, 4
    %v462 = vadd.f32 %v460, %v461
    %v463 = vrot.slane %v462, 2
    %v464 = vadd.f32 %v462, %v463
    %v465 = vrot.slane %v464, 1
    %v466 = vadd.f32 %v464, %v465
    %v467 = vsel %vm389, %v447, 0.0
    %v468 = vsel %vm389, %v449, 0.0
    %v469 = vadd.f32 %v467, %v468
    %v470 = vrot.slane %v469, 4
    %v471 = vadd.f32 %v469, %v470
    %v472 = vrot.slane %v471, 2
    %v473 = vadd.f32 %v471, %v472
    %v474 = vrot.slane %v473, 1
    %v475 = vadd.f32 %v473, %v474
    %v476 = vsel %vm389, %v451, 0.0
    %v477 = vsel %vm389, %v453, 0.0
    %v478 = vadd.f32 %v476, %v477
    %v479 = vrot.slane %v478, 4
    %v480 = vadd.f32 %v478, %v479
    %v481 = vrot.slane %v480, 2
    %v482 = vadd.f32 %v480, %v481
    %v483 = vrot.slane %v482, 1
    %v484 = vadd.f32 %v482, %v483
    %v485 = vsel %vm389, %v455, 0.0
    %v486 = vsel %vm389, %v457, 0.0
    %v487 = vadd.f32 %v485, %v486
    %v488 = vrot.slane %v487, 4
    %v489 = vadd.f32 %v487, %v488
    %v490 = vrot.slane %v489, 2
    %v491 = vadd.f32 %v489, %v490
    %v492 = vrot.slane %v491, 1
    %v493 = vadd.f32 %v491, %v492
    %v494 = vrcp.pop %v466
    %v495 = vrcp.pop %v475
    %v496 = vrcp.pop %v484
    %v497 = vrcp.pop %v493
    %v498 = vmul.f32 %v443, %v494
    %v499 = vmul.f32 %v445, %v494
    %v500 = vmul.f32 %v447, %v495
    %v501 = vmul.f32 %v449, %v495
    %v502 = vmul.f32 %v451, %v496
    %v503 = vmul.f32 %v453, %v496
    %v504 = vmul.f32 %v455, %v497
    %v505 = vmul.f32 %v457, %v497
    %v506 = vpack.c.bf16 %v499, %v498
    %v507 = vpack.c.bf16 %v501, %v500
    %v508 = vpack.c.bf16 %v503, %v502
    %v509 = vpack.c.bf16 %v505, %v504
    %v510 = vld [vmem:[%s5] sm:$0xf]
    %v511 = vld [vmem:[%s5 + $0x4] sm:$0xf]
    %v512 = vld [vmem:[%s5 + $0x8] sm:$0xf]
    %v513 = vld [vmem:[%s5 + $0xc] sm:$0xf]
    %v522 = vunpack.c.l.b16 %v67
    %v523 = vunpack.c.l.b16 %v68
    %v524 = vunpack.c.l.b16 %v69
    %v525 = vunpack.c.l.b16 %v70
    %v526 = vunpack.c.l.b16 %v71
    %v527 = vunpack.c.l.b16 %v72
    %v528 = vunpack.c.l.b16 %v73
    %v529 = vunpack.c.l.b16 %v74
    %v530 = vpack.c.b16 %v523, %v522
    %v531 = vpack.c.b16 %v525, %v524
    %v532 = vpack.c.b16 %v527, %v526
    %v533 = vpack.c.b16 %v529, %v528
    %v538 = vunpack.c.l.b16 %v510
    %v539 = vunpack.c.l.b16 %v511
    %v540 = vunpack.c.l.b16 %v512
    %v541 = vunpack.c.l.b16 %v513
    %v542 = vpack.c.b16 %v539, %v538
    %v543 = vpack.c.b16 %v541, %v540
    %v547 = vsel %vm91, %v530, 0
    %v550 = vsel %vm91, %v531, 0
    %v553 = vsel %vm91, %v532, 0
    %v556 = vsel %vm91, %v533, 0
    %558 = vmatprep.subr.bf16.mxu0 0
    %559 = vmatpush1.bf16.msra.mxu0 %v542
    %560 = vmatprep.subr.bf16.mxu0 0
    %561 = vmatpush1.bf16.msra.mxu0 %v543
    %562 = vmatprep.subr.bf16.mxu0 0
    %563 = vmatpush1.bf16.msra.mxu0 0
    %564 = vmatprep.subr.bf16.mxu0 0
    %565 = vmatpush1.bf16.msra.mxu0 0
    %566 = vmatprep.subr.bf16.mxu0 0
    %567 = vmatpush1.bf16.msra.mxu0 0
    %568 = vmatprep.subr.bf16.mxu0 0
    %569 = vmatpush1.bf16.msra.mxu0 0
    %570 = vmatprep.subr.bf16.mxu0 0
    %571 = vmatpush1.bf16.msra.mxu0 0
    %572 = vmatprep.subr.bf16.mxu0 0
    %573 = vmatpush1.bf16.msra.mxu0 0
    %574 = vmatprep.subr.bf16.mxu0 0
    %575 = vmatpush1.bf16.msra.mxu0 0
    %576 = vmatprep.subr.bf16.mxu0 0
    %577 = vmatpush1.bf16.msra.mxu0 0
    %578 = vmatprep.subr.bf16.mxu0 0
    %579 = vmatpush1.bf16.msra.mxu0 0
    %580 = vmatprep.subr.bf16.mxu0 0
    %581 = vmatpush1.bf16.msra.mxu0 0
    %582 = vmatprep.subr.bf16.mxu0 0
    %583 = vmatpush1.bf16.msra.mxu0 0
    %584 = vmatprep.subr.bf16.mxu0 0
    %585 = vmatpush1.bf16.msra.mxu0 0
    %586 = vmatprep.subr.bf16.mxu0 0
    %587 = vmatpush1.bf16.msra.mxu0 0
    %588 = vmatprep.subr.bf16.mxu0 0
    %589 = vmatpush1.bf16.msra.mxu0 0
    %590 = vmatprep.mubr.bf16.mxu0 0
    %591 = vmatmul.mubr.bf16.gmra.mrb[0].mxu0 %v547
    %v592 = vpop.f32.mrb[0].mxu0
    %v593 = vadd.f32 0.0, %v592
    %v594 = vpop.f32.mrb[0].mxu0
    %v595 = vpop.f32.mrb[0].mxu0
    %v596 = vadd.f32 0.0, %v595
    %v597 = vpop.f32.mrb[0].mxu0
    %598 = vmatprep.mubr.bf16.mxu0 0
    %599 = vmatmul.mubr.bf16.gmra.mrb[0].mxu0 %v550
    %v600 = vpop.f32.mrb[0].mxu0
    %v601 = vadd.f32 0.0, %v600
    %v602 = vpop.f32.mrb[0].mxu0
    %v603 = vpop.f32.mrb[0].mxu0
    %v604 = vadd.f32 0.0, %v603
    %v605 = vpop.f32.mrb[0].mxu0
    %606 = vmatprep.mubr.bf16.mxu0 0
    %607 = vmatmul.mubr.bf16.gmra.mrb[0].mxu0 %v553
    %v608 = vpop.f32.mrb[0].mxu0
    %v609 = vadd.f32 0.0, %v608
    %v610 = vpop.f32.mrb[0].mxu0
    %v611 = vpop.f32.mrb[0].mxu0
    %v612 = vadd.f32 0.0, %v611
    %v613 = vpop.f32.mrb[0].mxu0
    %614 = vmatprep.mubr.bf16.mxu0 0
    %615 = vmatmul.mubr.bf16.gmra.mrb[0].mxu0 %v556
    %v616 = vpop.f32.mrb[0].mxu0
    %v617 = vadd.f32 0.0, %v616
    %v618 = vpop.f32.mrb[0].mxu0
    %v619 = vpop.f32.mrb[0].mxu0
    %v620 = vadd.f32 0.0, %v619
    %v621 = vpop.f32.mrb[0].mxu0
    %622 = vdwg.mxu0
    %v623 = vpack.c.bf16 %v596, %v593
    %v624 = vpack.c.bf16 %v604, %v601
    %v625 = vpack.c.bf16 %v612, %v609
    %v626 = vpack.c.bf16 %v620, %v617
    %s627 = scalar_lea.vmem %s4, 16
    %v628 = vld [vmem:[%s627] sm:$0xf]
    %v629 = vld [vmem:[%s627 + $0x4] sm:$0xf]
    %v630 = vld [vmem:[%s627 + $0x8] sm:$0xf]
    %v631 = vld [vmem:[%s627 + $0xc] sm:$0xf]
    %v636 = vunpack.c.l.b16 %v628
    %v637 = vunpack.c.l.b16 %v629
    %v638 = vunpack.c.l.b16 %v630
    %v639 = vunpack.c.l.b16 %v631
    %v640 = vpack.c.b16 %v637, %v636
    %v641 = vpack.c.b16 %v639, %v638
    %644 = vmatprep.subr.bf16.mxu0 0
    %645 = vmatpush1.bf16.msra.mxu0 %v640
    %646 = vmatprep.subr.bf16.mxu0 0
    %647 = vmatpush1.bf16.msra.mxu0 %v641
    %648 = vmatprep.subr.bf16.mxu0 0
    %649 = vmatpush1.bf16.msra.mxu0 0
    %650 = vmatprep.subr.bf16.mxu0 0
    %651 = vmatpush1.bf16.msra.mxu0 0
    %652 = vmatprep.subr.bf16.mxu0 0
    %653 = vmatpush1.bf16.msra.mxu0 0
    %654 = vmatprep.subr.bf16.mxu0 0
    %655 = vmatpush1.bf16.msra.mxu0 0
    %656 = vmatprep.subr.bf16.mxu0 0
    %657 = vmatpush1.bf16.msra.mxu0 0
    %658 = vmatprep.subr.bf16.mxu0 0
    %659 = vmatpush1.bf16.msra.mxu0 0
    %660 = vmatprep.subr.bf16.mxu0 0
    %661 = vmatpush1.bf16.msra.mxu0 0
    %662 = vmatprep.subr.bf16.mxu0 0
    %663 = vmatpush1.bf16.msra.mxu0 0
    %664 = vmatprep.subr.bf16.mxu0 0
    %665 = vmatpush1.bf16.msra.mxu0 0
    %666 = vmatprep.subr.bf16.mxu0 0
    %667 = vmatpush1.bf16.msra.mxu0 0
    %668 = vmatprep.subr.bf16.mxu0 0
    %669 = vmatpush1.bf16.msra.mxu0 0
    %670 = vmatprep.subr.bf16.mxu0 0
    %671 = vmatpush1.bf16.msra.mxu0 0
    %672 = vmatprep.subr.bf16.mxu0 0
    %673 = vmatpush1.bf16.msra.mxu0 0
    %674 = vmatprep.subr.bf16.mxu0 0
    %675 = vmatpush1.bf16.msra.mxu0 0
    %676 = vmatprep.mubr.bf16.mxu0 0
    %677 = vmatmul.mubr.bf16.gmra.mrb[0].mxu0 %v93
    %v678 = vpop.f32.mrb[0].mxu0
    %v679 = vadd.f32 0.0, %v678
    %v680 = vpop.f32.mrb[0].mxu0
    %v681 = vpop.f32.mrb[0].mxu0
    %v682 = vadd.f32 0.0, %v681
    %v683 = vpop.f32.mrb[0].mxu0
    %684 = vmatprep.mubr.bf16.mxu0 0
    %685 = vmatmul.mubr.bf16.gmra.mrb[0].mxu0 %v96
    %v686 = vpop.f32.mrb[0].mxu0
    %v687 = vadd.f32 0.0, %v686
    %v688 = vpop.f32.mrb[0].mxu0
    %v689 = vpop.f32.mrb[0].mxu0
    %v690 = vadd.f32 0.0, %v689
    %v691 = vpop.f32.mrb[0].mxu0
    %692 = vmatprep.mubr.bf16.mxu0 0
    %693 = vmatmul.mubr.bf16.gmra.mrb[0].mxu0 %v99
    %v694 = vpop.f32.mrb[0].mxu0
    %v695 = vadd.f32 0.0, %v694
    %v696 = vpop.f32.mrb[0].mxu0
    %v697 = vpop.f32.mrb[0].mxu0
    %v698 = vadd.f32 0.0, %v697
    %v699 = vpop.f32.mrb[0].mxu0
    %700 = vmatprep.mubr.bf16.mxu0 0
    %701 = vmatmul.mubr.bf16.gmra.mrb[0].mxu0 %v102
    %v702 = vpop.f32.mrb[0].mxu0
    %v703 = vadd.f32 0.0, %v702
    %v704 = vpop.f32.mrb[0].mxu0
    %v705 = vpop.f32.mrb[0].mxu0
    %v706 = vadd.f32 0.0, %v705
    %v707 = vpop.f32.mrb[0].mxu0
    %708 = vdwg.mxu0
    %v709 = vpack.c.bf16 %v682, %v679
    %v710 = vpack.c.bf16 %v690, %v687
    %v711 = vpack.c.bf16 %v698, %v695
    %v712 = vpack.c.bf16 %v706, %v703
    %s713 = scalar_lea.vmem [#allocation2], 16
    %v714 = vld [vmem:[%s713] sm:$0xff]
    %v715 = vld [vmem:[%s713 + $0x8] sm:$0xff]
    %v716 = vld [vmem:[%s713 + $0x40] sm:$0xff]
    %v717 = vld [vmem:[%s713 + $0x48] sm:$0xff]
    %v718 = vld [vmem:[%s713 + $0x80] sm:$0xff]
    %v719 = vld [vmem:[%s713 + $0x88] sm:$0xff]
    %v720 = vld [vmem:[%s713 + $0xc0] sm:$0xff]
    %v721 = vld [vmem:[%s713 + $0xc8] sm:$0xff]
    %v723 = vsel %vm91, %v709, 0
    %725 = vmatprep.subr.bf16.mxu0 0
    %726 = vmatpush1.bf16.xpose.msra.mxu0 %v190
    %727 = vmatprep.subr.bf16.mxu0 0
    %728 = vmatpush1.bf16.xpose.msra.mxu0 0
    %729 = vmatprep.subr.bf16.mxu0 0
    %730 = vmatpush1.bf16.xpose.msra.mxu0 0
    %731 = vmatprep.subr.bf16.mxu0 0
    %732 = vmatpush1.bf16.xpose.msra.mxu0 0
    %733 = vmatprep.subr.bf16.mxu0 0
    %734 = vmatpush1.bf16.xpose.msra.mxu0 0
    %735 = vmatprep.subr.bf16.mxu0 0
    %736 = vmatpush1.bf16.xpose.msra.mxu0 0
    %737 = vmatprep.subr.bf16.mxu0 0
    %738 = vmatpush1.bf16.xpose.msra.mxu0 0
    %739 = vmatprep.subr.bf16.mxu0 0
    %740 = vmatpush1.bf16.xpose.msra.mxu0 0
    %741 = vmatprep.subr.bf16.mxu0 0
    %742 = vmatpush1.bf16.xpose.msra.mxu0 0
    %743 = vmatprep.subr.bf16.mxu0 0
    %744 = vmatpush1.bf16.xpose.msra.mxu0 0
    %745 = vmatprep.subr.bf16.mxu0 0
    %746 = vmatpush1.bf16.xpose.msra.mxu0 0
    %747 = vmatprep.subr.bf16.mxu0 0
    %748 = vmatpush1.bf16.xpose.msra.mxu0 0
    %749 = vmatprep.subr.bf16.mxu0 0
    %750 = vmatpush1.bf16.xpose.msra.mxu0 0
    %751 = vmatprep.subr.bf16.mxu0 0
    %752 = vmatpush1.bf16.xpose.msra.mxu0 0
    %753 = vmatprep.subr.bf16.mxu0 0
    %754 = vmatpush1.bf16.xpose.msra.mxu0 0
    %755 = vmatprep.subr.bf16.mxu0 0
    %756 = vmatpush1.bf16.xpose.msra.mxu0 0
    %757 = vmatprep.mubr.bf16.mxu0 0
    %758 = vmatmul.mubr.bf16.gmra.mrb[0].mxu0 %v723
    %v759 = vpop.f32.mrb[0].mxu0
    %v760 = vadd.f32 %v714, %v759
    %v761 = vpop.f32.mrb[0].mxu0
    %v762 = vpop.f32.mrb[0].mxu0
    %v763 = vadd.f32 %v715, %v762
    %v764 = vpop.f32.mrb[0].mxu0
    %765 = vdwg.mxu0
    %v767 = vsel %vm91, %v710, 0
    %769 = vmatprep.subr.bf16.mxu0 0
    %770 = vmatpush1.bf16.xpose.msra.mxu0 %v242
    %771 = vmatprep.subr.bf16.mxu0 0
    %772 = vmatpush1.bf16.xpose.msra.mxu0 0
    %773 = vmatprep.subr.bf16.mxu0 0
    %774 = vmatpush1.bf16.xpose.msra.mxu0 0
    %775 = vmatprep.subr.bf16.mxu0 0
    %776 = vmatpush1.bf16.xpose.msra.mxu0 0
    %777 = vmatprep.subr.bf16.mxu0 0
    %778 = vmatpush1.bf16.xpose.msra.mxu0 0
    %779 = vmatprep.subr.bf16.mxu0 0
    %780 = vmatpush1.bf16.xpose.msra.mxu0 0
    %781 = vmatprep.subr.bf16.mxu0 0
    %782 = vmatpush1.bf16.xpose.msra.mxu0 0
    %783 = vmatprep.subr.bf16.mxu0 0
    %784 = vmatpush1.bf16.xpose.msra.mxu0 0
    %785 = vmatprep.subr.bf16.mxu0 0
    %786 = vmatpush1.bf16.xpose.msra.mxu0 0
    %787 = vmatprep.subr.bf16.mxu0 0
    %788 = vmatpush1.bf16.xpose.msra.mxu0 0
    %789 = vmatprep.subr.bf16.mxu0 0
    %790 = vmatpush1.bf16.xpose.msra.mxu0 0
    %791 = vmatprep.subr.bf16.mxu0 0
    %792 = vmatpush1.bf16.xpose.msra.mxu0 0
    %793 = vmatprep.subr.bf16.mxu0 0
    %794 = vmatpush1.bf16.xpose.msra.mxu0 0
    %795 = vmatprep.subr.bf16.mxu0 0
    %796 = vmatpush1.bf16.xpose.msra.mxu0 0
    %797 = vmatprep.subr.bf16.mxu0 0
    %798 = vmatpush1.bf16.xpose.msra.mxu0 0
    %799 = vmatprep.subr.bf16.mxu0 0
    %800 = vmatpush1.bf16.xpose.msra.mxu0 0
    %801 = vmatprep.mubr.bf16.mxu0 0
    %802 = vmatmul.mubr.bf16.gmra.mrb[0].mxu0 %v767
    %v803 = vpop.f32.mrb[0].mxu0
    %v804 = vadd.f32 %v716, %v803
    %v805 = vpop.f32.mrb[0].mxu0
    %v806 = vpop.f32.mrb[0].mxu0
    %v807 = vadd.f32 %v717, %v806
    %v808 = vpop.f32.mrb[0].mxu0
    %809 = vdwg.mxu0
    %v811 = vsel %vm91, %v711, 0
    %813 = vmatprep.subr.bf16.mxu0 0
    %814 = vmatpush1.bf16.xpose.msra.mxu0 %v294
    %815 = vmatprep.subr.bf16.mxu0 0
    %816 = vmatpush1.bf16.xpose.msra.mxu0 0
    %817 = vmatprep.subr.bf16.mxu0 0
    %818 = vmatpush1.bf16.xpose.msra.mxu0 0
    %819 = vmatprep.subr.bf16.mxu0 0
    %820 = vmatpush1.bf16.xpose.msra.mxu0 0
    %821 = vmatprep.subr.bf16.mxu0 0
    %822 = vmatpush1.bf16.xpose.msra.mxu0 0
    %823 = vmatprep.subr.bf16.mxu0 0
    %824 = vmatpush1.bf16.xpose.msra.mxu0 0
    %825 = vmatprep.subr.bf16.mxu0 0
    %826 = vmatpush1.bf16.xpose.msra.mxu0 0
    %827 = vmatprep.subr.bf16.mxu0 0
    %828 = vmatpush1.bf16.xpose.msra.mxu0 0
    %829 = vmatprep.subr.bf16.mxu0 0
    %830 = vmatpush1.bf16.xpose.msra.mxu0 0
    %831 = vmatprep.subr.bf16.mxu0 0
    %832 = vmatpush1.bf16.xpose.msra.mxu0 0
    %833 = vmatprep.subr.bf16.mxu0 0
    %834 = vmatpush1.bf16.xpose.msra.mxu0 0
    %835 = vmatprep.subr.bf16.mxu0 0
    %836 = vmatpush1.bf16.xpose.msra.mxu0 0
    %837 = vmatprep.subr.bf16.mxu0 0
    %838 = vmatpush1.bf16.xpose.msra.mxu0 0
    %839 = vmatprep.subr.bf16.mxu0 0
    %840 = vmatpush1.bf16.xpose.msra.mxu0 0
    %841 = vmatprep.subr.bf16.mxu0 0
    %842 = vmatpush1.bf16.xpose.msra.mxu0 0
    %843 = vmatprep.subr.bf16.mxu0 0
    %844 = vmatpush1.bf16.xpose.msra.mxu0 0
    %845 = vmatprep.mubr.bf16.mxu0 0
    %846 = vmatmul.mubr.bf16.gmra.mrb[0].mxu0 %v811
    %v847 = vpop.f32.mrb[0].mxu0
    %v848 = vadd.f32 %v718, %v847
    %v849 = vpop.f32.mrb[0].mxu0
    %v850 = vpop.f32.mrb[0].mxu0
    %v851 = vadd.f32 %v719, %v850
    %v852 = vpop.f32.mrb[0].mxu0
    %853 = vdwg.mxu0
    %v855 = vsel %vm91, %v712, 0
    %857 = vmatprep.subr.bf16.mxu0 0
    %858 = vmatpush1.bf16.xpose.msra.mxu0 %v346
    %859 = vmatprep.subr.bf16.mxu0 0
    %860 = vmatpush1.bf16.xpose.msra.mxu0 0
    %861 = vmatprep.subr.bf16.mxu0 0
    %862 = vmatpush1.bf16.xpose.msra.mxu0 0
    %863 = vmatprep.subr.bf16.mxu0 0
    %864 = vmatpush1.bf16.xpose.msra.mxu0 0
    %865 = vmatprep.subr.bf16.mxu0 0
    %866 = vmatpush1.bf16.xpose.msra.mxu0 0
    %867 = vmatprep.subr.bf16.mxu0 0
    %868 = vmatpush1.bf16.xpose.msra.mxu0 0
    %869 = vmatprep.subr.bf16.mxu0 0
    %870 = vmatpush1.bf16.xpose.msra.mxu0 0
    %871 = vmatprep.subr.bf16.mxu0 0
    %872 = vmatpush1.bf16.xpose.msra.mxu0 0
    %873 = vmatprep.subr.bf16.mxu0 0
    %874 = vmatpush1.bf16.xpose.msra.mxu0 0
    %875 = vmatprep.subr.bf16.mxu0 0
    %876 = vmatpush1.bf16.xpose.msra.mxu0 0
    %877 = vmatprep.subr.bf16.mxu0 0
    %878 = vmatpush1.bf16.xpose.msra.mxu0 0
    %879 = vmatprep.subr.bf16.mxu0 0
    %880 = vmatpush1.bf16.xpose.msra.mxu0 0
    %881 = vmatprep.subr.bf16.mxu0 0
    %882 = vmatpush1.bf16.xpose.msra.mxu0 0
    %883 = vmatprep.subr.bf16.mxu0 0
    %884 = vmatpush1.bf16.xpose.msra.mxu0 0
    %885 = vmatprep.subr.bf16.mxu0 0
    %886 = vmatpush1.bf16.xpose.msra.mxu0 0
    %887 = vmatprep.subr.bf16.mxu0 0
    %888 = vmatpush1.bf16.xpose.msra.mxu0 0
    %889 = vmatprep.mubr.bf16.mxu0 0
    %890 = vmatmul.mubr.bf16.gmra.mrb[0].mxu0 %v855
    %v891 = vpop.f32.mrb[0].mxu0
    %v892 = vadd.f32 %v720, %v891
    %v893 = vpop.f32.mrb[0].mxu0
    %v894 = vpop.f32.mrb[0].mxu0
    %v895 = vadd.f32 %v721, %v894
    %v896 = vpop.f32.mrb[0].mxu0
    %897 = vdwg.mxu0
    %s898 = scalar_lea.vmem [#allocation5], 16
    %899 = vst.msk [vmem:[%s898] sm:$0xff] %vm389, %v760
    %900 = vst.msk [vmem:[%s898 + $0x8] sm:$0xff] %vm389, %v763
    %901 = vst.msk [vmem:[%s898 + $0x40] sm:$0xff] %vm389, %v804
    %902 = vst.msk [vmem:[%s898 + $0x48] sm:$0xff] %vm389, %v807
    %903 = vst.msk [vmem:[%s898 + $0x80] sm:$0xff] %vm389, %v848
    %904 = vst.msk [vmem:[%s898 + $0x88] sm:$0xff] %vm389, %v851
    %905 = vst.msk [vmem:[%s898 + $0xc0] sm:$0xff] %vm389, %v892
    %906 = vst.msk [vmem:[%s898 + $0xc8] sm:$0xff] %vm389, %v895
    %v907 = vsel %vm389, %v760, -inf
    %v908 = vsel %vm389, %v763, -inf
    %v909 = vmax.f32 %v907, %v908
    %v910 = vrot.slane %v909, 4
    %v911 = vmax.f32 %v909, %v910
    %v912 = vrot.slane %v911, 2
    %v913 = vmax.f32 %v911, %v912
    %v914 = vrot.slane %v913, 1
    %v915 = vmax.f32 %v913, %v914
    %v916 = vsel %vm389, %v804, -inf
    %v917 = vsel %vm389, %v807, -inf
    %v918 = vmax.f32 %v916, %v917
    %v919 = vrot.slane %v918, 4
    %v920 = vmax.f32 %v918, %v919
    %v921 = vrot.slane %v920, 2
    %v922 = vmax.f32 %v920, %v921
    %v923 = vrot.slane %v922, 1
    %v924 = vmax.f32 %v922, %v923
    %v925 = vsel %vm389, %v848, -inf
    %v926 = vsel %vm389, %v851, -inf
    %v927 = vmax.f32 %v925, %v926
    %v928 = vrot.slane %v927, 4
    %v929 = vmax.f32 %v927, %v928
    %v930 = vrot.slane %v929, 2
    %v931 = vmax.f32 %v929, %v930
    %v932 = vrot.slane %v931, 1
    %v933 = vmax.f32 %v931, %v932
    %v934 = vsel %vm389, %v892, -inf
    %v935 = vsel %vm389, %v895, -inf
    %v936 = vmax.f32 %v934, %v935
    %v937 = vrot.slane %v936, 4
    %v938 = vmax.f32 %v936, %v937
    %v939 = vrot.slane %v938, 2
    %v940 = vmax.f32 %v938, %v939
    %v941 = vrot.slane %v940, 1
    %v942 = vmax.f32 %v940, %v941
    %v943 = vsub.f32 %v760, %v915
    %v944 = vsub.f32 %v763, %v915
    %v945 = vsub.f32 %v804, %v924
    %v946 = vsub.f32 %v807, %v924
    %v947 = vsub.f32 %v848, %v933
    %v948 = vsub.f32 %v851, %v933
    %v949 = vsub.f32 %v892, %v942
    %v950 = vsub.f32 %v895, %v942
    %v951 = vmul.f32 %v943, 1.442695
    %v952 = vpow.pop %v951
    %v953 = vmul.f32 %v944, 1.442695
    %v954 = vpow.pop %v953
    %v955 = vmul.f32 %v945, 1.442695
    %v956 = vpow.pop %v955
    %v957 = vmul.f32 %v946, 1.442695
    %v958 = vpow.pop %v957
    %v959 = vmul.f32 %v947, 1.442695
    %v960 = vpow.pop %v959
    %v961 = vmul.f32 %v948, 1.442695
    %v962 = vpow.pop %v961
    %v963 = vmul.f32 %v949, 1.442695
    %v964 = vpow.pop %v963
    %v965 = vmul.f32 %v950, 1.442695
    %v966 = vpow.pop %v965
    %v967 = vsel %vm389, %v952, 0.0
    %v968 = vsel %vm389, %v954, 0.0
    %v969 = vadd.f32 %v967, %v968
    %v970 = vrot.slane %v969, 4
    %v971 = vadd.f32 %v969, %v970
    %v972 = vrot.slane %v971, 2
    %v973 = vadd.f32 %v971, %v972
    %v974 = vrot.slane %v973, 1
    %v975 = vadd.f32 %v973, %v974
    %v976 = vsel %vm389, %v956, 0.0
    %v977 = vsel %vm389, %v958, 0.0
    %v978 = vadd.f32 %v976, %v977
    %v979 = vrot.slane %v978, 4
    %v980 = vadd.f32 %v978, %v979
    %v981 = vrot.slane %v980, 2
    %v982 = vadd.f32 %v980, %v981
    %v983 = vrot.slane %v982, 1
    %v984 = vadd.f32 %v982, %v983
    %v985 = vsel %vm389, %v960, 0.0
    %v986 = vsel %vm389, %v962, 0.0
    %v987 = vadd.f32 %v985, %v986
    %v988 = vrot.slane %v987, 4
    %v989 = vadd.f32 %v987, %v988
    %v990 = vrot.slane %v989, 2
    %v991 = vadd.f32 %v989, %v990
    %v992 = vrot.slane %v991, 1
    %v993 = vadd.f32 %v991, %v992
    %v994 = vsel %vm389, %v964, 0.0
    %v995 = vsel %vm389, %v966, 0.0
    %v996 = vadd.f32 %v994, %v995
    %v997 = vrot.slane %v996, 4
    %v998 = vadd.f32 %v996, %v997
    %v999 = vrot.slane %v998, 2
    %v1000 = vadd.f32 %v998, %v999
    %v1001 = vrot.slane %v1000, 1
    %v1002 = vadd.f32 %v1000, %v1001
    %v1003 = vrcp.pop %v975
    %v1004 = vrcp.pop %v984
    %v1005 = vrcp.pop %v993
    %v1006 = vrcp.pop %v1002
    %v1007 = vmul.f32 %v952, %v1003
    %v1008 = vmul.f32 %v954, %v1003
    %v1009 = vmul.f32 %v956, %v1004
    %v1010 = vmul.f32 %v958, %v1004
    %v1011 = vmul.f32 %v960, %v1005
    %v1012 = vmul.f32 %v962, %v1005
    %v1013 = vmul.f32 %v964, %v1006
    %v1014 = vmul.f32 %v966, %v1006
    %v1015 = vpack.c.bf16 %v1008, %v1007
    %v1016 = vpack.c.bf16 %v1010, %v1009
    %v1017 = vpack.c.bf16 %v1012, %v1011
    %v1018 = vpack.c.bf16 %v1014, %v1013
    %s1019 = scalar_lea.vmem %s5, 16
    %v1020 = vld [vmem:[%s1019] sm:$0xf]
    %v1021 = vld [vmem:[%s1019 + $0x4] sm:$0xf]
    %v1022 = vld [vmem:[%s1019 + $0x8] sm:$0xf]
    %v1023 = vld [vmem:[%s1019 + $0xc] sm:$0xf]
    %v1028 = vunpack.c.l.b16 %v1020
    %v1029 = vunpack.c.l.b16 %v1021
    %v1030 = vunpack.c.l.b16 %v1022
    %v1031 = vunpack.c.l.b16 %v1023
    %v1032 = vpack.c.b16 %v1029, %v1028
    %v1033 = vpack.c.b16 %v1031, %v1030
    %1036 = vmatprep.subr.bf16.mxu0 0
    %1037 = vmatpush1.bf16.msra.mxu0 %v1032
    %1038 = vmatprep.subr.bf16.mxu0 0
    %1039 = vmatpush1.bf16.msra.mxu0 %v1033
    %1040 = vmatprep.subr.bf16.mxu0 0
    %1041 = vmatpush1.bf16.msra.mxu0 0
    %1042 = vmatprep.subr.bf16.mxu0 0
    %1043 = vmatpush1.bf16.msra.mxu0 0
    %1044 = vmatprep.subr.bf16.mxu0 0
    %1045 = vmatpush1.bf16.msra.mxu0 0
    %1046 = vmatprep.subr.bf16.mxu0 0
    %1047 = vmatpush1.bf16.msra.mxu0 0
    %1048 = vmatprep.subr.bf16.mxu0 0
    %1049 = vmatpush1.bf16.msra.mxu0 0
    %1050 = vmatprep.subr.bf16.mxu0 0
    %1051 = vmatpush1.bf16.msra.mxu0 0
    %1052 = vmatprep.subr.bf16.mxu0 0
    %1053 = vmatpush1.bf16.msra.mxu0 0
    %1054 = vmatprep.subr.bf16.mxu0 0
    %1055 = vmatpush1.bf16.msra.mxu0 0
    %1056 = vmatprep.subr.bf16.mxu0 0
    %1057 = vmatpush1.bf16.msra.mxu0 0
    %1058 = vmatprep.subr.bf16.mxu0 0
    %1059 = vmatpush1.bf16.msra.mxu0 0
    %1060 = vmatprep.subr.bf16.mxu0 0
    %1061 = vmatpush1.bf16.msra.mxu0 0
    %1062 = vmatprep.subr.bf16.mxu0 0
    %1063 = vmatpush1.bf16.msra.mxu0 0
    %1064 = vmatprep.subr.bf16.mxu0 0
    %1065 = vmatpush1.bf16.msra.mxu0 0
    %1066 = vmatprep.subr.bf16.mxu0 0
    %1067 = vmatpush1.bf16.msra.mxu0 0
    %1068 = vmatprep.mubr.bf16.mxu0 0
    %1069 = vmatmul.mubr.bf16.gmra.mrb[0].mxu0 %v547
    %v1070 = vpop.f32.mrb[0].mxu0
    %v1071 = vadd.f32 0.0, %v1070
    %v1072 = vpop.f32.mrb[0].mxu0
    %v1073 = vpop.f32.mrb[0].mxu0
    %v1074 = vadd.f32 0.0, %v1073
    %v1075 = vpop.f32.mrb[0].mxu0
    %1076 = vmatprep.mubr.bf16.mxu0 0
    %1077 = vmatmul.mubr.bf16.gmra.mrb[0].mxu0 %v550
    %v1078 = vpop.f32.mrb[0].mxu0
    %v1079 = vadd.f32 0.0, %v1078
    %v1080 = vpop.f32.mrb[0].mxu0
    %v1081 = vpop.f32.mrb[0].mxu0
    %v1082 = vadd.f32 0.0, %v1081
    %v1083 = vpop.f32.mrb[0].mxu0
    %1084 = vmatprep.mubr.bf16.mxu0 0
    %1085 = vmatmul.mubr.bf16.gmra.mrb[0].mxu0 %v553
    %v1086 = vpop.f32.mrb[0].mxu0
    %v1087 = vadd.f32 0.0, %v1086
    %v1088 = vpop.f32.mrb[0].mxu0
    %v1089 = vpop.f32.mrb[0].mxu0
    %v1090 = vadd.f32 0.0, %v1089
    %v1091 = vpop.f32.mrb[0].mxu0
    %1092 = vmatprep.mubr.bf16.mxu0 0
    %1093 = vmatmul.mubr.bf16.gmra.mrb[0].mxu0 %v556
    %v1094 = vpop.f32.mrb[0].mxu0
    %v1095 = vadd.f32 0.0, %v1094
    %v1096 = vpop.f32.mrb[0].mxu0
    %v1097 = vpop.f32.mrb[0].mxu0
    %v1098 = vadd.f32 0.0, %v1097
    %v1099 = vpop.f32.mrb[0].mxu0
    %1100 = vdwg.mxu0
    %v1101 = vpack.c.bf16 %v1074, %v1071
    %v1102 = vpack.c.bf16 %v1082, %v1079
    %v1103 = vpack.c.bf16 %v1090, %v1087
    %v1104 = vpack.c.bf16 %v1098, %v1095
    %v1106 = vsel %vm389, %v1015, 0
    %1108 = vmatprep.subr.bf16.mxu0 0
    %1109 = vmatpush1.bf16.msra.mxu0 %v1101
    %1110 = vmatprep.subr.bf16.mxu0 0
    %1111 = vmatpush1.bf16.msra.mxu0 0
    %1112 = vmatprep.subr.bf16.mxu0 0
    %1113 = vmatpush1.bf16.msra.mxu0 0
    %1114 = vmatprep.subr.bf16.mxu0 0
    %1115 = vmatpush1.bf16.msra.mxu0 0
    %1116 = vmatprep.subr.bf16.mxu0 0
    %1117 = vmatpush1.bf16.msra.mxu0 0
    %1118 = vmatprep.subr.bf16.mxu0 0
    %1119 = vmatpush1.bf16.msra.mxu0 0
    %1120 = vmatprep.subr.bf16.mxu0 0
    %1121 = vmatpush1.bf16.msra.mxu0 0
    %1122 = vmatprep.subr.bf16.mxu0 0
    %1123 = vmatpush1.bf16.msra.mxu0 0
    %1124 = vmatprep.subr.bf16.mxu0 0
    %1125 = vmatpush1.bf16.msra.mxu0 0
    %1126 = vmatprep.subr.bf16.mxu0 0
    %1127 = vmatpush1.bf16.msra.mxu0 0
    %1128 = vmatprep.subr.bf16.mxu0 0
    %1129 = vmatpush1.bf16.msra.mxu0 0
    %1130 = vmatprep.subr.bf16.mxu0 0
    %1131 = vmatpush1.bf16.msra.mxu0 0
    %1132 = vmatprep.subr.bf16.mxu0 0
    %1133 = vmatpush1.bf16.msra.mxu0 0
    %1134 = vmatprep.subr.bf16.mxu0 0
    %1135 = vmatpush1.bf16.msra.mxu0 0
    %1136 = vmatprep.subr.bf16.mxu0 0
    %1137 = vmatpush1.bf16.msra.mxu0 0
    %1138 = vmatprep.subr.bf16.mxu0 0
    %1139 = vmatpush1.bf16.msra.mxu0 0
    %1140 = vmatprep.mubr.bf16.mxu0 0
    %1141 = vmatmul.mubr.bf16.gmra.mrb[0].mxu0 %v1106
    %v1142 = vpop.f32.mrb[0].mxu0
    %v1143 = vadd.f32 0.0, %v1142
    %v1144 = vpop.f32.mrb[0].mxu0
    %v1145 = vpop.f32.mrb[0].mxu0
    %v1146 = vadd.f32 0.0, %v1145
    %v1147 = vpop.f32.mrb[0].mxu0
    %1148 = vdwg.mxu0
    %v1150 = vsel %vm389, %v1016, 0
    %1152 = vmatprep.subr.bf16.mxu0 0
    %1153 = vmatpush1.bf16.msra.mxu0 %v1102
    %1154 = vmatprep.subr.bf16.mxu0 0
    %1155 = vmatpush1.bf16.msra.mxu0 0
    %1156 = vmatprep.subr.bf16.mxu0 0
    %1157 = vmatpush1.bf16.msra.mxu0 0
    %1158 = vmatprep.subr.bf16.mxu0 0
    %1159 = vmatpush1.bf16.msra.mxu0 0
    %1160 = vmatprep.subr.bf16.mxu0 0
    %1161 = vmatpush1.bf16.msra.mxu0 0
    %1162 = vmatprep.subr.bf16.mxu0 0
    %1163 = vmatpush1.bf16.msra.mxu0 0
    %1164 = vmatprep.subr.bf16.mxu0 0
    %1165 = vmatpush1.bf16.msra.mxu0 0
    %1166 = vmatprep.subr.bf16.mxu0 0
    %1167 = vmatpush1.bf16.msra.mxu0 0
    %1168 = vmatprep.subr.bf16.mxu0 0
    %1169 = vmatpush1.bf16.msra.mxu0 0
    %1170 = vmatprep.subr.bf16.mxu0 0
    %1171 = vmatpush1.bf16.msra.mxu0 0
    %1172 = vmatprep.subr.bf16.mxu0 0
    %1173 = vmatpush1.bf16.msra.mxu0 0
    %1174 = vmatprep.subr.bf16.mxu0 0
    %1175 = vmatpush1.bf16.msra.mxu0 0
    %1176 = vmatprep.subr.bf16.mxu0 0
    %1177 = vmatpush1.bf16.msra.mxu0 0
    %1178 = vmatprep.subr.bf16.mxu0 0
    %1179 = vmatpush1.bf16.msra.mxu0 0
    %1180 = vmatprep.subr.bf16.mxu0 0
    %1181 = vmatpush1.bf16.msra.mxu0 0
    %1182 = vmatprep.subr.bf16.mxu0 0
    %1183 = vmatpush1.bf16.msra.mxu0 0
    %1184 = vmatprep.mubr.bf16.mxu0 0
    %1185 = vmatmul.mubr.bf16.gmra.mrb[0].mxu0 %v1150
    %v1186 = vpop.f32.mrb[0].mxu0
    %v1187 = vadd.f32 0.0, %v1186
    %v1188 = vpop.f32.mrb[0].mxu0
    %v1189 = vpop.f32.mrb[0].mxu0
    %v1190 = vadd.f32 0.0, %v1189
    %v1191 = vpop.f32.mrb[0].mxu0
    %1192 = vdwg.mxu0
    %v1194 = vsel %vm389, %v1017, 0
    %1196 = vmatprep.subr.bf16.mxu0 0
    %1197 = vmatpush1.bf16.msra.mxu0 %v1103
    %1198 = vmatprep.subr.bf16.mxu0 0
    %1199 = vmatpush1.bf16.msra.mxu0 0
    %1200 = vmatprep.subr.bf16.mxu0 0
    %1201 = vmatpush1.bf16.msra.mxu0 0
    %1202 = vmatprep.subr.bf16.mxu0 0
    %1203 = vmatpush1.bf16.msra.mxu0 0
    %1204 = vmatprep.subr.bf16.mxu0 0
    %1205 = vmatpush1.bf16.msra.mxu0 0
    %1206 = vmatprep.subr.bf16.mxu0 0
    %1207 = vmatpush1.bf16.msra.mxu0 0
    %1208 = vmatprep.subr.bf16.mxu0 0
    %1209 = vmatpush1.bf16.msra.mxu0 0
    %1210 = vmatprep.subr.bf16.mxu0 0
    %1211 = vmatpush1.bf16.msra.mxu0 0
    %1212 = vmatprep.subr.bf16.mxu0 0
    %1213 = vmatpush1.bf16.msra.mxu0 0
    %1214 = vmatprep.subr.bf16.mxu0 0
    %1215 = vmatpush1.bf16.msra.mxu0 0
    %1216 = vmatprep.subr.bf16.mxu0 0
    %1217 = vmatpush1.bf16.msra.mxu0 0
    %1218 = vmatprep.subr.bf16.mxu0 0
    %1219 = vmatpush1.bf16.msra.mxu0 0
    %1220 = vmatprep.subr.bf16.mxu0 0
    %1221 = vmatpush1.bf16.msra.mxu0 0
    %1222 = vmatprep.subr.bf16.mxu0 0
    %1223 = vmatpush1.bf16.msra.mxu0 0
    %1224 = vmatprep.subr.bf16.mxu0 0
    %1225 = vmatpush1.bf16.msra.mxu0 0
    %1226 = vmatprep.subr.bf16.mxu0 0
    %1227 = vmatpush1.bf16.msra.mxu0 0
    %1228 = vmatprep.mubr.bf16.mxu0 0
    %1229 = vmatmul.mubr.bf16.gmra.mrb[0].mxu0 %v1194
    %v1230 = vpop.f32.mrb[0].mxu0
    %v1231 = vadd.f32 0.0, %v1230
    %v1232 = vpop.f32.mrb[0].mxu0
    %v1233 = vpop.f32.mrb[0].mxu0
    %v1234 = vadd.f32 0.0, %v1233
    %v1235 = vpop.f32.mrb[0].mxu0
    %1236 = vdwg.mxu0
    %v1238 = vsel %vm389, %v1018, 0
    %1240 = vmatprep.subr.bf16.mxu0 0
    %1241 = vmatpush1.bf16.msra.mxu0 %v1104
    %1242 = vmatprep.subr.bf16.mxu0 0
    %1243 = vmatpush1.bf16.msra.mxu0 0
    %1244 = vmatprep.subr.bf16.mxu0 0
    %1245 = vmatpush1.bf16.msra.mxu0 0
    %1246 = vmatprep.subr.bf16.mxu0 0
    %1247 = vmatpush1.bf16.msra.mxu0 0
    %1248 = vmatprep.subr.bf16.mxu0 0
    %1249 = vmatpush1.bf16.msra.mxu0 0
    %1250 = vmatprep.subr.bf16.mxu0 0
    %1251 = vmatpush1.bf16.msra.mxu0 0
    %1252 = vmatprep.subr.bf16.mxu0 0
    %1253 = vmatpush1.bf16.msra.mxu0 0
    %1254 = vmatprep.subr.bf16.mxu0 0
    %1255 = vmatpush1.bf16.msra.mxu0 0
    %1256 = vmatprep.subr.bf16.mxu0 0
    %1257 = vmatpush1.bf16.msra.mxu0 0
    %1258 = vmatprep.subr.bf16.mxu0 0
    %1259 = vmatpush1.bf16.msra.mxu0 0
    %1260 = vmatprep.subr.bf16.mxu0 0
    %1261 = vmatpush1.bf16.msra.mxu0 0
    %1262 = vmatprep.subr.bf16.mxu0 0
    %1263 = vmatpush1.bf16.msra.mxu0 0
    %1264 = vmatprep.subr.bf16.mxu0 0
    %1265 = vmatpush1.bf16.msra.mxu0 0
    %1266 = vmatprep.subr.bf16.mxu0 0
    %1267 = vmatpush1.bf16.msra.mxu0 0
    %1268 = vmatprep.subr.bf16.mxu0 0
    %1269 = vmatpush1.bf16.msra.mxu0 0
    %1270 = vmatprep.subr.bf16.mxu0 0
    %1271 = vmatpush1.bf16.msra.mxu0 0
    %1272 = vmatprep.mubr.bf16.mxu0 0
    %1273 = vmatmul.mubr.bf16.gmra.mrb[0].mxu0 %v1238
    %v1274 = vpop.f32.mrb[0].mxu0
    %v1275 = vadd.f32 0.0, %v1274
    %v1276 = vpop.f32.mrb[0].mxu0
    %v1277 = vpop.f32.mrb[0].mxu0
    %v1278 = vadd.f32 0.0, %v1277
    %v1279 = vpop.f32.mrb[0].mxu0
    %1280 = vdwg.mxu0
    %v1282 = vsel %vm389, %v506, 0
    %1284 = vmatprep.subr.bf16.mxu0 0
    %1285 = vmatpush1.bf16.msra.mxu0 %v623
    %1286 = vmatprep.subr.bf16.mxu0 0
    %1287 = vmatpush1.bf16.msra.mxu0 0
    %1288 = vmatprep.subr.bf16.mxu0 0
    %1289 = vmatpush1.bf16.msra.mxu0 0
    %1290 = vmatprep.subr.bf16.mxu0 0
    %1291 = vmatpush1.bf16.msra.mxu0 0
    %1292 = vmatprep.subr.bf16.mxu0 0
    %1293 = vmatpush1.bf16.msra.mxu0 0
    %1294 = vmatprep.subr.bf16.mxu0 0
    %1295 = vmatpush1.bf16.msra.mxu0 0
    %1296 = vmatprep.subr.bf16.mxu0 0
    %1297 = vmatpush1.bf16.msra.mxu0 0
    %1298 = vmatprep.subr.bf16.mxu0 0
    %1299 = vmatpush1.bf16.msra.mxu0 0
    %1300 = vmatprep.subr.bf16.mxu0 0
    %1301 = vmatpush1.bf16.msra.mxu0 0
    %1302 = vmatprep.subr.bf16.mxu0 0
    %1303 = vmatpush1.bf16.msra.mxu0 0
    %1304 = vmatprep.subr.bf16.mxu0 0
    %1305 = vmatpush1.bf16.msra.mxu0 0
    %1306 = vmatprep.subr.bf16.mxu0 0
    %1307 = vmatpush1.bf16.msra.mxu0 0
    %1308 = vmatprep.subr.bf16.mxu0 0
    %1309 = vmatpush1.bf16.msra.mxu0 0
    %1310 = vmatprep.subr.bf16.mxu0 0
    %1311 = vmatpush1.bf16.msra.mxu0 0
    %1312 = vmatprep.subr.bf16.mxu0 0
    %1313 = vmatpush1.bf16.msra.mxu0 0
    %1314 = vmatprep.subr.bf16.mxu0 0
    %1315 = vmatpush1.bf16.msra.mxu0 0
    %1316 = vmatprep.mubr.bf16.mxu0 0
    %1317 = vmatmul.mubr.bf16.gmra.mrb[0].mxu0 %v1282
    %v1318 = vpop.f32.mrb[0].mxu0
    %v1319 = vadd.f32 %v1143, %v1318
    %v1320 = vpop.f32.mrb[0].mxu0
    %v1321 = vpop.f32.mrb[0].mxu0
    %v1322 = vadd.f32 %v1146, %v1321
    %v1323 = vpop.f32.mrb[0].mxu0
    %1324 = vdwg.mxu0
    %v1326 = vsel %vm389, %v507, 0
    %1328 = vmatprep.subr.bf16.mxu0 0
    %1329 = vmatpush1.bf16.msra.mxu0 %v624
    %1330 = vmatprep.subr.bf16.mxu0 0
    %1331 = vmatpush1.bf16.msra.mxu0 0
    %1332 = vmatprep.subr.bf16.mxu0 0
    %1333 = vmatpush1.bf16.msra.mxu0 0
    %1334 = vmatprep.subr.bf16.mxu0 0
    %1335 = vmatpush1.bf16.msra.mxu0 0
    %1336 = vmatprep.subr.bf16.mxu0 0
    %1337 = vmatpush1.bf16.msra.mxu0 0
    %1338 = vmatprep.subr.bf16.mxu0 0
    %1339 = vmatpush1.bf16.msra.mxu0 0
    %1340 = vmatprep.subr.bf16.mxu0 0
    %1341 = vmatpush1.bf16.msra.mxu0 0
    %1342 = vmatprep.subr.bf16.mxu0 0
    %1343 = vmatpush1.bf16.msra.mxu0 0
    %1344 = vmatprep.subr.bf16.mxu0 0
    %1345 = vmatpush1.bf16.msra.mxu0 0
    %1346 = vmatprep.subr.bf16.mxu0 0
    %1347 = vmatpush1.bf16.msra.mxu0 0
    %1348 = vmatprep.subr.bf16.mxu0 0
    %1349 = vmatpush1.bf16.msra.mxu0 0
    %1350 = vmatprep.subr.bf16.mxu0 0
    %1351 = vmatpush1.bf16.msra.mxu0 0
    %1352 = vmatprep.subr.bf16.mxu0 0
    %1353 = vmatpush1.bf16.msra.mxu0 0
    %1354 = vmatprep.subr.bf16.mxu0 0
    %1355 = vmatpush1.bf16.msra.mxu0 0
    %1356 = vmatprep.subr.bf16.mxu0 0
    %1357 = vmatpush1.bf16.msra.mxu0 0
    %1358 = vmatprep.subr.bf16.mxu0 0
    %1359 = vmatpush1.bf16.msra.mxu0 0
    %1360 = vmatprep.mubr.bf16.mxu0 0
    %1361 = vmatmul.mubr.bf16.gmra.mrb[0].mxu0 %v1326
    %v1362 = vpop.f32.mrb[0].mxu0
    %v1363 = vadd.f32 %v1187, %v1362
    %v1364 = vpop.f32.mrb[0].mxu0
    %v1365 = vpop.f32.mrb[0].mxu0
    %v1366 = vadd.f32 %v1190, %v1365
    %v1367 = vpop.f32.mrb[0].mxu0
    %1368 = vdwg.mxu0
    %v1370 = vsel %vm389, %v508, 0
    %1372 = vmatprep.subr.bf16.mxu0 0
    %1373 = vmatpush1.bf16.msra.mxu0 %v625
    %1374 = vmatprep.subr.bf16.mxu0 0
    %1375 = vmatpush1.bf16.msra.mxu0 0
    %1376 = vmatprep.subr.bf16.mxu0 0
    %1377 = vmatpush1.bf16.msra.mxu0 0
    %1378 = vmatprep.subr.bf16.mxu0 0
    %1379 = vmatpush1.bf16.msra.mxu0 0
    %1380 = vmatprep.subr.bf16.mxu0 0
    %1381 = vmatpush1.bf16.msra.mxu0 0
    %1382 = vmatprep.subr.bf16.mxu0 0
    %1383 = vmatpush1.bf16.msra.mxu0 0
    %1384 = vmatprep.subr.bf16.mxu0 0
    %1385 = vmatpush1.bf16.msra.mxu0 0
    %1386 = vmatprep.subr.bf16.mxu0 0
    %1387 = vmatpush1.bf16.msra.mxu0 0
    %1388 = vmatprep.subr.bf16.mxu0 0
    %1389 = vmatpush1.bf16.msra.mxu0 0
    %1390 = vmatprep.subr.bf16.mxu0 0
    %1391 = vmatpush1.bf16.msra.mxu0 0
    %1392 = vmatprep.subr.bf16.mxu0 0
    %1393 = vmatpush1.bf16.msra.mxu0 0
    %1394 = vmatprep.subr.bf16.mxu0 0
    %1395 = vmatpush1.bf16.msra.mxu0 0
    %1396 = vmatprep.subr.bf16.mxu0 0
    %1397 = vmatpush1.bf16.msra.mxu0 0
    %1398 = vmatprep.subr.bf16.mxu0 0
    %1399 = vmatpush1.bf16.msra.mxu0 0
    %1400 = vmatprep.subr.bf16.mxu0 0
    %1401 = vmatpush1.bf16.msra.mxu0 0
    %1402 = vmatprep.subr.bf16.mxu0 0
    %1403 = vmatpush1.bf16.msra.mxu0 0
    %1404 = vmatprep.mubr.bf16.mxu0 0
    %1405 = vmatmul.mubr.bf16.gmra.mrb[0].mxu0 %v1370
    %v1406 = vpop.f32.mrb[0].mxu0
    %v1407 = vadd.f32 %v1231, %v1406
    %v1408 = vpop.f32.mrb[0].mxu0
    %v1409 = vpop.f32.mrb[0].mxu0
    %v1410 = vadd.f32 %v1234, %v1409
    %v1411 = vpop.f32.mrb[0].mxu0
    %1412 = vdwg.mxu0
    %v1414 = vsel %vm389, %v509, 0
    %1416 = vmatprep.subr.bf16.mxu0 0
    %1417 = vmatpush1.bf16.msra.mxu0 %v626
    %1418 = vmatprep.subr.bf16.mxu0 0
    %1419 = vmatpush1.bf16.msra.mxu0 0
    %1420 = vmatprep.subr.bf16.mxu0 0
    %1421 = vmatpush1.bf16.msra.mxu0 0
    %1422 = vmatprep.subr.bf16.mxu0 0
    %1423 = vmatpush1.bf16.msra.mxu0 0
    %1424 = vmatprep.subr.bf16.mxu0 0
    %1425 = vmatpush1.bf16.msra.mxu0 0
    %1426 = vmatprep.subr.bf16.mxu0 0
    %1427 = vmatpush1.bf16.msra.mxu0 0
    %1428 = vmatprep.subr.bf16.mxu0 0
    %1429 = vmatpush1.bf16.msra.mxu0 0
    %1430 = vmatprep.subr.bf16.mxu0 0
    %1431 = vmatpush1.bf16.msra.mxu0 0
    %1432 = vmatprep.subr.bf16.mxu0 0
    %1433 = vmatpush1.bf16.msra.mxu0 0
    %1434 = vmatprep.subr.bf16.mxu0 0
    %1435 = vmatpush1.bf16.msra.mxu0 0
    %1436 = vmatprep.subr.bf16.mxu0 0
    %1437 = vmatpush1.bf16.msra.mxu0 0
    %1438 = vmatprep.subr.bf16.mxu0 0
    %1439 = vmatpush1.bf16.msra.mxu0 0
    %1440 = vmatprep.subr.bf16.mxu0 0
    %1441 = vmatpush1.bf16.msra.mxu0 0
    %1442 = vmatprep.subr.bf16.mxu0 0
    %1443 = vmatpush1.bf16.msra.mxu0 0
    %1444 = vmatprep.subr.bf16.mxu0 0
    %1445 = vmatpush1.bf16.msra.mxu0 0
    %1446 = vmatprep.subr.bf16.mxu0 0
    %1447 = vmatpush1.bf16.msra.mxu0 0
    %1448 = vmatprep.mubr.bf16.mxu0 0
    %1449 = vmatmul.mubr.bf16.gmra.mrb[0].mxu0 %v1414
    %v1450 = vpop.f32.mrb[0].mxu0
    %v1451 = vadd.f32 %v1275, %v1450
    %v1452 = vpop.f32.mrb[0].mxu0
    %v1453 = vpop.f32.mrb[0].mxu0
    %v1454 = vadd.f32 %v1278, %v1453
    %v1455 = vpop.f32.mrb[0].mxu0
    %1456 = vdwg.mxu0
    %s1457 = scalar_lea.vmem %s4, 32
    %v1458 = vld [vmem:[%s1457] sm:$0xf]
    %v1459 = vld [vmem:[%s1457 + $0x4] sm:$0xf]
    %v1460 = vld [vmem:[%s1457 + $0x8] sm:$0xf]
    %v1461 = vld [vmem:[%s1457 + $0xc] sm:$0xf]
    %v1466 = vunpack.c.l.b16 %v1458
    %v1467 = vunpack.c.l.b16 %v1459
    %v1468 = vunpack.c.l.b16 %v1460
    %v1469 = vunpack.c.l.b16 %v1461
    %v1470 = vpack.c.b16 %v1467, %v1466
    %v1471 = vpack.c.b16 %v1469, %v1468
    %1474 = vmatprep.subr.bf16.mxu0 0
    %1475 = vmatpush1.bf16.msra.mxu0 %v1470
    %1476 = vmatprep.subr.bf16.mxu0 0
    %1477 = vmatpush1.bf16.msra.mxu0 %v1471
    %1478 = vmatprep.subr.bf16.mxu0 0
    %1479 = vmatpush1.bf16.msra.mxu0 0
    %1480 = vmatprep.subr.bf16.mxu0 0
    %1481 = vmatpush1.bf16.msra.mxu0 0
    %1482 = vmatprep.subr.bf16.mxu0 0
    %1483 = vmatpush1.bf16.msra.mxu0 0
    %1484 = vmatprep.subr.bf16.mxu0 0
    %1485 = vmatpush1.bf16.msra.mxu0 0
    %1486 = vmatprep.subr.bf16.mxu0 0
    %1487 = vmatpush1.bf16.msra.mxu0 0
    %1488 = vmatprep.subr.bf16.mxu0 0
    %1489 = vmatpush1.bf16.msra.mxu0 0
    %1490 = vmatprep.subr.bf16.mxu0 0
    %1491 = vmatpush1.bf16.msra.mxu0 0
    %1492 = vmatprep.subr.bf16.mxu0 0
    %1493 = vmatpush1.bf16.msra.mxu0 0
    %1494 = vmatprep.subr.bf16.mxu0 0
    %1495 = vmatpush1.bf16.msra.mxu0 0
    %1496 = vmatprep.subr.bf16.mxu0 0
    %1497 = vmatpush1.bf16.msra.mxu0 0
    %1498 = vmatprep.subr.bf16.mxu0 0
    %1499 = vmatpush1.bf16.msra.mxu0 0
    %1500 = vmatprep.subr.bf16.mxu0 0
    %1501 = vmatpush1.bf16.msra.mxu0 0
    %1502 = vmatprep.subr.bf16.mxu0 0
    %1503 = vmatpush1.bf16.msra.mxu0 0
    %1504 = vmatprep.subr.bf16.mxu0 0
    %1505 = vmatpush1.bf16.msra.mxu0 0
    %1506 = vmatprep.mubr.bf16.mxu0 0
    %1507 = vmatmul.mubr.bf16.gmra.mrb[0].mxu0 %v93
    %v1508 = vpop.f32.mrb[0].mxu0
    %v1509 = vadd.f32 0.0, %v1508
    %v1510 = vpop.f32.mrb[0].mxu0
    %v1511 = vpop.f32.mrb[0].mxu0
    %v1512 = vadd.f32 0.0, %v1511
    %v1513 = vpop.f32.mrb[0].mxu0
    %1514 = vmatprep.mubr.bf16.mxu0 0
    %1515 = vmatmul.mubr.bf16.gmra.mrb[0].mxu0 %v96
    %v1516 = vpop.f32.mrb[0].mxu0
    %v1517 = vadd.f32 0.0, %v1516
    %v1518 = vpop.f32.mrb[0].mxu0
    %v1519 = vpop.f32.mrb[0].mxu0
    %v1520 = vadd.f32 0.0, %v1519
    %v1521 = vpop.f32.mrb[0].mxu0
    %1522 = vmatprep.mubr.bf16.mxu0 0
    %1523 = vmatmul.mubr.bf16.gmra.mrb[0].mxu0 %v99
    %v1524 = vpop.f32.mrb[0].mxu0
    %v1525 = vadd.f32 0.0, %v1524
    %v1526 = vpop.f32.mrb[0].mxu0
    %v1527 = vpop.f32.mrb[0].mxu0
    %v1528 = vadd.f32 0.0, %v1527
    %v1529 = vpop.f32.mrb[0].mxu0
    %1530 = vmatprep.mubr.bf16.mxu0 0
    %1531 = vmatmul.mubr.bf16.gmra.mrb[0].mxu0 %v102
    %v1532 = vpop.f32.mrb[0].mxu0
    %v1533 = vadd.f32 0.0, %v1532
    %v1534 = vpop.f32.mrb[0].mxu0
    %v1535 = vpop.f32.mrb[0].mxu0
    %v1536 = vadd.f32 0.0, %v1535
    %v1537 = vpop.f32.mrb[0].mxu0
    %1538 = vdwg.mxu0
    %v1539 = vpack.c.bf16 %v1512, %v1509
    %v1540 = vpack.c.bf16 %v1520, %v1517
    %v1541 = vpack.c.bf16 %v1528, %v1525
    %v1542 = vpack.c.bf16 %v1536, %v1533
    %s1543 = scalar_lea.vmem [#allocation2], 32
    %v1544 = vld [vmem:[%s1543] sm:$0xff]
    %v1545 = vld [vmem:[%s1543 + $0x8] sm:$0xff]
    %v1546 = vld [vmem:[%s1543 + $0x40] sm:$0xff]
    %v1547 = vld [vmem:[%s1543 + $0x48] sm:$0xff]
    %v1548 = vld [vmem:[%s1543 + $0x80] sm:$0xff]
    %v1549 = vld [vmem:[%s1543 + $0x88] sm:$0xff]
    %v1550 = vld [vmem:[%s1543 + $0xc0] sm:$0xff]
    %v1551 = vld [vmem:[%s1543 + $0xc8] sm:$0xff]
    %v1553 = vsel %vm91, %v1539, 0
    %1555 = vmatprep.subr.bf16.mxu0 0
    %1556 = vmatpush1.bf16.xpose.msra.mxu0 %v190
    %1557 = vmatprep.subr.bf16.mxu0 0
    %1558 = vmatpush1.bf16.xpose.msra.mxu0 0
    %1559 = vmatprep.subr.bf16.mxu0 0
    %1560 = vmatpush1.bf16.xpose.msra.mxu0 0
    %1561 = vmatprep.subr.bf16.mxu0 0
    %1562 = vmatpush1.bf16.xpose.msra.mxu0 0
    %1563 = vmatprep.subr.bf16.mxu0 0
    %1564 = vmatpush1.bf16.xpose.msra.mxu0 0
    %1565 = vmatprep.subr.bf16.mxu0 0
    %1566 = vmatpush1.bf16.xpose.msra.mxu0 0
    %1567 = vmatprep.subr.bf16.mxu0 0
    %1568 = vmatpush1.bf16.xpose.msra.mxu0 0
    %1569 = vmatprep.subr.bf16.mxu0 0
    %1570 = vmatpush1.bf16.xpose.msra.mxu0 0
    %1571 = vmatprep.subr.bf16.mxu0 0
    %1572 = vmatpush1.bf16.xpose.msra.mxu0 0
    %1573 = vmatprep.subr.bf16.mxu0 0
    %1574 = vmatpush1.bf16.xpose.msra.mxu0 0
    %1575 = vmatprep.subr.bf16.mxu0 0
    %1576 = vmatpush1.bf16.xpose.msra.mxu0 0
    %1577 = vmatprep.subr.bf16.mxu0 0
    %1578 = vmatpush1.bf16.xpose.msra.mxu0 0
    %1579 = vmatprep.subr.bf16.mxu0 0
    %1580 = vmatpush1.bf16.xpose.msra.mxu0 0
    %1581 = vmatprep.subr.bf16.mxu0 0
    %1582 = vmatpush1.bf16.xpose.msra.mxu0 0
    %1583 = vmatprep.subr.bf16.mxu0 0
    %1584 = vmatpush1.bf16.xpose.msra.mxu0 0
    %1585 = vmatprep.subr.bf16.mxu0 0
    %1586 = vmatpush1.bf16.xpose.msra.mxu0 0
    %1587 = vmatprep.mubr.bf16.mxu0 0
    %1588 = vmatmul.mubr.bf16.gmra.mrb[0].mxu0 %v1553
    %v1589 = vpop.f32.mrb[0].mxu0
    %v1590 = vadd.f32 %v1544, %v1589
    %v1591 = vpop.f32.mrb[0].mxu0
    %v1592 = vpop.f32.mrb[0].mxu0
    %v1593 = vadd.f32 %v1545, %v1592
    %v1594 = vpop.f32.mrb[0].mxu0
    %1595 = vdwg.mxu0
    %v1597 = vsel %vm91, %v1540, 0
    %1599 = vmatprep.subr.bf16.mxu0 0
    %1600 = vmatpush1.bf16.xpose.msra.mxu0 %v242
    %1601 = vmatprep.subr.bf16.mxu0 0
    %1602 = vmatpush1.bf16.xpose.msra.mxu0 0
    %1603 = vmatprep.subr.bf16.mxu0 0
    %1604 = vmatpush1.bf16.xpose.msra.mxu0 0
    %1605 = vmatprep.subr.bf16.mxu0 0
    %1606 = vmatpush1.bf16.xpose.msra.mxu0 0
    %1607 = vmatprep.subr.bf16.mxu0 0
    %1608 = vmatpush1.bf16.xpose.msra.mxu0 0
    %1609 = vmatprep.subr.bf16.mxu0 0
    %1610 = vmatpush1.bf16.xpose.msra.mxu0 0
    %1611 = vmatprep.subr.bf16.mxu0 0
    %1612 = vmatpush1.bf16.xpose.msra.mxu0 0
    %1613 = vmatprep.subr.bf16.mxu0 0
    %1614 = vmatpush1.bf16.xpose.msra.mxu0 0
    %1615 = vmatprep.subr.bf16.mxu0 0
    %1616 = vmatpush1.bf16.xpose.msra.mxu0 0
    %1617 = vmatprep.subr.bf16.mxu0 0
    %1618 = vmatpush1.bf16.xpose.msra.mxu0 0
    %1619 = vmatprep.subr.bf16.mxu0 0
    %1620 = vmatpush1.bf16.xpose.msra.mxu0 0
    %1621 = vmatprep.subr.bf16.mxu0 0
    %1622 = vmatpush1.bf16.xpose.msra.mxu0 0
    %1623 = vmatprep.subr.bf16.mxu0 0
    %1624 = vmatpush1.bf16.xpose.msra.mxu0 0
    %1625 = vmatprep.subr.bf16.mxu0 0
    %1626 = vmatpush1.bf16.xpose.msra.mxu0 0
    %1627 = vmatprep.subr.bf16.mxu0 0
    %1628 = vmatpush1.bf16.xpose.msra.mxu0 0
    %1629 = vmatprep.subr.bf16.mxu0 0
    %1630 = vmatpush1.bf16.xpose.msra.mxu0 0
    %1631 = vmatprep.mubr.bf16.mxu0 0
    %1632 = vmatmul.mubr.bf16.gmra.mrb[0].mxu0 %v1597
    %v1633 = vpop.f32.mrb[0].mxu0
    %v1634 = vadd.f32 %v1546, %v1633
    %v1635 = vpop.f32.mrb[0].mxu0
    %v1636 = vpop.f32.mrb[0].mxu0
    %v1637 = vadd.f32 %v1547, %v1636
    %v1638 = vpop.f32.mrb[0].mxu0
    %1639 = vdwg.mxu0
    %v1641 = vsel %vm91, %v1541, 0
    %1643 = vmatprep.subr.bf16.mxu0 0
    %1644 = vmatpush1.bf16.xpose.msra.mxu0 %v294
    %1645 = vmatprep.subr.bf16.mxu0 0
    %1646 = vmatpush1.bf16.xpose.msra.mxu0 0
    %1647 = vmatprep.subr.bf16.mxu0 0
    %1648 = vmatpush1.bf16.xpose.msra.mxu0 0
    %1649 = vmatprep.subr.bf16.mxu0 0
    %1650 = vmatpush1.bf16.xpose.msra.mxu0 0
    %1651 = vmatprep.subr.bf16.mxu0 0
    %1652 = vmatpush1.bf16.xpose.msra.mxu0 0
    %1653 = vmatprep.subr.bf16.mxu0 0
    %1654 = vmatpush1.bf16.xpose.msra.mxu0 0
    %1655 = vmatprep.subr.bf16.mxu0 0
    %1656 = vmatpush1.bf16.xpose.msra.mxu0 0
    %1657 = vmatprep.subr.bf16.mxu0 0
    %1658 = vmatpush1.bf16.xpose.msra.mxu0 0
    %1659 = vmatprep.subr.bf16.mxu0 0
    %1660 = vmatpush1.bf16.xpose.msra.mxu0 0
    %1661 = vmatprep.subr.bf16.mxu0 0
    %1662 = vmatpush1.bf16.xpose.msra.mxu0 0
    %1663 = vmatprep.subr.bf16.mxu0 0
    %1664 = vmatpush1.bf16.xpose.msra.mxu0 0
    %1665 = vmatprep.subr.bf16.mxu0 0
    %1666 = vmatpush1.bf16.xpose.msra.mxu0 0
    %1667 = vmatprep.subr.bf16.mxu0 0
    %1668 = vmatpush1.bf16.xpose.msra.mxu0 0
    %1669 = vmatprep.subr.bf16.mxu0 0
    %1670 = vmatpush1.bf16.xpose.msra.mxu0 0
    %1671 = vmatprep.subr.bf16.mxu0 0
    %1672 = vmatpush1.bf16.xpose.msra.mxu0 0
    %1673 = vmatprep.subr.bf16.mxu0 0
    %1674 = vmatpush1.bf16.xpose.msra.mxu0 0
    %1675 = vmatprep.mubr.bf16.mxu0 0
    %1676 = vmatmul.mubr.bf16.gmra.mrb[0].mxu0 %v1641
    %v1677 = vpop.f32.mrb[0].mxu0
    %v1678 = vadd.f32 %v1548, %v1677
    %v1679 = vpop.f32.mrb[0].mxu0
    %v1680 = vpop.f32.mrb[0].mxu0
    %v1681 = vadd.f32 %v1549, %v1680
    %v1682 = vpop.f32.mrb[0].mxu0
    %1683 = vdwg.mxu0
    %v1685 = vsel %vm91, %v1542, 0
    %1687 = vmatprep.subr.bf16.mxu0 0
    %1688 = vmatpush1.bf16.xpose.msra.mxu0 %v346
    %1689 = vmatprep.subr.bf16.mxu0 0
    %1690 = vmatpush1.bf16.xpose.msra.mxu0 0
    %1691 = vmatprep.subr.bf16.mxu0 0
    %1692 = vmatpush1.bf16.xpose.msra.mxu0 0
    %1693 = vmatprep.subr.bf16.mxu0 0
    %1694 = vmatpush1.bf16.xpose.msra.mxu0 0
    %1695 = vmatprep.subr.bf16.mxu0 0
    %1696 = vmatpush1.bf16.xpose.msra.mxu0 0
    %1697 = vmatprep.subr.bf16.mxu0 0
    %1698 = vmatpush1.bf16.xpose.msra.mxu0 0
    %1699 = vmatprep.subr.bf16.mxu0 0
    %1700 = vmatpush1.bf16.xpose.msra.mxu0 0
    %1701 = vmatprep.subr.bf16.mxu0 0
    %1702 = vmatpush1.bf16.xpose.msra.mxu0 0
    %1703 = vmatprep.subr.bf16.mxu0 0
    %1704 = vmatpush1.bf16.xpose.msra.mxu0 0
    %1705 = vmatprep.subr.bf16.mxu0 0
    %1706 = vmatpush1.bf16.xpose.msra.mxu0 0
    %1707 = vmatprep.subr.bf16.mxu0 0
    %1708 = vmatpush1.bf16.xpose.msra.mxu0 0
    %1709 = vmatprep.subr.bf16.mxu0 0
    %1710 = vmatpush1.bf16.xpose.msra.mxu0 0
    %1711 = vmatprep.subr.bf16.mxu0 0
    %1712 = vmatpush1.bf16.xpose.msra.mxu0 0
    %1713 = vmatprep.subr.bf16.mxu0 0
    %1714 = vmatpush1.bf16.xpose.msra.mxu0 0
    %1715 = vmatprep.subr.bf16.mxu0 0
    %1716 = vmatpush1.bf16.xpose.msra.mxu0 0
    %1717 = vmatprep.subr.bf16.mxu0 0
    %1718 = vmatpush1.bf16.xpose.msra.mxu0 0
    %1719 = vmatprep.mubr.bf16.mxu0 0
    %1720 = vmatmul.mubr.bf16.gmra.mrb[0].mxu0 %v1685
    %v1721 = vpop.f32.mrb[0].mxu0
    %v1722 = vadd.f32 %v1550, %v1721
    %v1723 = vpop.f32.mrb[0].mxu0
    %v1724 = vpop.f32.mrb[0].mxu0
    %v1725 = vadd.f32 %v1551, %v1724
    %v1726 = vpop.f32.mrb[0].mxu0
    %1727 = vdwg.mxu0
    %s1728 = scalar_lea.vmem [#allocation5], 32
    %1729 = vst.msk [vmem:[%s1728] sm:$0xff] %vm389, %v1590
    %1730 = vst.msk [vmem:[%s1728 + $0x8] sm:$0xff] %vm389, %v1593
    %1731 = vst.msk [vmem:[%s1728 + $0x40] sm:$0xff] %vm389, %v1634
    %1732 = vst.msk [vmem:[%s1728 + $0x48] sm:$0xff] %vm389, %v1637
    %1733 = vst.msk [vmem:[%s1728 + $0x80] sm:$0xff] %vm389, %v1678
    %1734 = vst.msk [vmem:[%s1728 + $0x88] sm:$0xff] %vm389, %v1681
    %1735 = vst.msk [vmem:[%s1728 + $0xc0] sm:$0xff] %vm389, %v1722
    %1736 = vst.msk [vmem:[%s1728 + $0xc8] sm:$0xff] %vm389, %v1725
    %v1737 = vsel %vm389, %v1590, -inf
    %v1738 = vsel %vm389, %v1593, -inf
    %v1739 = vmax.f32 %v1737, %v1738
    %v1740 = vrot.slane %v1739, 4
    %v1741 = vmax.f32 %v1739, %v1740
    %v1742 = vrot.slane %v1741, 2
    %v1743 = vmax.f32 %v1741, %v1742
    %v1744 = vrot.slane %v1743, 1
    %v1745 = vmax.f32 %v1743, %v1744
    %v1746 = vsel %vm389, %v1634, -inf
    %v1747 = vsel %vm389, %v1637, -inf
    %v1748 = vmax.f32 %v1746, %v1747
    %v1749 = vrot.slane %v1748, 4
    %v1750 = vmax.f32 %v1748, %v1749
    %v1751 = vrot.slane %v1750, 2
    %v1752 = vmax.f32 %v1750, %v1751
    %v1753 = vrot.slane %v1752, 1
    %v1754 = vmax.f32 %v1752, %v1753
    %v1755 = vsel %vm389, %v1678, -inf
    %v1756 = vsel %vm389, %v1681, -inf
    %v1757 = vmax.f32 %v1755, %v1756
    %v1758 = vrot.slane %v1757, 4
    %v1759 = vmax.f32 %v1757, %v1758
    %v1760 = vrot.slane %v1759, 2
    %v1761 = vmax.f32 %v1759, %v1760
    %v1762 = vrot.slane %v1761, 1
    %v1763 = vmax.f32 %v1761, %v1762
    %v1764 = vsel %vm389, %v1722, -inf
    %v1765 = vsel %vm389, %v1725, -inf
    %v1766 = vmax.f32 %v1764, %v1765
    %v1767 = vrot.slane %v1766, 4
    %v1768 = vmax.f32 %v1766, %v1767
    %v1769 = vrot.slane %v1768, 2
    %v1770 = vmax.f32 %v1768, %v1769
    %v1771 = vrot.slane %v1770, 1
    %v1772 = vmax.f32 %v1770, %v1771
    %v1773 = vsub.f32 %v1590, %v1745
    %v1774 = vsub.f32 %v1593, %v1745
    %v1775 = vsub.f32 %v1634, %v1754
    %v1776 = vsub.f32 %v1637, %v1754
    %v1777 = vsub.f32 %v1678, %v1763
    %v1778 = vsub.f32 %v1681, %v1763
    %v1779 = vsub.f32 %v1722, %v1772
    %v1780 = vsub.f32 %v1725, %v1772
    %v1781 = vmul.f32 %v1773, 1.442695
    %v1782 = vpow.pop %v1781
    %v1783 = vmul.f32 %v1774, 1.442695
    %v1784 = vpow.pop %v1783
    %v1785 = vmul.f32 %v1775, 1.442695
    %v1786 = vpow.pop %v1785
    %v1787 = vmul.f32 %v1776, 1.442695
    %v1788 = vpow.pop %v1787
    %v1789 = vmul.f32 %v1777, 1.442695
    %v1790 = vpow.pop %v1789
    %v1791 = vmul.f32 %v1778, 1.442695
    %v1792 = vpow.pop %v1791
    %v1793 = vmul.f32 %v1779, 1.442695
    %v1794 = vpow.pop %v1793
    %v1795 = vmul.f32 %v1780, 1.442695
    %v1796 = vpow.pop %v1795
    %v1797 = vsel %vm389, %v1782, 0.0
    %v1798 = vsel %vm389, %v1784, 0.0
    %v1799 = vadd.f32 %v1797, %v1798
    %v1800 = vrot.slane %v1799, 4
    %v1801 = vadd.f32 %v1799, %v1800
    %v1802 = vrot.slane %v1801, 2
    %v1803 = vadd.f32 %v1801, %v1802
    %v1804 = vrot.slane %v1803, 1
    %v1805 = vadd.f32 %v1803, %v1804
    %v1806 = vsel %vm389, %v1786, 0.0
    %v1807 = vsel %vm389, %v1788, 0.0
    %v1808 = vadd.f32 %v1806, %v1807
    %v1809 = vrot.slane %v1808, 4
    %v1810 = vadd.f32 %v1808, %v1809
    %v1811 = vrot.slane %v1810, 2
    %v1812 = vadd.f32 %v1810, %v1811
    %v1813 = vrot.slane %v1812, 1
    %v1814 = vadd.f32 %v1812, %v1813
    %v1815 = vsel %vm389, %v1790, 0.0
    %v1816 = vsel %vm389, %v1792, 0.0
    %v1817 = vadd.f32 %v1815, %v1816
    %v1818 = vrot.slane %v1817, 4
    %v1819 = vadd.f32 %v1817, %v1818
    %v1820 = vrot.slane %v1819, 2
    %v1821 = vadd.f32 %v1819, %v1820
    %v1822 = vrot.slane %v1821, 1
    %v1823 = vadd.f32 %v1821, %v1822
    %v1824 = vsel %vm389, %v1794, 0.0
    %v1825 = vsel %vm389, %v1796, 0.0
    %v1826 = vadd.f32 %v1824, %v1825
    %v1827 = vrot.slane %v1826, 4
    %v1828 = vadd.f32 %v1826, %v1827
    %v1829 = vrot.slane %v1828, 2
    %v1830 = vadd.f32 %v1828, %v1829
    %v1831 = vrot.slane %v1830, 1
    %v1832 = vadd.f32 %v1830, %v1831
    %v1833 = vrcp.pop %v1805
    %v1834 = vrcp.pop %v1814
    %v1835 = vrcp.pop %v1823
    %v1836 = vrcp.pop %v1832
    %v1837 = vmul.f32 %v1782, %v1833
    %v1838 = vmul.f32 %v1784, %v1833
    %v1839 = vmul.f32 %v1786, %v1834
    %v1840 = vmul.f32 %v1788, %v1834
    %v1841 = vmul.f32 %v1790, %v1835
    %v1842 = vmul.f32 %v1792, %v1835
    %v1843 = vmul.f32 %v1794, %v1836
    %v1844 = vmul.f32 %v1796, %v1836
    %v1845 = vpack.c.bf16 %v1838, %v1837
    %v1846 = vpack.c.bf16 %v1840, %v1839
    %v1847 = vpack.c.bf16 %v1842, %v1841
    %v1848 = vpack.c.bf16 %v1844, %v1843
    %s1849 = scalar_lea.vmem %s5, 32
    %v1850 = vld [vmem:[%s1849] sm:$0xf]
    %v1851 = vld [vmem:[%s1849 + $0x4] sm:$0xf]
    %v1852 = vld [vmem:[%s1849 + $0x8] sm:$0xf]
    %v1853 = vld [vmem:[%s1849 + $0xc] sm:$0xf]
    %v1858 = vunpack.c.l.b16 %v1850
    %v1859 = vunpack.c.l.b16 %v1851
    %v1860 = vunpack.c.l.b16 %v1852
    %v1861 = vunpack.c.l.b16 %v1853
    %v1862 = vpack.c.b16 %v1859, %v1858
    %v1863 = vpack.c.b16 %v1861, %v1860
    %1866 = vmatprep.subr.bf16.mxu0 0
    %1867 = vmatpush1.bf16.msra.mxu0 %v1862
    %1868 = vmatprep.subr.bf16.mxu0 0
    %1869 = vmatpush1.bf16.msra.mxu0 %v1863
    %1870 = vmatprep.subr.bf16.mxu0 0
    %1871 = vmatpush1.bf16.msra.mxu0 0
    %1872 = vmatprep.subr.bf16.mxu0 0
    %1873 = vmatpush1.bf16.msra.mxu0 0
    %1874 = vmatprep.subr.bf16.mxu0 0
    %1875 = vmatpush1.bf16.msra.mxu0 0
    %1876 = vmatprep.subr.bf16.mxu0 0
    %1877 = vmatpush1.bf16.msra.mxu0 0
    %1878 = vmatprep.subr.bf16.mxu0 0
    %1879 = vmatpush1.bf16.msra.mxu0 0
    %1880 = vmatprep.subr.bf16.mxu0 0
    %1881 = vmatpush1.bf16.msra.mxu0 0
    %1882 = vmatprep.subr.bf16.mxu0 0
    %1883 = vmatpush1.bf16.msra.mxu0 0
    %1884 = vmatprep.subr.bf16.mxu0 0
    %1885 = vmatpush1.bf16.msra.mxu0 0
    %1886 = vmatprep.subr.bf16.mxu0 0
    %1887 = vmatpush1.bf16.msra.mxu0 0
    %1888 = vmatprep.subr.bf16.mxu0 0
    %1889 = vmatpush1.bf16.msra.mxu0 0
    %1890 = vmatprep.subr.bf16.mxu0 0
    %1891 = vmatpush1.bf16.msra.mxu0 0
    %1892 = vmatprep.subr.bf16.mxu0 0
    %1893 = vmatpush1.bf16.msra.mxu0 0
    %1894 = vmatprep.subr.bf16.mxu0 0
    %1895 = vmatpush1.bf16.msra.mxu0 0
    %1896 = vmatprep.subr.bf16.mxu0 0
    %1897 = vmatpush1.bf16.msra.mxu0 0
    %1898 = vmatprep.mubr.bf16.mxu0 0
    %1899 = vmatmul.mubr.bf16.gmra.mrb[0].mxu0 %v547
    %v1900 = vpop.f32.mrb[0].mxu0
    %v1901 = vadd.f32 0.0, %v1900
    %v1902 = vpop.f32.mrb[0].mxu0
    %v1903 = vpop.f32.mrb[0].mxu0
    %v1904 = vadd.f32 0.0, %v1903
    %v1905 = vpop.f32.mrb[0].mxu0
    %1906 = vmatprep.mubr.bf16.mxu0 0
    %1907 = vmatmul.mubr.bf16.gmra.mrb[0].mxu0 %v550
    %v1908 = vpop.f32.mrb[0].mxu0
    %v1909 = vadd.f32 0.0, %v1908
    %v1910 = vpop.f32.mrb[0].mxu0
    %v1911 = vpop.f32.mrb[0].mxu0
    %v1912 = vadd.f32 0.0, %v1911
    %v1913 = vpop.f32.mrb[0].mxu0
    %1914 = vmatprep.mubr.bf16.mxu0 0
    %1915 = vmatmul.mubr.bf16.gmra.mrb[0].mxu0 %v553
    %v1916 = vpop.f32.mrb[0].mxu0
    %v1917 = vadd.f32 0.0, %v1916
    %v1918 = vpop.f32.mrb[0].mxu0
    %v1919 = vpop.f32.mrb[0].mxu0
    %v1920 = vadd.f32 0.0, %v1919
    %v1921 = vpop.f32.mrb[0].mxu0
    %1922 = vmatprep.mubr.bf16.mxu0 0
    %1923 = vmatmul.mubr.bf16.gmra.mrb[0].mxu0 %v556
    %v1924 = vpop.f32.mrb[0].mxu0
    %v1925 = vadd.f32 0.0, %v1924
    %v1926 = vpop.f32.mrb[0].mxu0
    %v1927 = vpop.f32.mrb[0].mxu0
    %v1928 = vadd.f32 0.0, %v1927
    %v1929 = vpop.f32.mrb[0].mxu0
    %1930 = vdwg.mxu0
    %v1931 = vpack.c.bf16 %v1904, %v1901
    %v1932 = vpack.c.bf16 %v1912, %v1909
    %v1933 = vpack.c.bf16 %v1920, %v1917
    %v1934 = vpack.c.bf16 %v1928, %v1925
    %v1936 = vsel %vm389, %v1845, 0
    %1938 = vmatprep.subr.bf16.mxu0 0
    %1939 = vmatpush1.bf16.msra.mxu0 %v1931
    %1940 = vmatprep.subr.bf16.mxu0 0
    %1941 = vmatpush1.bf16.msra.mxu0 0
    %1942 = vmatprep.subr.bf16.mxu0 0
    %1943 = vmatpush1.bf16.msra.mxu0 0
    %1944 = vmatprep.subr.bf16.mxu0 0
    %1945 = vmatpush1.bf16.msra.mxu0 0
    %1946 = vmatprep.subr.bf16.mxu0 0
    %1947 = vmatpush1.bf16.msra.mxu0 0
    %1948 = vmatprep.subr.bf16.mxu0 0
    %1949 = vmatpush1.bf16.msra.mxu0 0
    %1950 = vmatprep.subr.bf16.mxu0 0
    %1951 = vmatpush1.bf16.msra.mxu0 0
    %1952 = vmatprep.subr.bf16.mxu0 0
    %1953 = vmatpush1.bf16.msra.mxu0 0
    %1954 = vmatprep.subr.bf16.mxu0 0
    %1955 = vmatpush1.bf16.msra.mxu0 0
    %1956 = vmatprep.subr.bf16.mxu0 0
    %1957 = vmatpush1.bf16.msra.mxu0 0
    %1958 = vmatprep.subr.bf16.mxu0 0
    %1959 = vmatpush1.bf16.msra.mxu0 0
    %1960 = vmatprep.subr.bf16.mxu0 0
    %1961 = vmatpush1.bf16.msra.mxu0 0
    %1962 = vmatprep.subr.bf16.mxu0 0
    %1963 = vmatpush1.bf16.msra.mxu0 0
    %1964 = vmatprep.subr.bf16.mxu0 0
    %1965 = vmatpush1.bf16.msra.mxu0 0
    %1966 = vmatprep.subr.bf16.mxu0 0
    %1967 = vmatpush1.bf16.msra.mxu0 0
    %1968 = vmatprep.subr.bf16.mxu0 0
    %1969 = vmatpush1.bf16.msra.mxu0 0
    %1970 = vmatprep.mubr.bf16.mxu0 0
    %1971 = vmatmul.mubr.bf16.gmra.mrb[0].mxu0 %v1936
    %v1972 = vpop.f32.mrb[0].mxu0
    %v1973 = vadd.f32 0.0, %v1972
    %v1974 = vpop.f32.mrb[0].mxu0
    %v1975 = vpop.f32.mrb[0].mxu0
    %v1976 = vadd.f32 0.0, %v1975
    %v1977 = vpop.f32.mrb[0].mxu0
    %1978 = vdwg.mxu0
    %v1980 = vsel %vm389, %v1846, 0
    %1982 = vmatprep.subr.bf16.mxu0 0
    %1983 = vmatpush1.bf16.msra.mxu0 %v1932
    %1984 = vmatprep.subr.bf16.mxu0 0
    %1985 = vmatpush1.bf16.msra.mxu0 0
    %1986 = vmatprep.subr.bf16.mxu0 0
    %1987 = vmatpush1.bf16.msra.mxu0 0
    %1988 = vmatprep.subr.bf16.mxu0 0
    %1989 = vmatpush1.bf16.msra.mxu0 0
    %1990 = vmatprep.subr.bf16.mxu0 0
    %1991 = vmatpush1.bf16.msra.mxu0 0
    %1992 = vmatprep.subr.bf16.mxu0 0
    %1993 = vmatpush1.bf16.msra.mxu0 0
    %1994 = vmatprep.subr.bf16.mxu0 0
    %1995 = vmatpush1.bf16.msra.mxu0 0
    %1996 = vmatprep.subr.bf16.mxu0 0
    %1997 = vmatpush1.bf16.msra.mxu0 0
    %1998 = vmatprep.subr.bf16.mxu0 0
    %1999 = vmatpush1.bf16.msra.mxu0 0
    %2000 = vmatprep.subr.bf16.mxu0 0
    %2001 = vmatpush1.bf16.msra.mxu0 0
    %2002 = vmatprep.subr.bf16.mxu0 0
    %2003 = vmatpush1.bf16.msra.mxu0 0
    %2004 = vmatprep.subr.bf16.mxu0 0
    %2005 = vmatpush1.bf16.msra.mxu0 0
    %2006 = vmatprep.subr.bf16.mxu0 0
    %2007 = vmatpush1.bf16.msra.mxu0 0
    %2008 = vmatprep.subr.bf16.mxu0 0
    %2009 = vmatpush1.bf16.msra.mxu0 0
    %2010 = vmatprep.subr.bf16.mxu0 0
    %2011 = vmatpush1.bf16.msra.mxu0 0
    %2012 = vmatprep.subr.bf16.mxu0 0
    %2013 = vmatpush1.bf16.msra.mxu0 0
    %2014 = vmatprep.mubr.bf16.mxu0 0
    %2015 = vmatmul.mubr.bf16.gmra.mrb[0].mxu0 %v1980
    %v2016 = vpop.f32.mrb[0].mxu0
    %v2017 = vadd.f32 0.0, %v2016
    %v2018 = vpop.f32.mrb[0].mxu0
    %v2019 = vpop.f32.mrb[0].mxu0
    %v2020 = vadd.f32 0.0, %v2019
    %v2021 = vpop.f32.mrb[0].mxu0
    %2022 = vdwg.mxu0
    %v2024 = vsel %vm389, %v1847, 0
    %2026 = vmatprep.subr.bf16.mxu0 0
    %2027 = vmatpush1.bf16.msra.mxu0 %v1933
    %2028 = vmatprep.subr.bf16.mxu0 0
    %2029 = vmatpush1.bf16.msra.mxu0 0
    %2030 = vmatprep.subr.bf16.mxu0 0
    %2031 = vmatpush1.bf16.msra.mxu0 0
    %2032 = vmatprep.subr.bf16.mxu0 0
    %2033 = vmatpush1.bf16.msra.mxu0 0
    %2034 = vmatprep.subr.bf16.mxu0 0
    %2035 = vmatpush1.bf16.msra.mxu0 0
    %2036 = vmatprep.subr.bf16.mxu0 0
    %2037 = vmatpush1.bf16.msra.mxu0 0
    %2038 = vmatprep.subr.bf16.mxu0 0
    %2039 = vmatpush1.bf16.msra.mxu0 0
    %2040 = vmatprep.subr.bf16.mxu0 0
    %2041 = vmatpush1.bf16.msra.mxu0 0
    %2042 = vmatprep.subr.bf16.mxu0 0
    %2043 = vmatpush1.bf16.msra.mxu0 0
    %2044 = vmatprep.subr.bf16.mxu0 0
    %2045 = vmatpush1.bf16.msra.mxu0 0
    %2046 = vmatprep.subr.bf16.mxu0 0
    %2047 = vmatpush1.bf16.msra.mxu0 0
    %2048 = vmatprep.subr.bf16.mxu0 0
    %2049 = vmatpush1.bf16.msra.mxu0 0
    %2050 = vmatprep.subr.bf16.mxu0 0
    %2051 = vmatpush1.bf16.msra.mxu0 0
    %2052 = vmatprep.subr.bf16.mxu0 0
    %2053 = vmatpush1.bf16.msra.mxu0 0
    %2054 = vmatprep.subr.bf16.mxu0 0
    %2055 = vmatpush1.bf16.msra.mxu0 0
    %2056 = vmatprep.subr.bf16.mxu0 0
    %2057 = vmatpush1.bf16.msra.mxu0 0
    %2058 = vmatprep.mubr.bf16.mxu0 0
    %2059 = vmatmul.mubr.bf16.gmra.mrb[0].mxu0 %v2024
    %v2060 = vpop.f32.mrb[0].mxu0
    %v2061 = vadd.f32 0.0, %v2060
    %v2062 = vpop.f32.mrb[0].mxu0
    %v2063 = vpop.f32.mrb[0].mxu0
    %v2064 = vadd.f32 0.0, %v2063
    %v2065 = vpop.f32.mrb[0].mxu0
    %2066 = vdwg.mxu0
    %v2068 = vsel %vm389, %v1848, 0
    %2070 = vmatprep.subr.bf16.mxu0 0
    %2071 = vmatpush1.bf16.msra.mxu0 %v1934
    %2072 = vmatprep.subr.bf16.mxu0 0
    %2073 = vmatpush1.bf16.msra.mxu0 0
    %2074 = vmatprep.subr.bf16.mxu0 0
    %2075 = vmatpush1.bf16.msra.mxu0 0
    %2076 = vmatprep.subr.bf16.mxu0 0
    %2077 = vmatpush1.bf16.msra.mxu0 0
    %2078 = vmatprep.subr.bf16.mxu0 0
    %2079 = vmatpush1.bf16.msra.mxu0 0
    %2080 = vmatprep.subr.bf16.mxu0 0
    %2081 = vmatpush1.bf16.msra.mxu0 0
    %2082 = vmatprep.subr.bf16.mxu0 0
    %2083 = vmatpush1.bf16.msra.mxu0 0
    %2084 = vmatprep.subr.bf16.mxu0 0
    %2085 = vmatpush1.bf16.msra.mxu0 0
    %2086 = vmatprep.subr.bf16.mxu0 0
    %2087 = vmatpush1.bf16.msra.mxu0 0
    %2088 = vmatprep.subr.bf16.mxu0 0
    %2089 = vmatpush1.bf16.msra.mxu0 0
    %2090 = vmatprep.subr.bf16.mxu0 0
    %2091 = vmatpush1.bf16.msra.mxu0 0
    %2092 = vmatprep.subr.bf16.mxu0 0
    %2093 = vmatpush1.bf16.msra.mxu0 0
    %2094 = vmatprep.subr.bf16.mxu0 0
    %2095 = vmatpush1.bf16.msra.mxu0 0
    %2096 = vmatprep.subr.bf16.mxu0 0
    %2097 = vmatpush1.bf16.msra.mxu0 0
    %2098 = vmatprep.subr.bf16.mxu0 0
    %2099 = vmatpush1.bf16.msra.mxu0 0
    %2100 = vmatprep.subr.bf16.mxu0 0
    %2101 = vmatpush1.bf16.msra.mxu0 0
    %2102 = vmatprep.mubr.bf16.mxu0 0
    %2103 = vmatmul.mubr.bf16.gmra.mrb[0].mxu0 %v2068
    %v2104 = vpop.f32.mrb[0].mxu0
    %v2105 = vadd.f32 0.0, %v2104
    %v2106 = vpop.f32.mrb[0].mxu0
    %v2107 = vpop.f32.mrb[0].mxu0
    %v2108 = vadd.f32 0.0, %v2107
    %v2109 = vpop.f32.mrb[0].mxu0
    %2110 = vdwg.mxu0
    %v2111 = vadd.f32 %v1319, %v1973
    %v2112 = vadd.f32 %v1322, %v1976
    %v2113 = vadd.f32 %v1363, %v2017
    %v2114 = vadd.f32 %v1366, %v2020
    %v2115 = vadd.f32 %v1407, %v2061
    %v2116 = vadd.f32 %v1410, %v2064
    %v2117 = vadd.f32 %v1451, %v2105
    %v2118 = vadd.f32 %v1454, %v2108
    %s2119 = scalar_lea.vmem %s4, 48
    %v2120 = vld [vmem:[%s2119] sm:$0xf]
    %v2121 = vld [vmem:[%s2119 + $0x4] sm:$0xf]
    %v2122 = vld [vmem:[%s2119 + $0x8] sm:$0xf]
    %v2123 = vld [vmem:[%s2119 + $0xc] sm:$0xf]
    %v2128 = vunpack.c.l.b16 %v2120
    %v2129 = vunpack.c.l.b16 %v2121
    %v2130 = vunpack.c.l.b16 %v2122
    %v2131 = vunpack.c.l.b16 %v2123
    %v2132 = vpack.c.b16 %v2129, %v2128
    %v2133 = vpack.c.b16 %v2131, %v2130
    %2136 = vmatprep.subr.bf16.mxu0 0
    %2137 = vmatpush1.bf16.msra.mxu0 %v2132
    %2138 = vmatprep.subr.bf16.mxu0 0
    %2139 = vmatpush1.bf16.msra.mxu0 %v2133
    %2140 = vmatprep.subr.bf16.mxu0 0
    %2141 = vmatpush1.bf16.msra.mxu0 0
    %2142 = vmatprep.subr.bf16.mxu0 0
    %2143 = vmatpush1.bf16.msra.mxu0 0
    %2144 = vmatprep.subr.bf16.mxu0 0
    %2145 = vmatpush1.bf16.msra.mxu0 0
    %2146 = vmatprep.subr.bf16.mxu0 0
    %2147 = vmatpush1.bf16.msra.mxu0 0
    %2148 = vmatprep.subr.bf16.mxu0 0
    %2149 = vmatpush1.bf16.msra.mxu0 0
    %2150 = vmatprep.subr.bf16.mxu0 0
    %2151 = vmatpush1.bf16.msra.mxu0 0
    %2152 = vmatprep.subr.bf16.mxu0 0
    %2153 = vmatpush1.bf16.msra.mxu0 0
    %2154 = vmatprep.subr.bf16.mxu0 0
    %2155 = vmatpush1.bf16.msra.mxu0 0
    %2156 = vmatprep.subr.bf16.mxu0 0
    %2157 = vmatpush1.bf16.msra.mxu0 0
    %2158 = vmatprep.subr.bf16.mxu0 0
    %2159 = vmatpush1.bf16.msra.mxu0 0
    %2160 = vmatprep.subr.bf16.mxu0 0
    %2161 = vmatpush1.bf16.msra.mxu0 0
    %2162 = vmatprep.subr.bf16.mxu0 0
    %2163 = vmatpush1.bf16.msra.mxu0 0
    %2164 = vmatprep.subr.bf16.mxu0 0
    %2165 = vmatpush1.bf16.msra.mxu0 0
    %2166 = vmatprep.subr.bf16.mxu0 0
    %2167 = vmatpush1.bf16.msra.mxu0 0
    %2168 = vmatprep.mubr.bf16.mxu0 0
    %2169 = vmatmul.mubr.bf16.gmra.mrb[0].mxu0 %v93
    %v2170 = vpop.f32.mrb[0].mxu0
    %v2171 = vadd.f32 0.0, %v2170
    %v2172 = vpop.f32.mrb[0].mxu0
    %v2173 = vpop.f32.mrb[0].mxu0
    %v2174 = vadd.f32 0.0, %v2173
    %v2175 = vpop.f32.mrb[0].mxu0
    %2176 = vmatprep.mubr.bf16.mxu0 0
    %2177 = vmatmul.mubr.bf16.gmra.mrb[0].mxu0 %v96
    %v2178 = vpop.f32.mrb[0].mxu0
    %v2179 = vadd.f32 0.0, %v2178
    %v2180 = vpop.f32.mrb[0].mxu0
    %v2181 = vpop.f32.mrb[0].mxu0
    %v2182 = vadd.f32 0.0, %v2181
    %v2183 = vpop.f32.mrb[0].mxu0
    %2184 = vmatprep.mubr.bf16.mxu0 0
    %2185 = vmatmul.mubr.bf16.gmra.mrb[0].mxu0 %v99
    %v2186 = vpop.f32.mrb[0].mxu0
    %v2187 = vadd.f32 0.0, %v2186
    %v2188 = vpop.f32.mrb[0].mxu0
    %v2189 = vpop.f32.mrb[0].mxu0
    %v2190 = vadd.f32 0.0, %v2189
    %v2191 = vpop.f32.mrb[0].mxu0
    %2192 = vmatprep.mubr.bf16.mxu0 0
    %2193 = vmatmul.mubr.bf16.gmra.mrb[0].mxu0 %v102
    %v2194 = vpop.f32.mrb[0].mxu0
    %v2195 = vadd.f32 0.0, %v2194
    %v2196 = vpop.f32.mrb[0].mxu0
    %v2197 = vpop.f32.mrb[0].mxu0
    %v2198 = vadd.f32 0.0, %v2197
    %v2199 = vpop.f32.mrb[0].mxu0
    %2200 = vdwg.mxu0
    %v2201 = vpack.c.bf16 %v2174, %v2171
    %v2202 = vpack.c.bf16 %v2182, %v2179
    %v2203 = vpack.c.bf16 %v2190, %v2187
    %v2204 = vpack.c.bf16 %v2198, %v2195
    %s2205 = scalar_lea.vmem [#allocation2], 48
    %v2206 = vld [vmem:[%s2205] sm:$0xff]
    %v2207 = vld [vmem:[%s2205 + $0x8] sm:$0xff]
    %v2208 = vld [vmem:[%s2205 + $0x40] sm:$0xff]
    %v2209 = vld [vmem:[%s2205 + $0x48] sm:$0xff]
    %v2210 = vld [vmem:[%s2205 + $0x80] sm:$0xff]
    %v2211 = vld [vmem:[%s2205 + $0x88] sm:$0xff]
    %v2212 = vld [vmem:[%s2205 + $0xc0] sm:$0xff]
    %v2213 = vld [vmem:[%s2205 + $0xc8] sm:$0xff]
    %v2215 = vsel %vm91, %v2201, 0
    %2217 = vmatprep.subr.bf16.mxu0 0
    %2218 = vmatpush1.bf16.xpose.msra.mxu0 %v190
    %2219 = vmatprep.subr.bf16.mxu0 0
    %2220 = vmatpush1.bf16.xpose.msra.mxu0 0
    %2221 = vmatprep.subr.bf16.mxu0 0
    %2222 = vmatpush1.bf16.xpose.msra.mxu0 0
    %2223 = vmatprep.subr.bf16.mxu0 0
    %2224 = vmatpush1.bf16.xpose.msra.mxu0 0
    %2225 = vmatprep.subr.bf16.mxu0 0
    %2226 = vmatpush1.bf16.xpose.msra.mxu0 0
    %2227 = vmatprep.subr.bf16.mxu0 0
    %2228 = vmatpush1.bf16.xpose.msra.mxu0 0
    %2229 = vmatprep.subr.bf16.mxu0 0
    %2230 = vmatpush1.bf16.xpose.msra.mxu0 0
    %2231 = vmatprep.subr.bf16.mxu0 0
    %2232 = vmatpush1.bf16.xpose.msra.mxu0 0
    %2233 = vmatprep.subr.bf16.mxu0 0
    %2234 = vmatpush1.bf16.xpose.msra.mxu0 0
    %2235 = vmatprep.subr.bf16.mxu0 0
    %2236 = vmatpush1.bf16.xpose.msra.mxu0 0
    %2237 = vmatprep.subr.bf16.mxu0 0
    %2238 = vmatpush1.bf16.xpose.msra.mxu0 0
    %2239 = vmatprep.subr.bf16.mxu0 0
    %2240 = vmatpush1.bf16.xpose.msra.mxu0 0
    %2241 = vmatprep.subr.bf16.mxu0 0
    %2242 = vmatpush1.bf16.xpose.msra.mxu0 0
    %2243 = vmatprep.subr.bf16.mxu0 0
    %2244 = vmatpush1.bf16.xpose.msra.mxu0 0
    %2245 = vmatprep.subr.bf16.mxu0 0
    %2246 = vmatpush1.bf16.xpose.msra.mxu0 0
    %2247 = vmatprep.subr.bf16.mxu0 0
    %2248 = vmatpush1.bf16.xpose.msra.mxu0 0
    %2249 = vmatprep.mubr.bf16.mxu0 0
    %2250 = vmatmul.mubr.bf16.gmra.mrb[0].mxu0 %v2215
    %v2251 = vpop.f32.mrb[0].mxu0
    %v2252 = vadd.f32 %v2206, %v2251
    %v2253 = vpop.f32.mrb[0].mxu0
    %v2254 = vpop.f32.mrb[0].mxu0
    %v2255 = vadd.f32 %v2207, %v2254
    %v2256 = vpop.f32.mrb[0].mxu0
    %2257 = vdwg.mxu0
    %v2259 = vsel %vm91, %v2202, 0
    %2261 = vmatprep.subr.bf16.mxu0 0
    %2262 = vmatpush1.bf16.xpose.msra.mxu0 %v242
    %2263 = vmatprep.subr.bf16.mxu0 0
    %2264 = vmatpush1.bf16.xpose.msra.mxu0 0
    %2265 = vmatprep.subr.bf16.mxu0 0
    %2266 = vmatpush1.bf16.xpose.msra.mxu0 0
    %2267 = vmatprep.subr.bf16.mxu0 0
    %2268 = vmatpush1.bf16.xpose.msra.mxu0 0
    %2269 = vmatprep.subr.bf16.mxu0 0
    %2270 = vmatpush1.bf16.xpose.msra.mxu0 0
    %2271 = vmatprep.subr.bf16.mxu0 0
    %2272 = vmatpush1.bf16.xpose.msra.mxu0 0
    %2273 = vmatprep.subr.bf16.mxu0 0
    %2274 = vmatpush1.bf16.xpose.msra.mxu0 0
    %2275 = vmatprep.subr.bf16.mxu0 0
    %2276 = vmatpush1.bf16.xpose.msra.mxu0 0
    %2277 = vmatprep.subr.bf16.mxu0 0
    %2278 = vmatpush1.bf16.xpose.msra.mxu0 0
    %2279 = vmatprep.subr.bf16.mxu0 0
    %2280 = vmatpush1.bf16.xpose.msra.mxu0 0
    %2281 = vmatprep.subr.bf16.mxu0 0
    %2282 = vmatpush1.bf16.xpose.msra.mxu0 0
    %2283 = vmatprep.subr.bf16.mxu0 0
    %2284 = vmatpush1.bf16.xpose.msra.mxu0 0
    %2285 = vmatprep.subr.bf16.mxu0 0
    %2286 = vmatpush1.bf16.xpose.msra.mxu0 0
    %2287 = vmatprep.subr.bf16.mxu0 0
    %2288 = vmatpush1.bf16.xpose.msra.mxu0 0
    %2289 = vmatprep.subr.bf16.mxu0 0
    %2290 = vmatpush1.bf16.xpose.msra.mxu0 0
    %2291 = vmatprep.subr.bf16.mxu0 0
    %2292 = vmatpush1.bf16.xpose.msra.mxu0 0
    %2293 = vmatprep.mubr.bf16.mxu0 0
    %2294 = vmatmul.mubr.bf16.gmra.mrb[0].mxu0 %v2259
    %v2295 = vpop.f32.mrb[0].mxu0
    %v2296 = vadd.f32 %v2208, %v2295
    %v2297 = vpop.f32.mrb[0].mxu0
    %v2298 = vpop.f32.mrb[0].mxu0
    %v2299 = vadd.f32 %v2209, %v2298
    %v2300 = vpop.f32.mrb[0].mxu0
    %2301 = vdwg.mxu0
    %v2303 = vsel %vm91, %v2203, 0
    %2305 = vmatprep.subr.bf16.mxu0 0
    %2306 = vmatpush1.bf16.xpose.msra.mxu0 %v294
    %2307 = vmatprep.subr.bf16.mxu0 0
    %2308 = vmatpush1.bf16.xpose.msra.mxu0 0
    %2309 = vmatprep.subr.bf16.mxu0 0
    %2310 = vmatpush1.bf16.xpose.msra.mxu0 0
    %2311 = vmatprep.subr.bf16.mxu0 0
    %2312 = vmatpush1.bf16.xpose.msra.mxu0 0
    %2313 = vmatprep.subr.bf16.mxu0 0
    %2314 = vmatpush1.bf16.xpose.msra.mxu0 0
    %2315 = vmatprep.subr.bf16.mxu0 0
    %2316 = vmatpush1.bf16.xpose.msra.mxu0 0
    %2317 = vmatprep.subr.bf16.mxu0 0
    %2318 = vmatpush1.bf16.xpose.msra.mxu0 0
    %2319 = vmatprep.subr.bf16.mxu0 0
    %2320 = vmatpush1.bf16.xpose.msra.mxu0 0
    %2321 = vmatprep.subr.bf16.mxu0 0
    %2322 = vmatpush1.bf16.xpose.msra.mxu0 0
    %2323 = vmatprep.subr.bf16.mxu0 0
    %2324 = vmatpush1.bf16.xpose.msra.mxu0 0
    %2325 = vmatprep.subr.bf16.mxu0 0
    %2326 = vmatpush1.bf16.xpose.msra.mxu0 0
    %2327 = vmatprep.subr.bf16.mxu0 0
    %2328 = vmatpush1.bf16.xpose.msra.mxu0 0
    %2329 = vmatprep.subr.bf16.mxu0 0
    %2330 = vmatpush1.bf16.xpose.msra.mxu0 0
    %2331 = vmatprep.subr.bf16.mxu0 0
    %2332 = vmatpush1.bf16.xpose.msra.mxu0 0
    %2333 = vmatprep.subr.bf16.mxu0 0
    %2334 = vmatpush1.bf16.xpose.msra.mxu0 0
    %2335 = vmatprep.subr.bf16.mxu0 0
    %2336 = vmatpush1.bf16.xpose.msra.mxu0 0
    %2337 = vmatprep.mubr.bf16.mxu0 0
    %2338 = vmatmul.mubr.bf16.gmra.mrb[0].mxu0 %v2303
    %v2339 = vpop.f32.mrb[0].mxu0
    %v2340 = vadd.f32 %v2210, %v2339
    %v2341 = vpop.f32.mrb[0].mxu0
    %v2342 = vpop.f32.mrb[0].mxu0
    %v2343 = vadd.f32 %v2211, %v2342
    %v2344 = vpop.f32.mrb[0].mxu0
    %2345 = vdwg.mxu0
    %v2347 = vsel %vm91, %v2204, 0
    %2349 = vmatprep.subr.bf16.mxu0 0
    %2350 = vmatpush1.bf16.xpose.msra.mxu0 %v346
    %2351 = vmatprep.subr.bf16.mxu0 0
    %2352 = vmatpush1.bf16.xpose.msra.mxu0 0
    %2353 = vmatprep.subr.bf16.mxu0 0
    %2354 = vmatpush1.bf16.xpose.msra.mxu0 0
    %2355 = vmatprep.subr.bf16.mxu0 0
    %2356 = vmatpush1.bf16.xpose.msra.mxu0 0
    %2357 = vmatprep.subr.bf16.mxu0 0
    %2358 = vmatpush1.bf16.xpose.msra.mxu0 0
    %2359 = vmatprep.subr.bf16.mxu0 0
    %2360 = vmatpush1.bf16.xpose.msra.mxu0 0
    %2361 = vmatprep.subr.bf16.mxu0 0
    %2362 = vmatpush1.bf16.xpose.msra.mxu0 0
    %2363 = vmatprep.subr.bf16.mxu0 0
    %2364 = vmatpush1.bf16.xpose.msra.mxu0 0
    %2365 = vmatprep.subr.bf16.mxu0 0
    %2366 = vmatpush1.bf16.xpose.msra.mxu0 0
    %2367 = vmatprep.subr.bf16.mxu0 0
    %2368 = vmatpush1.bf16.xpose.msra.mxu0 0
    %2369 = vmatprep.subr.bf16.mxu0 0
    %2370 = vmatpush1.bf16.xpose.msra.mxu0 0
    %2371 = vmatprep.subr.bf16.mxu0 0
    %2372 = vmatpush1.bf16.xpose.msra.mxu0 0
    %2373 = vmatprep.subr.bf16.mxu0 0
    %2374 = vmatpush1.bf16.xpose.msra.mxu0 0
    %2375 = vmatprep.subr.bf16.mxu0 0
    %2376 = vmatpush1.bf16.xpose.msra.mxu0 0
    %2377 = vmatprep.subr.bf16.mxu0 0
    %2378 = vmatpush1.bf16.xpose.msra.mxu0 0
    %2379 = vmatprep.subr.bf16.mxu0 0
    %2380 = vmatpush1.bf16.xpose.msra.mxu0 0
    %2381 = vmatprep.mubr.bf16.mxu0 0
    %2382 = vmatmul.mubr.bf16.gmra.mrb[0].mxu0 %v2347
    %v2383 = vpop.f32.mrb[0].mxu0
    %v2384 = vadd.f32 %v2212, %v2383
    %v2385 = vpop.f32.mrb[0].mxu0
    %v2386 = vpop.f32.mrb[0].mxu0
    %v2387 = vadd.f32 %v2213, %v2386
    %v2388 = vpop.f32.mrb[0].mxu0
    %2389 = vdwg.mxu0
    %s2390 = scalar_lea.vmem [#allocation5], 48
    %2391 = vst.msk [vmem:[%s2390] sm:$0xff] %vm389, %v2252
    %2392 = vst.msk [vmem:[%s2390 + $0x8] sm:$0xff] %vm389, %v2255
    %2393 = vst.msk [vmem:[%s2390 + $0x40] sm:$0xff] %vm389, %v2296
    %2394 = vst.msk [vmem:[%s2390 + $0x48] sm:$0xff] %vm389, %v2299
    %2395 = vst.msk [vmem:[%s2390 + $0x80] sm:$0xff] %vm389, %v2340
    %2396 = vst.msk [vmem:[%s2390 + $0x88] sm:$0xff] %vm389, %v2343
    %2397 = vst.msk [vmem:[%s2390 + $0xc0] sm:$0xff] %vm389, %v2384
    %2398 = vst.msk [vmem:[%s2390 + $0xc8] sm:$0xff] %vm389, %v2387
    %v2399 = vsel %vm389, %v2252, -inf
    %v2400 = vsel %vm389, %v2255, -inf
    %v2401 = vmax.f32 %v2399, %v2400
    %v2402 = vrot.slane %v2401, 4
    %v2403 = vmax.f32 %v2401, %v2402
    %v2404 = vrot.slane %v2403, 2
    %v2405 = vmax.f32 %v2403, %v2404
    %v2406 = vrot.slane %v2405, 1
    %v2407 = vmax.f32 %v2405, %v2406
    %v2408 = vsel %vm389, %v2296, -inf
    %v2409 = vsel %vm389, %v2299, -inf
    %v2410 = vmax.f32 %v2408, %v2409
    %v2411 = vrot.slane %v2410, 4
    %v2412 = vmax.f32 %v2410, %v2411
    %v2413 = vrot.slane %v2412, 2
    %v2414 = vmax.f32 %v2412, %v2413
    %v2415 = vrot.slane %v2414, 1
    %v2416 = vmax.f32 %v2414, %v2415
    %v2417 = vsel %vm389, %v2340, -inf
    %v2418 = vsel %vm389, %v2343, -inf
    %v2419 = vmax.f32 %v2417, %v2418
    %v2420 = vrot.slane %v2419, 4
    %v2421 = vmax.f32 %v2419, %v2420
    %v2422 = vrot.slane %v2421, 2
    %v2423 = vmax.f32 %v2421, %v2422
    %v2424 = vrot.slane %v2423, 1
    %v2425 = vmax.f32 %v2423, %v2424
    %v2426 = vsel %vm389, %v2384, -inf
    %v2427 = vsel %vm389, %v2387, -inf
    %v2428 = vmax.f32 %v2426, %v2427
    %v2429 = vrot.slane %v2428, 4
    %v2430 = vmax.f32 %v2428, %v2429
    %v2431 = vrot.slane %v2430, 2
    %v2432 = vmax.f32 %v2430, %v2431
    %v2433 = vrot.slane %v2432, 1
    %v2434 = vmax.f32 %v2432, %v2433
    %v2435 = vsub.f32 %v2252, %v2407
    %v2436 = vsub.f32 %v2255, %v2407
    %v2437 = vsub.f32 %v2296, %v2416
    %v2438 = vsub.f32 %v2299, %v2416
    %v2439 = vsub.f32 %v2340, %v2425
    %v2440 = vsub.f32 %v2343, %v2425
    %v2441 = vsub.f32 %v2384, %v2434
    %v2442 = vsub.f32 %v2387, %v2434
    %v2443 = vmul.f32 %v2435, 1.442695
    %v2444 = vpow.pop %v2443
    %v2445 = vmul.f32 %v2436, 1.442695
    %v2446 = vpow.pop %v2445
    %v2447 = vmul.f32 %v2437, 1.442695
    %v2448 = vpow.pop %v2447
    %v2449 = vmul.f32 %v2438, 1.442695
    %v2450 = vpow.pop %v2449
    %v2451 = vmul.f32 %v2439, 1.442695
    %v2452 = vpow.pop %v2451
    %v2453 = vmul.f32 %v2440, 1.442695
    %v2454 = vpow.pop %v2453
    %v2455 = vmul.f32 %v2441, 1.442695
    %v2456 = vpow.pop %v2455
    %v2457 = vmul.f32 %v2442, 1.442695
    %v2458 = vpow.pop %v2457
    %v2459 = vsel %vm389, %v2444, 0.0
    %v2460 = vsel %vm389, %v2446, 0.0
    %v2461 = vadd.f32 %v2459, %v2460
    %v2462 = vrot.slane %v2461, 4
    %v2463 = vadd.f32 %v2461, %v2462
    %v2464 = vrot.slane %v2463, 2
    %v2465 = vadd.f32 %v2463, %v2464
    %v2466 = vrot.slane %v2465, 1
    %v2467 = vadd.f32 %v2465, %v2466
    %v2468 = vsel %vm389, %v2448, 0.0
    %v2469 = vsel %vm389, %v2450, 0.0
    %v2470 = vadd.f32 %v2468, %v2469
    %v2471 = vrot.slane %v2470, 4
    %v2472 = vadd.f32 %v2470, %v2471
    %v2473 = vrot.slane %v2472, 2
    %v2474 = vadd.f32 %v2472, %v2473
    %v2475 = vrot.slane %v2474, 1
    %v2476 = vadd.f32 %v2474, %v2475
    %v2477 = vsel %vm389, %v2452, 0.0
    %v2478 = vsel %vm389, %v2454, 0.0
    %v2479 = vadd.f32 %v2477, %v2478
    %v2480 = vrot.slane %v2479, 4
    %v2481 = vadd.f32 %v2479, %v2480
    %v2482 = vrot.slane %v2481, 2
    %v2483 = vadd.f32 %v2481, %v2482
    %v2484 = vrot.slane %v2483, 1
    %v2485 = vadd.f32 %v2483, %v2484
    %v2486 = vsel %vm389, %v2456, 0.0
    %v2487 = vsel %vm389, %v2458, 0.0
    %v2488 = vadd.f32 %v2486, %v2487
    %v2489 = vrot.slane %v2488, 4
    %v2490 = vadd.f32 %v2488, %v2489
    %v2491 = vrot.slane %v2490, 2
    %v2492 = vadd.f32 %v2490, %v2491
    %v2493 = vrot.slane %v2492, 1
    %v2494 = vadd.f32 %v2492, %v2493
    %v2495 = vrcp.pop %v2467
    %v2496 = vrcp.pop %v2476
    %v2497 = vrcp.pop %v2485
    %v2498 = vrcp.pop %v2494
    %v2499 = vmul.f32 %v2444, %v2495
    %v2500 = vmul.f32 %v2446, %v2495
    %v2501 = vmul.f32 %v2448, %v2496
    %v2502 = vmul.f32 %v2450, %v2496
    %v2503 = vmul.f32 %v2452, %v2497
    %v2504 = vmul.f32 %v2454, %v2497
    %v2505 = vmul.f32 %v2456, %v2498
    %v2506 = vmul.f32 %v2458, %v2498
    %v2507 = vpack.c.bf16 %v2500, %v2499
    %v2508 = vpack.c.bf16 %v2502, %v2501
    %v2509 = vpack.c.bf16 %v2504, %v2503
    %v2510 = vpack.c.bf16 %v2506, %v2505
    %s2511 = scalar_lea.vmem %s5, 48
    %v2512 = vld [vmem:[%s2511] sm:$0xf]
    %v2513 = vld [vmem:[%s2511 + $0x4] sm:$0xf]
    %v2514 = vld [vmem:[%s2511 + $0x8] sm:$0xf]
    %v2515 = vld [vmem:[%s2511 + $0xc] sm:$0xf]
    %v2520 = vunpack.c.l.b16 %v2512
    %v2521 = vunpack.c.l.b16 %v2513
    %v2522 = vunpack.c.l.b16 %v2514
    %v2523 = vunpack.c.l.b16 %v2515
    %v2524 = vpack.c.b16 %v2521, %v2520
    %v2525 = vpack.c.b16 %v2523, %v2522
    %2528 = vmatprep.subr.bf16.mxu0 0
    %2529 = vmatpush1.bf16.msra.mxu0 %v2524
    %2530 = vmatprep.subr.bf16.mxu0 0
    %2531 = vmatpush1.bf16.msra.mxu0 %v2525
    %2532 = vmatprep.subr.bf16.mxu0 0
    %2533 = vmatpush1.bf16.msra.mxu0 0
    %2534 = vmatprep.subr.bf16.mxu0 0
    %2535 = vmatpush1.bf16.msra.mxu0 0
    %2536 = vmatprep.subr.bf16.mxu0 0
    %2537 = vmatpush1.bf16.msra.mxu0 0
    %2538 = vmatprep.subr.bf16.mxu0 0
    %2539 = vmatpush1.bf16.msra.mxu0 0
    %2540 = vmatprep.subr.bf16.mxu0 0
    %2541 = vmatpush1.bf16.msra.mxu0 0
    %2542 = vmatprep.subr.bf16.mxu0 0
    %2543 = vmatpush1.bf16.msra.mxu0 0
    %2544 = vmatprep.subr.bf16.mxu0 0
    %2545 = vmatpush1.bf16.msra.mxu0 0
    %2546 = vmatprep.subr.bf16.mxu0 0
    %2547 = vmatpush1.bf16.msra.mxu0 0
    %2548 = vmatprep.subr.bf16.mxu0 0
    %2549 = vmatpush1.bf16.msra.mxu0 0
    %2550 = vmatprep.subr.bf16.mxu0 0
    %2551 = vmatpush1.bf16.msra.mxu0 0
    %2552 = vmatprep.subr.bf16.mxu0 0
    %2553 = vmatpush1.bf16.msra.mxu0 0
    %2554 = vmatprep.subr.bf16.mxu0 0
    %2555 = vmatpush1.bf16.msra.mxu0 0
    %2556 = vmatprep.subr.bf16.mxu0 0
    %2557 = vmatpush1.bf16.msra.mxu0 0
    %2558 = vmatprep.subr.bf16.mxu0 0
    %2559 = vmatpush1.bf16.msra.mxu0 0
    %2560 = vmatprep.mubr.bf16.mxu0 0
    %2561 = vmatmul.mubr.bf16.gmra.mrb[0].mxu0 %v547
    %v2562 = vpop.f32.mrb[0].mxu0
    %v2563 = vadd.f32 0.0, %v2562
    %v2564 = vpop.f32.mrb[0].mxu0
    %v2565 = vpop.f32.mrb[0].mxu0
    %v2566 = vadd.f32 0.0, %v2565
    %v2567 = vpop.f32.mrb[0].mxu0
    %2568 = vmatprep.mubr.bf16.mxu0 0
    %2569 = vmatmul.mubr.bf16.gmra.mrb[0].mxu0 %v550
    %v2570 = vpop.f32.mrb[0].mxu0
    %v2571 = vadd.f32 0.0, %v2570
    %v2572 = vpop.f32.mrb[0].mxu0
    %v2573 = vpop.f32.mrb[0].mxu0
    %v2574 = vadd.f32 0.0, %v2573
    %v2575 = vpop.f32.mrb[0].mxu0
    %2576 = vmatprep.mubr.bf16.mxu0 0
    %2577 = vmatmul.mubr.bf16.gmra.mrb[0].mxu0 %v553
    %v2578 = vpop.f32.mrb[0].mxu0
    %v2579 = vadd.f32 0.0, %v2578
    %v2580 = vpop.f32.mrb[0].mxu0
    %v2581 = vpop.f32.mrb[0].mxu0
    %v2582 = vadd.f32 0.0, %v2581
    %v2583 = vpop.f32.mrb[0].mxu0
    %2584 = vmatprep.mubr.bf16.mxu0 0
    %2585 = vmatmul.mubr.bf16.gmra.mrb[0].mxu0 %v556
    %v2586 = vpop.f32.mrb[0].mxu0
    %v2587 = vadd.f32 0.0, %v2586
    %v2588 = vpop.f32.mrb[0].mxu0
    %v2589 = vpop.f32.mrb[0].mxu0
    %v2590 = vadd.f32 0.0, %v2589
    %v2591 = vpop.f32.mrb[0].mxu0
    %2592 = vdwg.mxu0
    %v2593 = vpack.c.bf16 %v2566, %v2563
    %v2594 = vpack.c.bf16 %v2574, %v2571
    %v2595 = vpack.c.bf16 %v2582, %v2579
    %v2596 = vpack.c.bf16 %v2590, %v2587
    %v2598 = vsel %vm389, %v2507, 0
    %2600 = vmatprep.subr.bf16.mxu0 0
    %2601 = vmatpush1.bf16.msra.mxu0 %v2593
    %2602 = vmatprep.subr.bf16.mxu0 0
    %2603 = vmatpush1.bf16.msra.mxu0 0
    %2604 = vmatprep.subr.bf16.mxu0 0
    %2605 = vmatpush1.bf16.msra.mxu0 0
    %2606 = vmatprep.subr.bf16.mxu0 0
    %2607 = vmatpush1.bf16.msra.mxu0 0
    %2608 = vmatprep.subr.bf16.mxu0 0
    %2609 = vmatpush1.bf16.msra.mxu0 0
    %2610 = vmatprep.subr.bf16.mxu0 0
    %2611 = vmatpush1.bf16.msra.mxu0 0
    %2612 = vmatprep.subr.bf16.mxu0 0
    %2613 = vmatpush1.bf16.msra.mxu0 0
    %2614 = vmatprep.subr.bf16.mxu0 0
    %2615 = vmatpush1.bf16.msra.mxu0 0
    %2616 = vmatprep.subr.bf16.mxu0 0
    %2617 = vmatpush1.bf16.msra.mxu0 0
    %2618 = vmatprep.subr.bf16.mxu0 0
    %2619 = vmatpush1.bf16.msra.mxu0 0
    %2620 = vmatprep.subr.bf16.mxu0 0
    %2621 = vmatpush1.bf16.msra.mxu0 0
    %2622 = vmatprep.subr.bf16.mxu0 0
    %2623 = vmatpush1.bf16.msra.mxu0 0
    %2624 = vmatprep.subr.bf16.mxu0 0
    %2625 = vmatpush1.bf16.msra.mxu0 0
    %2626 = vmatprep.subr.bf16.mxu0 0
    %2627 = vmatpush1.bf16.msra.mxu0 0
    %2628 = vmatprep.subr.bf16.mxu0 0
    %2629 = vmatpush1.bf16.msra.mxu0 0
    %2630 = vmatprep.subr.bf16.mxu0 0
    %2631 = vmatpush1.bf16.msra.mxu0 0
    %2632 = vmatprep.mubr.bf16.mxu0 0
    %2633 = vmatmul.mubr.bf16.gmra.mrb[0].mxu0 %v2598
    %v2634 = vpop.f32.mrb[0].mxu0
    %v2635 = vadd.f32 0.0, %v2634
    %v2636 = vpop.f32.mrb[0].mxu0
    %v2637 = vpop.f32.mrb[0].mxu0
    %v2638 = vadd.f32 0.0, %v2637
    %v2639 = vpop.f32.mrb[0].mxu0
    %2640 = vdwg.mxu0
    %v2642 = vsel %vm389, %v2508, 0
    %2644 = vmatprep.subr.bf16.mxu0 0
    %2645 = vmatpush1.bf16.msra.mxu0 %v2594
    %2646 = vmatprep.subr.bf16.mxu0 0
    %2647 = vmatpush1.bf16.msra.mxu0 0
    %2648 = vmatprep.subr.bf16.mxu0 0
    %2649 = vmatpush1.bf16.msra.mxu0 0
    %2650 = vmatprep.subr.bf16.mxu0 0
    %2651 = vmatpush1.bf16.msra.mxu0 0
    %2652 = vmatprep.subr.bf16.mxu0 0
    %2653 = vmatpush1.bf16.msra.mxu0 0
    %2654 = vmatprep.subr.bf16.mxu0 0
    %2655 = vmatpush1.bf16.msra.mxu0 0
    %2656 = vmatprep.subr.bf16.mxu0 0
    %2657 = vmatpush1.bf16.msra.mxu0 0
    %2658 = vmatprep.subr.bf16.mxu0 0
    %2659 = vmatpush1.bf16.msra.mxu0 0
    %2660 = vmatprep.subr.bf16.mxu0 0
    %2661 = vmatpush1.bf16.msra.mxu0 0
    %2662 = vmatprep.subr.bf16.mxu0 0
    %2663 = vmatpush1.bf16.msra.mxu0 0
    %2664 = vmatprep.subr.bf16.mxu0 0
    %2665 = vmatpush1.bf16.msra.mxu0 0
    %2666 = vmatprep.subr.bf16.mxu0 0
    %2667 = vmatpush1.bf16.msra.mxu0 0
    %2668 = vmatprep.subr.bf16.mxu0 0
    %2669 = vmatpush1.bf16.msra.mxu0 0
    %2670 = vmatprep.subr.bf16.mxu0 0
    %2671 = vmatpush1.bf16.msra.mxu0 0
    %2672 = vmatprep.subr.bf16.mxu0 0
    %2673 = vmatpush1.bf16.msra.mxu0 0
    %2674 = vmatprep.subr.bf16.mxu0 0
    %2675 = vmatpush1.bf16.msra.mxu0 0
    %2676 = vmatprep.mubr.bf16.mxu0 0
    %2677 = vmatmul.mubr.bf16.gmra.mrb[0].mxu0 %v2642
    %v2678 = vpop.f32.mrb[0].mxu0
    %v2679 = vadd.f32 0.0, %v2678
    %v2680 = vpop.f32.mrb[0].mxu0
    %v2681 = vpop.f32.mrb[0].mxu0
    %v2682 = vadd.f32 0.0, %v2681
    %v2683 = vpop.f32.mrb[0].mxu0
    %2684 = vdwg.mxu0
    %v2686 = vsel %vm389, %v2509, 0
    %2688 = vmatprep.subr.bf16.mxu0 0
    %2689 = vmatpush1.bf16.msra.mxu0 %v2595
    %2690 = vmatprep.subr.bf16.mxu0 0
    %2691 = vmatpush1.bf16.msra.mxu0 0
    %2692 = vmatprep.subr.bf16.mxu0 0
    %2693 = vmatpush1.bf16.msra.mxu0 0
    %2694 = vmatprep.subr.bf16.mxu0 0
    %2695 = vmatpush1.bf16.msra.mxu0 0
    %2696 = vmatprep.subr.bf16.mxu0 0
    %2697 = vmatpush1.bf16.msra.mxu0 0
    %2698 = vmatprep.subr.bf16.mxu0 0
    %2699 = vmatpush1.bf16.msra.mxu0 0
    %2700 = vmatprep.subr.bf16.mxu0 0
    %2701 = vmatpush1.bf16.msra.mxu0 0
    %2702 = vmatprep.subr.bf16.mxu0 0
    %2703 = vmatpush1.bf16.msra.mxu0 0
    %2704 = vmatprep.subr.bf16.mxu0 0
    %2705 = vmatpush1.bf16.msra.mxu0 0
    %2706 = vmatprep.subr.bf16.mxu0 0
    %2707 = vmatpush1.bf16.msra.mxu0 0
    %2708 = vmatprep.subr.bf16.mxu0 0
    %2709 = vmatpush1.bf16.msra.mxu0 0
    %2710 = vmatprep.subr.bf16.mxu0 0
    %2711 = vmatpush1.bf16.msra.mxu0 0
    %2712 = vmatprep.subr.bf16.mxu0 0
    %2713 = vmatpush1.bf16.msra.mxu0 0
    %2714 = vmatprep.subr.bf16.mxu0 0
    %2715 = vmatpush1.bf16.msra.mxu0 0
    %2716 = vmatprep.subr.bf16.mxu0 0
    %2717 = vmatpush1.bf16.msra.mxu0 0
    %2718 = vmatprep.subr.bf16.mxu0 0
    %2719 = vmatpush1.bf16.msra.mxu0 0
    %2720 = vmatprep.mubr.bf16.mxu0 0
    %2721 = vmatmul.mubr.bf16.gmra.mrb[0].mxu0 %v2686
    %v2722 = vpop.f32.mrb[0].mxu0
    %v2723 = vadd.f32 0.0, %v2722
    %v2724 = vpop.f32.mrb[0].mxu0
    %v2725 = vpop.f32.mrb[0].mxu0
    %v2726 = vadd.f32 0.0, %v2725
    %v2727 = vpop.f32.mrb[0].mxu0
    %2728 = vdwg.mxu0
    %v2730 = vsel %vm389, %v2510, 0
    %2732 = vmatprep.subr.bf16.mxu0 0
    %2733 = vmatpush1.bf16.msra.mxu0 %v2596
    %2734 = vmatprep.subr.bf16.mxu0 0
    %2735 = vmatpush1.bf16.msra.mxu0 0
    %2736 = vmatprep.subr.bf16.mxu0 0
    %2737 = vmatpush1.bf16.msra.mxu0 0
    %2738 = vmatprep.subr.bf16.mxu0 0
    %2739 = vmatpush1.bf16.msra.mxu0 0
    %2740 = vmatprep.subr.bf16.mxu0 0
    %2741 = vmatpush1.bf16.msra.mxu0 0
    %2742 = vmatprep.subr.bf16.mxu0 0
    %2743 = vmatpush1.bf16.msra.mxu0 0
    %2744 = vmatprep.subr.bf16.mxu0 0
    %2745 = vmatpush1.bf16.msra.mxu0 0
    %2746 = vmatprep.subr.bf16.mxu0 0
    %2747 = vmatpush1.bf16.msra.mxu0 0
    %2748 = vmatprep.subr.bf16.mxu0 0
    %2749 = vmatpush1.bf16.msra.mxu0 0
    %2750 = vmatprep.subr.bf16.mxu0 0
    %2751 = vmatpush1.bf16.msra.mxu0 0
    %2752 = vmatprep.subr.bf16.mxu0 0
    %2753 = vmatpush1.bf16.msra.mxu0 0
    %2754 = vmatprep.subr.bf16.mxu0 0
    %2755 = vmatpush1.bf16.msra.mxu0 0
    %2756 = vmatprep.subr.bf16.mxu0 0
    %2757 = vmatpush1.bf16.msra.mxu0 0
    %2758 = vmatprep.subr.bf16.mxu0 0
    %2759 = vmatpush1.bf16.msra.mxu0 0
    %2760 = vmatprep.subr.bf16.mxu0 0
    %2761 = vmatpush1.bf16.msra.mxu0 0
    %2762 = vmatprep.subr.bf16.mxu0 0
    %2763 = vmatpush1.bf16.msra.mxu0 0
    %2764 = vmatprep.mubr.bf16.mxu0 0
    %2765 = vmatmul.mubr.bf16.gmra.mrb[0].mxu0 %v2730
    %v2766 = vpop.f32.mrb[0].mxu0
    %v2767 = vadd.f32 0.0, %v2766
    %v2768 = vpop.f32.mrb[0].mxu0
    %v2769 = vpop.f32.mrb[0].mxu0
    %v2770 = vadd.f32 0.0, %v2769
    %v2771 = vpop.f32.mrb[0].mxu0
    %2772 = vdwg.mxu0
    %v2773 = vadd.f32 %v2111, %v2635
    %v2774 = vadd.f32 %v2112, %v2638
    %v2775 = vadd.f32 %v2113, %v2679
    %v2776 = vadd.f32 %v2114, %v2682
    %v2777 = vadd.f32 %v2115, %v2723
    %v2778 = vadd.f32 %v2116, %v2726
    %v2779 = vadd.f32 %v2117, %v2767
    %v2780 = vadd.f32 %v2118, %v2770
    %v2781 = vadd.f32 %v2773, %v47
    %v2782 = vadd.f32 %v2774, %v48
    %v2783 = vadd.f32 %v2775, %v49
    %v2784 = vadd.f32 %v2776, %v50
    %v2785 = vadd.f32 %v2777, %v51
    %v2786 = vadd.f32 %v2778, %v52
    %v2787 = vadd.f32 %v2779, %v53
    %v2788 = vadd.f32 %v2780, %v54
    %v2789 = vsel %vm91, %v2781, 0.0
    %2790 = vadd.xlane.f32.xlu0 %v2789
    %v2791 = vpop.xlane.xlu0 %2790
    %v2792 = vsel %vm91, %v2782, 0.0
    %2793 = vadd.xlane.f32.xlu0 %v2792
    %v2794 = vpop.xlane.xlu0 %2793
    %v2795 = vsel %vm91, %v2783, 0.0
    %2796 = vadd.xlane.f32.xlu0 %v2795
    %v2797 = vpop.xlane.xlu0 %2796
    %v2798 = vsel %vm91, %v2784, 0.0
    %2799 = vadd.xlane.f32.xlu0 %v2798
    %v2800 = vpop.xlane.xlu0 %2799
    %v2801 = vsel %vm91, %v2785, 0.0
    %2802 = vadd.xlane.f32.xlu0 %v2801
    %v2803 = vpop.xlane.xlu0 %2802
    %v2804 = vsel %vm91, %v2786, 0.0
    %2805 = vadd.xlane.f32.xlu0 %v2804
    %v2806 = vpop.xlane.xlu0 %2805
    %v2807 = vsel %vm91, %v2787, 0.0
    %2808 = vadd.xlane.f32.xlu0 %v2807
    %v2809 = vpop.xlane.xlu0 %2808
    %v2810 = vsel %vm91, %v2788, 0.0
    %2811 = vadd.xlane.f32.xlu0 %v2810
    %v2812 = vpop.xlane.xlu0 %2811
    %v2813 = vrcp.pop 32.0
    %v2814 = vmul.f32 %v2791, %v2813
    %v2815 = vmul.f32 %v2794, %v2813
    %v2816 = vmul.f32 %v2797, %v2813
    %v2817 = vmul.f32 %v2800, %v2813
    %v2818 = vmul.f32 %v2803, %v2813
    %v2819 = vmul.f32 %v2806, %v2813
    %v2820 = vmul.f32 %v2809, %v2813
    %v2821 = vmul.f32 %v2812, %v2813
    %v2822 = vsub.f32 %v2781, %v2814
    %v2823 = vsub.f32 %v2782, %v2815
    %v2824 = vsub.f32 %v2783, %v2816
    %v2825 = vsub.f32 %v2784, %v2817
    %v2826 = vsub.f32 %v2785, %v2818
    %v2827 = vsub.f32 %v2786, %v2819
    %v2828 = vsub.f32 %v2787, %v2820
    %v2829 = vsub.f32 %v2788, %v2821
    %v2830 = vmul.f32 %v2822, %v2822
    %v2831 = vmul.f32 %v2823, %v2823
    %v2832 = vmul.f32 %v2824, %v2824
    %v2833 = vmul.f32 %v2825, %v2825
    %v2834 = vmul.f32 %v2826, %v2826
    %v2835 = vmul.f32 %v2827, %v2827
    %v2836 = vmul.f32 %v2828, %v2828
    %v2837 = vmul.f32 %v2829, %v2829
    %v2838 = vsel %vm91, %v2830, 0.0
    %2839 = vadd.xlane.f32.xlu0 %v2838
    %v2840 = vpop.xlane.xlu0 %2839
    %v2841 = vsel %vm91, %v2831, 0.0
    %2842 = vadd.xlane.f32.xlu0 %v2841
    %v2843 = vpop.xlane.xlu0 %2842
    %v2844 = vsel %vm91, %v2832, 0.0
    %2845 = vadd.xlane.f32.xlu0 %v2844
    %v2846 = vpop.xlane.xlu0 %2845
    %v2847 = vsel %vm91, %v2833, 0.0
    %2848 = vadd.xlane.f32.xlu0 %v2847
    %v2849 = vpop.xlane.xlu0 %2848
    %v2850 = vsel %vm91, %v2834, 0.0
    %2851 = vadd.xlane.f32.xlu0 %v2850
    %v2852 = vpop.xlane.xlu0 %2851
    %v2853 = vsel %vm91, %v2835, 0.0
    %2854 = vadd.xlane.f32.xlu0 %v2853
    %v2855 = vpop.xlane.xlu0 %2854
    %v2856 = vsel %vm91, %v2836, 0.0
    %2857 = vadd.xlane.f32.xlu0 %v2856
    %v2858 = vpop.xlane.xlu0 %2857
    %v2859 = vsel %vm91, %v2837, 0.0
    %2860 = vadd.xlane.f32.xlu0 %v2859
    %v2861 = vpop.xlane.xlu0 %2860
    %v2862 = vmul.f32 %v2840, %v2813
    %v2863 = vmul.f32 %v2843, %v2813
    %v2864 = vmul.f32 %v2846, %v2813
    %v2865 = vmul.f32 %v2849, %v2813
    %v2866 = vmul.f32 %v2852, %v2813
    %v2867 = vmul.f32 %v2855, %v2813
    %v2868 = vmul.f32 %v2858, %v2813
    %v2869 = vmul.f32 %v2861, %v2813
    %v2870 = vadd.f32 %v2862, 1e-05
    %v2871 = vadd.f32 %v2863, 1e-05
    %v2872 = vadd.f32 %v2864, 1e-05
    %v2873 = vadd.f32 %v2865, 1e-05
    %v2874 = vadd.f32 %v2866, 1e-05
    %v2875 = vadd.f32 %v2867, 1e-05
    %v2876 = vadd.f32 %v2868, 1e-05
    %v2877 = vadd.f32 %v2869, 1e-05
    %v2878 = vrsqrt.pop %v2870
    %v2879 = vrsqrt.pop %v2871
    %v2880 = vrsqrt.pop %v2872
    %v2881 = vrsqrt.pop %v2873
    %v2882 = vrsqrt.pop %v2874
    %v2883 = vrsqrt.pop %v2875
    %v2884 = vrsqrt.pop %v2876
    %v2885 = vrsqrt.pop %v2877
    %v2886 = vmul.f32 %v2822, %v2878
    %v2887 = vmul.f32 %v2823, %v2879
    %v2888 = vmul.f32 %v2824, %v2880
    %v2889 = vmul.f32 %v2825, %v2881
    %v2890 = vmul.f32 %v2826, %v2882
    %v2891 = vmul.f32 %v2827, %v2883
    %v2892 = vmul.f32 %v2828, %v2884
    %v2893 = vmul.f32 %v2829, %v2885
    %v2894 = vld [vmem:[%s6] sm:$0x1]
    %v2896 = vlaneseq
    %v2897 = vshrl.u32 %v2896, 7
    %v2898 = vsub.s32 0, %v2897
    %v2899 = vrot.slane %v2894, %v2898
    %v2901 = vmul.f32 %v2886, %v2899
    %v2902 = vmul.f32 %v2887, %v2899
    %v2903 = vmul.f32 %v2888, %v2899
    %v2904 = vmul.f32 %v2889, %v2899
    %v2905 = vmul.f32 %v2890, %v2899
    %v2906 = vmul.f32 %v2891, %v2899
    %v2907 = vmul.f32 %v2892, %v2899
    %v2908 = vmul.f32 %v2893, %v2899
    %v2909 = vld [vmem:[%s7] sm:$0x1]
    %v2911 = vlaneseq
    %v2912 = vshrl.u32 %v2911, 7
    %v2913 = vsub.s32 0, %v2912
    %v2914 = vrot.slane %v2909, %v2913
    %v2916 = vadd.f32 %v2901, %v2914
    %v2917 = vadd.f32 %v2902, %v2914
    %v2918 = vadd.f32 %v2903, %v2914
    %v2919 = vadd.f32 %v2904, %v2914
    %v2920 = vadd.f32 %v2905, %v2914
    %v2921 = vadd.f32 %v2906, %v2914
    %v2922 = vadd.f32 %v2907, %v2914
    %v2923 = vadd.f32 %v2908, %v2914
    %2924 = vst.msk [vmem:[%s8] sm:$0xff] %vm91, %v2916
    %2925 = vst.msk [vmem:[%s8 + $0x8] sm:$0xff] %vm91, %v2917
    %2926 = vst.msk [vmem:[%s8 + $0x10] sm:$0xff] %vm91, %v2918
    %2927 = vst.msk [vmem:[%s8 + $0x18] sm:$0xff] %vm91, %v2919
    %2928 = vst.msk [vmem:[%s8 + $0x20] sm:$0xff] %vm91, %v2920
    %2929 = vst.msk [vmem:[%s8 + $0x28] sm:$0xff] %vm91, %v2921
    %2930 = vst.msk [vmem:[%s8 + $0x30] sm:$0xff] %vm91, %v2922
    %2931 = vst.msk [vmem:[%s8 + $0x38] sm:$0xff] %vm91, %v2923
    // Predicated region
    $region38: #{tpu_custom_call.1} parent=1 // pred_check
      _
    $region39: #{tpu_custom_call.1} parent=1 // pred_check_branch
      %2933 = sbr.rel (0) target = $region41
    $region40: #{tpu_custom_call.1} parent=1 // pred_region
      _
    $region41: #{tpu_custom_call.1} parent=1 // pred_fallthru
      _
    // Predicated region
    $region42: #{tpu_custom_call.1} parent=1 // pred_check
      _
    $region43: #{tpu_custom_call.1} parent=1 // pred_check_branch
      %2935 = sbr.rel (0) target = $region45
    $region44: #{tpu_custom_call.1} parent=1 // pred_region
      %s2937 = ssub.s32 4096, 4096
      %2938 = vsyncadd [#allocation4], %s2937
      %s2939 = sshll.u32 [#allocation5], 4
      %s2940 = int_to_ptr.vmem [resolvable:$true] %s2939
      %2945 = dma.vmem_to_hbm [thread:$0]  %s2940, 4096, %s9, [#allocation4], 128, 128, 8
    $region45: #{tpu_custom_call.1} parent=1 // pred_fallthru
      _
    // Predicated region
    $region46: #{tpu_custom_call.1} parent=1 // pred_check
      _
    $region47: #{tpu_custom_call.1} parent=1 // pred_check_branch
      %2947 = sbr.rel (0) target = $region49
    $region48: #{tpu_custom_call.1} parent=1 // pred_region
      _
    $region49: #{tpu_custom_call.1} parent=1 // pred_fallthru
      _
    // Predicated region
    $region50: #{tpu_custom_call.1} parent=1 // pred_check
      _
    $region51: #{tpu_custom_call.1} parent=1 // pred_check_branch
      %2949 = sbr.rel (0) target = $region53
    $region52: #{tpu_custom_call.1} parent=1 // pred_region
      %2950 = dma.done [#allocation4], 4096
    $region53: #{tpu_custom_call.1} parent=1 // pred_fallthru
      _
    %2951 = vsyncpa [#allocation3], 1
    %2952 = vsyncpa [#allocation4], 1

</llo_original>
